<compile_context>
chip_gen: v7x
topology: tpu7x:2x2x1
jax: 0.10.0
libtpu: 0.0.40
codegen_flags: <defaults>
</compile_context>

<pallas_src>
import functools

import jax
import jax.numpy as jnp
from jax.experimental import pallas as pl
from jax.experimental.pallas import tpu as pltpu


def _sigmoid(x):
    # One EUP transcendental (tanh) instead of two (exp + reciprocal).
    return 0.5 * (jnp.tanh(0.5 * x) + 1.0)


def _round_up(x, m):
    return (x + m - 1) // m * m


def _highway_lstm_kernel(
    hl_ref, cl_ref,            # (TB, TS*H) f32  lower h / c, time chunk in lanes
    h0_ref, c0_ref,            # (TB, H)    f32  initial hidden / cell state
    w_ref,                     # (2H, 4H)   compute dtype, fused [i|f|u|d]
    b_ref,                     # (1, 4H)    f32  fused bias
    peep_ref,                  # (8, H)     f32  rows: ci, cf, co, cd, ld, 0, 0, 0
    hs_out_ref, cs_out_ref,    # (TB, TS*H) f32  per-timestep outputs
    x_scr,                     # (TB, 2H)   compute dtype: matmul LHS [h_lower | h_prev]
    c_scr,                     # (TB, H)    f32:  recurrent cell-state carry
    *, ts, hidden, compute_dtype,
):
    H = hidden
    TB = c_scr.shape[0]
    tt = pl.program_id(1)

    # A fresh batch tile starts at time-chunk 0 -> (re)load the initial state.
    @pl.when(tt == 0)
    def _():
        x_scr[:, H:] = h0_ref[...].astype(compute_dtype)
        c_scr[...] = c0_ref[...].astype(jnp.float32)

    # Hoisted once per grid step (JAX does not CSE broadcast_in_dim).
    bias = jnp.broadcast_to(b_ref[...], (TB, 4 * H))
    p_ci = jnp.broadcast_to(peep_ref[0:1, :], (TB, H))
    p_cf = jnp.broadcast_to(peep_ref[1:2, :], (TB, H))
    p_co = jnp.broadcast_to(peep_ref[2:3, :], (TB, H))
    p_cd = jnp.broadcast_to(peep_ref[3:4, :], (TB, H))
    p_ld = jnp.broadcast_to(peep_ref[4:5, :], (TB, H))
    w = w_ref[...]

    for s in range(ts):   # static unroll: all slice offsets are compile-time constants
        lo = s * H
        x_scr[:, 0:H] = hl_ref[:, lo:lo + H].astype(compute_dtype)
        cl = cl_ref[:, lo:lo + H]
        cp = c_scr[...]

        # One fused K=2H MXU matmul: [h_lower | h_prev] @ W -> [i | f | u | d_lin].
        gates = jnp.dot(x_scr[...], w, preferred_element_type=jnp.float32) + bias

        i = gates[:, 0 * H:1 * H] + p_ci * cp
        f = gates[:, 1 * H:2 * H] + p_cf * cp
        u = gates[:, 2 * H:3 * H]
        # NOTE: faithful to the reference module, o is built from the UPDATED
        # (post-peephole) f pre-activation; the raw o-gate columns of the
        # nn.Linear are never read, so they were dropped from the fused weight.
        o = f + p_co * cp
        d = gates[:, 3 * H:4 * H] + p_cd * cp + p_ld * cl

        c = _sigmoid(d) * cl + _sigmoid(f) * cp + _sigmoid(i) * jnp.tanh(u)
        h = _sigmoid(o) * jnp.tanh(c)

        c_scr[...] = c
        x_scr[:, H:] = h.astype(compute_dtype)          # recurrent h carry (MXU dtype)
        hs_out_ref[:, lo:lo + H] = h.astype(hs_out_ref.dtype)
        cs_out_ref[:, lo:lo + H] = c.astype(cs_out_ref.dtype)


def highway_lstm(hs_in, cs_in, params, hx=None, length=None, *,
                 compute_dtype=jnp.bfloat16, batch_block=None, time_block=8):
    """Full HighwayLSTM forward.  hs_in / cs_in: (B, T, H) float32.

    Returns ((hs, cs), (h_last, c_last)) like the PyTorch module.
    """
    B, T, H = hs_in.shape

    if hx is None:
        h0 = jnp.zeros((B, H), jnp.float32)
        c0 = jnp.zeros((B, H), jnp.float32)
    else:
        h0 = hx[0].astype(jnp.float32)
        c0 = hx[1].astype(jnp.float32)

    # ---- tile sizes ------------------------------------------------------
    if batch_block is None:
        tb = min(128, _round_up(B, 8))
        # Prefer >= 2 batch tiles so the "parallel" batch axis can shard across
        # TensorCores (v7x megacore); the time axis carries the recurrence and
        # cannot be parallelised.
        if B >= 16 and _round_up(B, tb) // tb < 2:
            tb = _round_up((B + 1) // 2, 8)
    else:
        tb = _round_up(batch_block, 8)
    ts = max(8, _round_up(min(time_block, T), 8))

    B_pad = _round_up(B, tb)
    T_pad = _round_up(T, ts)
    nb, nt = B_pad // tb, T_pad // ts
    # VMEM footprint per grid step (2 bufs x 4 seq arrays x tb*ts*H*4B + weights)
    # stays far under the 32 MiB scoped default for these tile sizes on all
    # generations (v5e/v6e/v7x), so no vmem_limit_bytes override is needed.

    # ---- pad (no HBM transposes: kernel reads batch-major directly) -------
    hl = hs_in.astype(jnp.float32)
    cl = cs_in.astype(jnp.float32)
    if B_pad != B or T_pad != T:
        pad = ((0, B_pad - B), (0, T_pad - T), (0, 0))
        hl = jnp.pad(hl, pad)
        cl = jnp.pad(cl, pad)
    if B_pad != B:
        h0 = jnp.pad(h0, ((0, B_pad - B), (0, 0)))
        c0 = jnp.pad(c0, ((0, B_pad - B), (0, 0)))

    # Free contiguous reshape: the time chunk lives in lanes, so every per-step
    # access inside the kernel is a static, H-aligned lane slice.
    hl = hl.reshape(B_pad, T_pad * H)
    cl = cl.reshape(B_pad, T_pad * H)

    w = params["w"].astype(compute_dtype)
    b = params["b"].astype(jnp.float32)
    peep = params["peep"].astype(jnp.float32)

    kernel = functools.partial(_highway_lstm_kernel, ts=ts, hidden=H,
                               compute_dtype=compute_dtype)

    seq_spec = pl.BlockSpec((tb, ts * H), lambda bb, tt: (bb, tt))
    state_spec = pl.BlockSpec((tb, H), lambda bb, tt: (bb, 0))
    const_spec = lambda shape: pl.BlockSpec(shape, lambda bb, tt: (0, 0))

    hs_flat, cs_flat = pl.pallas_call(
        kernel,
        out_shape=(
            jax.ShapeDtypeStruct((B_pad, T_pad * H), jnp.float32),
            jax.ShapeDtypeStruct((B_pad, T_pad * H), jnp.float32),
        ),
        grid_spec=pltpu.PrefetchScalarGridSpec(
            num_scalar_prefetch=0,
            grid=(nb, nt),                        # time-chunk axis MUST stay last
            in_specs=[
                seq_spec, seq_spec,               # h_lower, c_lower
                state_spec, state_spec,           # h0, c0
                const_spec((2 * H, 4 * H)),       # fused weight (VMEM resident)
                const_spec((1, 4 * H)),           # fused bias
                const_spec((8, H)),               # packed peepholes
            ],
            out_specs=(seq_spec, seq_spec),
            scratch_shapes=[
                pltpu.VMEM((tb, 2 * H), compute_dtype),   # [h_lower | h_prev] LHS
                pltpu.VMEM((tb, H), jnp.float32),         # c carry
            ],
        ),
        compiler_params=pltpu.CompilerParams(
            dimension_semantics=("parallel", "arbitrary"),
        ),
    )(hl, cl, h0, c0, w, b, peep)

    hs = hs_flat.reshape(B_pad, T_pad, H)[:B, :T]
    cs = cs_flat.reshape(B_pad, T_pad, H)[:B, :T]

    if length is not None:
        # NOTE: like the reference, timesteps beyond `length` still evolve the
        # carry/outputs; only the final-state gather respects `length`.
        idx = jnp.asarray(length) - 1
        hx_out = (hs[jnp.arange(B), idx], cs[jnp.arange(B), idx])
    else:
        hx_out = (hs[:, -1], cs[:, -1])
    return (hs, cs), hx_out


# ----------------------------------------------------------------------------
# Parameter construction (mirrors HighwayLSTMCell.reset_parameters).
# ----------------------------------------------------------------------------
def init_raw_params(key, H):
    k_lin, k_xd, k_ci, k_cf, k_co, k_cd, k_ld = jax.random.split(key, 7)
    # nn.Linear(2H, 4H): orthogonal weight (4H, 2H), zero bias.
    w_lin = jax.nn.initializers.orthogonal()(k_lin, (4 * H, 2 * H), jnp.float32)
    b_lin = jnp.zeros((4 * H,), jnp.float32)
    # nn.Linear(H, H): kaiming normal (fan_in = H, gain sqrt(2)), zero bias.
    wd = jax.random.normal(k_xd, (H, H), jnp.float32) * jnp.sqrt(2.0 / H)
    bd = jnp.zeros((H,), jnp.float32)
    peep = lambda k: jax.random.normal(k, (H,), jnp.float32) * 0.01
    return dict(w_lin=w_lin, b_lin=b_lin, wd=wd, bd=bd,
                p_ci=peep(k_ci), p_cf=peep(k_cf), p_co=peep(k_co),
                p_cd=peep(k_cd), p_ld=peep(k_ld))


def pack_params(raw, H):
    """Fuse/transpose torch-layout params into the kernel layout."""
    w_t = raw["w_lin"].T                                   # (2H, 4H): [i|f|o|u]
    # Drop the dead o columns; keep i, f, u.
    w_gates = jnp.concatenate(
        [w_t[:, 0:H], w_t[:, H:2 * H], w_t[:, 3 * H:4 * H]], axis=1)   # (2H, 3H)
    # linear_xd acts on h_lower only -> zero rows for the h_prev half.
    w_d = jnp.concatenate(
        [raw["wd"].T, jnp.zeros((H, H), jnp.float32)], axis=0)          # (2H, H)
    w = jnp.concatenate([w_gates, w_d], axis=1)                         # (2H, 4H)

    b = jnp.concatenate(
        [raw["b_lin"][0:H], raw["b_lin"][H:2 * H],
         raw["b_lin"][3 * H:4 * H], raw["bd"]]).reshape(1, 4 * H)

    zeros = jnp.zeros((H,), jnp.float32)
    peep = jnp.stack([raw["p_ci"], raw["p_cf"], raw["p_co"],
                      raw["p_cd"], raw["p_ld"], zeros, zeros, zeros], axis=0)
    return dict(w=w, b=b, peep=peep)


# ----------------------------------------------------------------------------
# Plain-JAX reference of the PyTorch forward (unfused weights).
# ----------------------------------------------------------------------------
def reference_jax(hs_in, cs_in, raw, hx=None, length=None):
    B, T, H = hs_in.shape
    if hx is None:
        hx = (jnp.zeros((B, H), jnp.float32), jnp.zeros((B, H), jnp.float32))
    h_prev, c_prev = hx
    hs_list, cs_list = [], []
    for t in range(T):
        h_lower, c_lower = hs_in[:, t], cs_in[:, t]
        h_cat = jnp.concatenate([h_lower, h_prev], axis=1)
        lstm = h_cat @ raw["w_lin"].T + raw["b_lin"]
        i, f, o, u = (lstm[:, k * H:(k + 1) * H] for k in range(4))
        i = i + raw["p_ci"] * c_prev
        f = f + raw["p_cf"] * c_prev
        o = f + raw["p_co"] * c_prev
        d = h_lower @ raw["wd"].T + raw["bd"] \
            + raw["p_cd"] * c_prev + raw["p_ld"] * c_lower
        c = jax.nn.sigmoid(d) * c_lower + jax.nn.sigmoid(f) * c_prev \
            + jax.nn.sigmoid(i) * jnp.tanh(u)
        h = jax.nn.sigmoid(o) * jnp.tanh(c)
        hs_list.append(h)
        cs_list.append(c)
        h_prev, c_prev = h, c
    hs = jnp.stack(hs_list, axis=1)
    cs = jnp.stack(cs_list, axis=1)
    if length is not None:
        idx = jnp.asarray(length) - 1
        hx_out = (hs[jnp.arange(B), idx], cs[jnp.arange(B), idx])
    else:
        hx_out = (h_prev, c_prev)
    return (hs, cs), hx_out


if __name__ == "__main__":
    key = jax.random.PRNGKey(0)
    k_params, k_h, k_c = jax.random.split(key, 3)

    H = 128
    raw = init_raw_params(k_params, H)
    params = pack_params(raw, H)

    # ---- test 1: aligned shapes, strict check with f32 MXU operands ------
    B, T = 8, 8
    hs_in = jax.random.normal(k_h, (B, T, H), jnp.float32)
    cs_in = jax.random.normal(k_c, (B, T, H), jnp.float32)

    (hs, cs), (h_last, c_last) = highway_lstm(
        hs_in, cs_in, params, compute_dtype=jnp.float32)
    jax.block_until_ready((hs, cs, h_last, c_last))

    (hs_r, cs_r), (h_r, c_r) = reference_jax(hs_in, cs_in, raw)
    assert jnp.allclose(hs, hs_r, atol=5e-4, rtol=5e-4)
    assert jnp.allclose(cs, cs_r, atol=5e-4, rtol=5e-4)
    assert jnp.allclose(h_last, h_r, atol=5e-4, rtol=5e-4)
    assert jnp.allclose(c_last, c_r, atol=5e-4, rtol=5e-4)

    # ---- test 2: ragged batch/time (padding path), nonzero hx, length,
    #              default bf16 MXU operands (f32 accumulation) -------------
    B2, T2 = 10, 20
    k1, k2, k3, k4, k5 = jax.random.split(jax.random.PRNGKey(1), 5)
    hs_in2 = jax.random.normal(k1, (B2, T2, H), jnp.float32)
    cs_in2 = jax.random.normal(k2, (B2, T2, H), jnp.float32)
    h0 = jax.random.normal(k3, (B2, H), jnp.float32) * 0.5
    c0 = jax.random.normal(k4, (B2, H), jnp.float32) * 0.5
    length = jax.random.randint(k5, (B2,), 1, T2 + 1)

    (hs2, cs2), (h2, c2) = highway_lstm(
        hs_in2, cs_in2, params, hx=(h0, c0), length=length)
    jax.block_until_ready((hs2, cs2, h2, c2))

    (hs2_r, cs2_r), (h2_r, c2_r) = reference_jax(
        hs_in2, cs_in2, raw, hx=(h0, c0), length=length)
    assert jnp.allclose(hs2, hs2_r, atol=5e-2, rtol=5e-2)
    assert jnp.allclose(cs2, cs2_r, atol=5e-2, rtol=5e-2)
    assert jnp.allclose(h2, h2_r, atol=5e-2, rtol=5e-2)
    assert jnp.allclose(c2, c2_r, atol=5e-2, rtol=5e-2)

    print("KERNEL_OK")
</pallas_src>

<mosaic_0001>
module attributes {stable_mosaic.version = 11 : i64} {
  func.func @_highway_lstm_kernel(%arg0: i32, %arg1: i32, %arg2: memref<8x1024xf32, #tpu.memory_space<vmem>>, %arg3: memref<8x1024xf32, #tpu.memory_space<vmem>>, %arg4: memref<8x128xf32, #tpu.memory_space<vmem>>, %arg5: memref<8x128xf32, #tpu.memory_space<vmem>>, %arg6: memref<256x512xf32, #tpu.memory_space<vmem>>, %arg7: memref<1x512xf32, #tpu.memory_space<vmem>>, %arg8: memref<8x128xf32, #tpu.memory_space<vmem>>, %arg9: memref<8x1024xf32, #tpu.memory_space<vmem>>, %arg10: memref<8x1024xf32, #tpu.memory_space<vmem>>, %arg11: memref<8x256xf32, #tpu.memory_space<vmem>>, %arg12: memref<8x128xf32, #tpu.memory_space<vmem>>) attributes {dimension_semantics = [#tpu.dimension_semantics<parallel>, #tpu.dimension_semantics<arbitrary>], iteration_bounds = array<i64: 1, 1>, scalar_prefetch = 0 : i64, scratch_operands = 2 : i64, tpu.core_type = #tpu.core_type<tc>, window_params = [{transform_indices = @transform_0, window_bounds = array<i64: 8, 1024>}, {transform_indices = @transform_1, window_bounds = array<i64: 8, 1024>}, {transform_indices = @transform_2, window_bounds = array<i64: 8, 128>}, {transform_indices = @transform_3, window_bounds = array<i64: 8, 128>}, {pipeline_mode = #tpu.pipeline_mode<synchronous>, transform_indices = @transform_4, window_bounds = array<i64: 256, 512>}, {pipeline_mode = #tpu.pipeline_mode<synchronous>, transform_indices = @transform_5, window_bounds = array<i64: 1, 512>}, {pipeline_mode = #tpu.pipeline_mode<synchronous>, transform_indices = @transform_6, window_bounds = array<i64: 8, 128>}, {transform_indices = @transform_7, window_bounds = array<i64: 8, 1024>}, {transform_indices = @transform_8, window_bounds = array<i64: 8, 1024>}]} {
    %c0_i32 = arith.constant 0 : i32
    %0 = arith.cmpi eq, %arg1, %c0_i32 : i32
    %1 = arith.extui %0 : i1 to i32
    %c0_i32_0 = arith.constant 0 : i32
    %2 = arith.cmpi ne, %1, %c0_i32_0 : i32
    scf.if %2 {
      %c0_250 = arith.constant 0 : index
      %c0_251 = arith.constant 0 : index
      %510 = vector.load %arg4[%c0_250, %c0_251] : memref<8x128xf32, #tpu.memory_space<vmem>>, vector<8x128xf32>
      %c0_252 = arith.constant 0 : index
      %c128_253 = arith.constant 128 : index
      %511 = vector.load %arg11[%c0_252, %c128_253] : memref<8x256xf32, #tpu.memory_space<vmem>>, vector<8x128xf32>
      tpu.vector_store %arg11[%c0_252, %c128_253], %510 {strides = array<i32>} : memref<8x256xf32, #tpu.memory_space<vmem>>, vector<8x128xf32>,
      %c0_254 = arith.constant 0 : index
      %c0_255 = arith.constant 0 : index
      %512 = vector.load %arg5[%c0_254, %c0_255] : memref<8x128xf32, #tpu.memory_space<vmem>>, vector<8x128xf32>
      %c0_256 = arith.constant 0 : index
      %c0_257 = arith.constant 0 : index
      %513 = vector.load %arg12[%c0_256, %c0_257] : memref<8x128xf32, #tpu.memory_space<vmem>>, vector<8x128xf32>
      tpu.vector_store %arg12[%c0_256, %c0_257], %512 {strides = array<i32>} : memref<8x128xf32, #tpu.memory_space<vmem>>, vector<8x128xf32>,
    } else {
    }
    %c0 = arith.constant 0 : index
    %c0_1 = arith.constant 0 : index
    %3 = vector.load %arg7[%c0, %c0_1] : memref<1x512xf32, #tpu.memory_space<vmem>>, vector<1x512xf32>
    %4 = vector.shape_cast %3 : vector<1x512xf32> to vector<1x512xf32>
    %5 = vector.broadcast %4 : vector<1x512xf32> to vector<8x512xf32>
    %c0_2 = arith.constant 0 : index
    %c0_3 = arith.constant 0 : index
    %6 = vector.load %arg8[%c0_2, %c0_3] : memref<8x128xf32, #tpu.memory_space<vmem>>, vector<1x128xf32>
    %7 = vector.shape_cast %6 : vector<1x128xf32> to vector<1x128xf32>
    %8 = vector.broadcast %7 : vector<1x128xf32> to vector<8x128xf32>
    %c1 = arith.constant 1 : index
    %c0_4 = arith.constant 0 : index
    %9 = vector.load %arg8[%c1, %c0_4] : memref<8x128xf32, #tpu.memory_space<vmem>>, vector<1x128xf32>
    %10 = vector.shape_cast %9 : vector<1x128xf32> to vector<1x128xf32>
    %11 = vector.broadcast %10 : vector<1x128xf32> to vector<8x128xf32>
    %c2 = arith.constant 2 : index
    %c0_5 = arith.constant 0 : index
    %12 = vector.load %arg8[%c2, %c0_5] : memref<8x128xf32, #tpu.memory_space<vmem>>, vector<1x128xf32>
    %13 = vector.shape_cast %12 : vector<1x128xf32> to vector<1x128xf32>
    %14 = vector.broadcast %13 : vector<1x128xf32> to vector<8x128xf32>
    %c3 = arith.constant 3 : index
    %c0_6 = arith.constant 0 : index
    %15 = vector.load %arg8[%c3, %c0_6] : memref<8x128xf32, #tpu.memory_space<vmem>>, vector<1x128xf32>
    %16 = vector.shape_cast %15 : vector<1x128xf32> to vector<1x128xf32>
    %17 = vector.broadcast %16 : vector<1x128xf32> to vector<8x128xf32>
    %c4 = arith.constant 4 : index
    %c0_7 = arith.constant 0 : index
    %18 = vector.load %arg8[%c4, %c0_7] : memref<8x128xf32, #tpu.memory_space<vmem>>, vector<1x128xf32>
    %19 = vector.shape_cast %18 : vector<1x128xf32> to vector<1x128xf32>
    %20 = vector.broadcast %19 : vector<1x128xf32> to vector<8x128xf32>
    %c0_8 = arith.constant 0 : index
    %c0_9 = arith.constant 0 : index
    %21 = vector.load %arg6[%c0_8, %c0_9] : memref<256x512xf32, #tpu.memory_space<vmem>>, vector<256x512xf32>
    %c0_10 = arith.constant 0 : index
    %c0_11 = arith.constant 0 : index
    %22 = vector.load %arg2[%c0_10, %c0_11] : memref<8x1024xf32, #tpu.memory_space<vmem>>, vector<8x128xf32>
    %c0_12 = arith.constant 0 : index
    %c0_13 = arith.constant 0 : index
    %23 = vector.load %arg11[%c0_12, %c0_13] : memref<8x256xf32, #tpu.memory_space<vmem>>, vector<8x128xf32>
    tpu.vector_store %arg11[%c0_12, %c0_13], %22 {strides = array<i32>} : memref<8x256xf32, #tpu.memory_space<vmem>>, vector<8x128xf32>,
    %c0_14 = arith.constant 0 : index
    %c0_15 = arith.constant 0 : index
    %24 = vector.load %arg3[%c0_14, %c0_15] : memref<8x1024xf32, #tpu.memory_space<vmem>>, vector<8x128xf32>
    %c0_16 = arith.constant 0 : index
    %c0_17 = arith.constant 0 : index
    %25 = vector.load %arg12[%c0_16, %c0_17] : memref<8x128xf32, #tpu.memory_space<vmem>>, vector<8x128xf32>
    %c0_18 = arith.constant 0 : index
    %c0_19 = arith.constant 0 : index
    %26 = vector.load %arg11[%c0_18, %c0_19] : memref<8x256xf32, #tpu.memory_space<vmem>>, vector<8x256xf32>
    %cst = arith.constant dense<0.000000e+00> : vector<8x512xf32>
    %27 = tpu.matmul %26, %21, %cst {dimension_numbers = #tpu.dot_dimension_numbers<[1], [0], [0], [1], [0, 0, 1, 1], [], []>} : vector<8x256xf32>, vector<256x512xf32>, vector<8x512xf32> -> vector<8x512xf32>
    %28 = arith.addf %27, %5 : vector<8x512xf32>
    %29 = vector.extract_strided_slice %28 {offsets = [0, 0], sizes = [8, 128], strides = [1, 1]} : vector<8x512xf32> to vector<8x128xf32>
    %30 = arith.mulf %8, %25 : vector<8x128xf32>
    %31 = arith.addf %29, %30 : vector<8x128xf32>
    %32 = vector.extract_strided_slice %28 {offsets = [0, 128], sizes = [8, 128], strides = [1, 1]} : vector<8x512xf32> to vector<8x128xf32>
    %33 = arith.mulf %11, %25 : vector<8x128xf32>
    %34 = arith.addf %32, %33 : vector<8x128xf32>
    %35 = vector.extract_strided_slice %28 {offsets = [0, 256], sizes = [8, 128], strides = [1, 1]} : vector<8x512xf32> to vector<8x128xf32>
    %36 = arith.mulf %14, %25 : vector<8x128xf32>
    %37 = arith.addf %34, %36 : vector<8x128xf32>
    %38 = vector.extract_strided_slice %28 {offsets = [0, 384], sizes = [8, 128], strides = [1, 1]} : vector<8x512xf32> to vector<8x128xf32>
    %39 = arith.mulf %17, %25 : vector<8x128xf32>
    %40 = arith.addf %38, %39 : vector<8x128xf32>
    %41 = arith.mulf %20, %24 : vector<8x128xf32>
    %42 = arith.addf %40, %41 : vector<8x128xf32>
    %cst_20 = arith.constant 5.000000e-01 : f32
    %43 = vector.broadcast %cst_20 : f32 to vector<8x128xf32>
    %44 = arith.mulf %43, %42 : vector<8x128xf32>
    %45 = math.tanh %44 : vector<8x128xf32>
    %cst_21 = arith.constant 1.000000e+00 : f32
    %46 = vector.broadcast %cst_21 : f32 to vector<8x128xf32>
    %47 = arith.addf %45, %46 : vector<8x128xf32>
    %cst_22 = arith.constant 5.000000e-01 : f32
    %48 = vector.broadcast %cst_22 : f32 to vector<8x128xf32>
    %49 = arith.mulf %48, %47 : vector<8x128xf32>
    %50 = arith.mulf %49, %24 : vector<8x128xf32>
    %cst_23 = arith.constant 5.000000e-01 : f32
    %51 = vector.broadcast %cst_23 : f32 to vector<8x128xf32>
    %52 = arith.mulf %51, %34 : vector<8x128xf32>
    %53 = math.tanh %52 : vector<8x128xf32>
    %cst_24 = arith.constant 1.000000e+00 : f32
    %54 = vector.broadcast %cst_24 : f32 to vector<8x128xf32>
    %55 = arith.addf %53, %54 : vector<8x128xf32>
    %cst_25 = arith.constant 5.000000e-01 : f32
    %56 = vector.broadcast %cst_25 : f32 to vector<8x128xf32>
    %57 = arith.mulf %56, %55 : vector<8x128xf32>
    %58 = arith.mulf %57, %25 : vector<8x128xf32>
    %59 = arith.addf %50, %58 : vector<8x128xf32>
    %cst_26 = arith.constant 5.000000e-01 : f32
    %60 = vector.broadcast %cst_26 : f32 to vector<8x128xf32>
    %61 = arith.mulf %60, %31 : vector<8x128xf32>
    %62 = math.tanh %61 : vector<8x128xf32>
    %cst_27 = arith.constant 1.000000e+00 : f32
    %63 = vector.broadcast %cst_27 : f32 to vector<8x128xf32>
    %64 = arith.addf %62, %63 : vector<8x128xf32>
    %cst_28 = arith.constant 5.000000e-01 : f32
    %65 = vector.broadcast %cst_28 : f32 to vector<8x128xf32>
    %66 = arith.mulf %65, %64 : vector<8x128xf32>
    %67 = math.tanh %35 : vector<8x128xf32>
    %68 = arith.mulf %66, %67 : vector<8x128xf32>
    %69 = arith.addf %59, %68 : vector<8x128xf32>
    %cst_29 = arith.constant 5.000000e-01 : f32
    %70 = vector.broadcast %cst_29 : f32 to vector<8x128xf32>
    %71 = arith.mulf %70, %37 : vector<8x128xf32>
    %72 = math.tanh %71 : vector<8x128xf32>
    %cst_30 = arith.constant 1.000000e+00 : f32
    %73 = vector.broadcast %cst_30 : f32 to vector<8x128xf32>
    %74 = arith.addf %72, %73 : vector<8x128xf32>
    %cst_31 = arith.constant 5.000000e-01 : f32
    %75 = vector.broadcast %cst_31 : f32 to vector<8x128xf32>
    %76 = arith.mulf %75, %74 : vector<8x128xf32>
    %77 = math.tanh %69 : vector<8x128xf32>
    %78 = arith.mulf %76, %77 : vector<8x128xf32>
    %c0_32 = arith.constant 0 : index
    %c0_33 = arith.constant 0 : index
    %79 = vector.load %arg12[%c0_32, %c0_33] : memref<8x128xf32, #tpu.memory_space<vmem>>, vector<8x128xf32>
    tpu.vector_store %arg12[%c0_32, %c0_33], %69 {strides = array<i32>} : memref<8x128xf32, #tpu.memory_space<vmem>>, vector<8x128xf32>,
    %c0_34 = arith.constant 0 : index
    %c128 = arith.constant 128 : index
    %80 = vector.load %arg11[%c0_34, %c128] : memref<8x256xf32, #tpu.memory_space<vmem>>, vector<8x128xf32>
    tpu.vector_store %arg11[%c0_34, %c128], %78 {strides = array<i32>} : memref<8x256xf32, #tpu.memory_space<vmem>>, vector<8x128xf32>,
    %c0_35 = arith.constant 0 : index
    %c0_36 = arith.constant 0 : index
    %81 = vector.load %arg9[%c0_35, %c0_36] : memref<8x1024xf32, #tpu.memory_space<vmem>>, vector<8x128xf32>
    tpu.vector_store %arg9[%c0_35, %c0_36], %78 {strides = array<i32>} : memref<8x1024xf32, #tpu.memory_space<vmem>>, vector<8x128xf32>,
    %c0_37 = arith.constant 0 : index
    %c0_38 = arith.constant 0 : index
    %82 = vector.load %arg10[%c0_37, %c0_38] : memref<8x1024xf32, #tpu.memory_space<vmem>>, vector<8x128xf32>
    tpu.vector_store %arg10[%c0_37, %c0_38], %69 {strides = array<i32>} : memref<8x1024xf32, #tpu.memory_space<vmem>>, vector<8x128xf32>,
    %c0_39 = arith.constant 0 : index
    %c128_40 = arith.constant 128 : index
    %83 = vector.load %arg2[%c0_39, %c128_40] : memref<8x1024xf32, #tpu.memory_space<vmem>>, vector<8x128xf32>
    %c0_41 = arith.constant 0 : index
    %c0_42 = arith.constant 0 : index
    %84 = vector.load %arg11[%c0_41, %c0_42] : memref<8x256xf32, #tpu.memory_space<vmem>>, vector<8x128xf32>
    tpu.vector_store %arg11[%c0_41, %c0_42], %83 {strides = array<i32>} : memref<8x256xf32, #tpu.memory_space<vmem>>, vector<8x128xf32>,
    %c0_43 = arith.constant 0 : index
    %c128_44 = arith.constant 128 : index
    %85 = vector.load %arg3[%c0_43, %c128_44] : memref<8x1024xf32, #tpu.memory_space<vmem>>, vector<8x128xf32>
    %c0_45 = arith.constant 0 : index
    %c0_46 = arith.constant 0 : index
    %86 = vector.load %arg12[%c0_45, %c0_46] : memref<8x128xf32, #tpu.memory_space<vmem>>, vector<8x128xf32>
    %c0_47 = arith.constant 0 : index
    %c0_48 = arith.constant 0 : index
    %87 = vector.load %arg11[%c0_47, %c0_48] : memref<8x256xf32, #tpu.memory_space<vmem>>, vector<8x256xf32>
    %cst_49 = arith.constant dense<0.000000e+00> : vector<8x512xf32>
    %88 = tpu.matmul %87, %21, %cst_49 {dimension_numbers = #tpu.dot_dimension_numbers<[1], [0], [0], [1], [0, 0, 1, 1], [], []>} : vector<8x256xf32>, vector<256x512xf32>, vector<8x512xf32> -> vector<8x512xf32>
    %89 = arith.addf %88, %5 : vector<8x512xf32>
    %90 = vector.extract_strided_slice %89 {offsets = [0, 0], sizes = [8, 128], strides = [1, 1]} : vector<8x512xf32> to vector<8x128xf32>
    %91 = arith.mulf %8, %86 : vector<8x128xf32>
    %92 = arith.addf %90, %91 : vector<8x128xf32>
    %93 = vector.extract_strided_slice %89 {offsets = [0, 128], sizes = [8, 128], strides = [1, 1]} : vector<8x512xf32> to vector<8x128xf32>
    %94 = arith.mulf %11, %86 : vector<8x128xf32>
    %95 = arith.addf %93, %94 : vector<8x128xf32>
    %96 = vector.extract_strided_slice %89 {offsets = [0, 256], sizes = [8, 128], strides = [1, 1]} : vector<8x512xf32> to vector<8x128xf32>
    %97 = arith.mulf %14, %86 : vector<8x128xf32>
    %98 = arith.addf %95, %97 : vector<8x128xf32>
    %99 = vector.extract_strided_slice %89 {offsets = [0, 384], sizes = [8, 128], strides = [1, 1]} : vector<8x512xf32> to vector<8x128xf32>
    %100 = arith.mulf %17, %86 : vector<8x128xf32>
    %101 = arith.addf %99, %100 : vector<8x128xf32>
    %102 = arith.mulf %20, %85 : vector<8x128xf32>
    %103 = arith.addf %101, %102 : vector<8x128xf32>
    %cst_50 = arith.constant 5.000000e-01 : f32
    %104 = vector.broadcast %cst_50 : f32 to vector<8x128xf32>
    %105 = arith.mulf %104, %103 : vector<8x128xf32>
    %106 = math.tanh %105 : vector<8x128xf32>
    %cst_51 = arith.constant 1.000000e+00 : f32
    %107 = vector.broadcast %cst_51 : f32 to vector<8x128xf32>
    %108 = arith.addf %106, %107 : vector<8x128xf32>
    %cst_52 = arith.constant 5.000000e-01 : f32
    %109 = vector.broadcast %cst_52 : f32 to vector<8x128xf32>
    %110 = arith.mulf %109, %108 : vector<8x128xf32>
    %111 = arith.mulf %110, %85 : vector<8x128xf32>
    %cst_53 = arith.constant 5.000000e-01 : f32
    %112 = vector.broadcast %cst_53 : f32 to vector<8x128xf32>
    %113 = arith.mulf %112, %95 : vector<8x128xf32>
    %114 = math.tanh %113 : vector<8x128xf32>
    %cst_54 = arith.constant 1.000000e+00 : f32
    %115 = vector.broadcast %cst_54 : f32 to vector<8x128xf32>
    %116 = arith.addf %114, %115 : vector<8x128xf32>
    %cst_55 = arith.constant 5.000000e-01 : f32
    %117 = vector.broadcast %cst_55 : f32 to vector<8x128xf32>
    %118 = arith.mulf %117, %116 : vector<8x128xf32>
    %119 = arith.mulf %118, %86 : vector<8x128xf32>
    %120 = arith.addf %111, %119 : vector<8x128xf32>
    %cst_56 = arith.constant 5.000000e-01 : f32
    %121 = vector.broadcast %cst_56 : f32 to vector<8x128xf32>
    %122 = arith.mulf %121, %92 : vector<8x128xf32>
    %123 = math.tanh %122 : vector<8x128xf32>
    %cst_57 = arith.constant 1.000000e+00 : f32
    %124 = vector.broadcast %cst_57 : f32 to vector<8x128xf32>
    %125 = arith.addf %123, %124 : vector<8x128xf32>
    %cst_58 = arith.constant 5.000000e-01 : f32
    %126 = vector.broadcast %cst_58 : f32 to vector<8x128xf32>
    %127 = arith.mulf %126, %125 : vector<8x128xf32>
    %128 = math.tanh %96 : vector<8x128xf32>
    %129 = arith.mulf %127, %128 : vector<8x128xf32>
    %130 = arith.addf %120, %129 : vector<8x128xf32>
    %cst_59 = arith.constant 5.000000e-01 : f32
    %131 = vector.broadcast %cst_59 : f32 to vector<8x128xf32>
    %132 = arith.mulf %131, %98 : vector<8x128xf32>
    %133 = math.tanh %132 : vector<8x128xf32>
    %cst_60 = arith.constant 1.000000e+00 : f32
    %134 = vector.broadcast %cst_60 : f32 to vector<8x128xf32>
    %135 = arith.addf %133, %134 : vector<8x128xf32>
    %cst_61 = arith.constant 5.000000e-01 : f32
    %136 = vector.broadcast %cst_61 : f32 to vector<8x128xf32>
    %137 = arith.mulf %136, %135 : vector<8x128xf32>
    %138 = math.tanh %130 : vector<8x128xf32>
    %139 = arith.mulf %137, %138 : vector<8x128xf32>
    %c0_62 = arith.constant 0 : index
    %c0_63 = arith.constant 0 : index
    %140 = vector.load %arg12[%c0_62, %c0_63] : memref<8x128xf32, #tpu.memory_space<vmem>>, vector<8x128xf32>
    tpu.vector_store %arg12[%c0_62, %c0_63], %130 {strides = array<i32>} : memref<8x128xf32, #tpu.memory_space<vmem>>, vector<8x128xf32>,
    %c0_64 = arith.constant 0 : index
    %c128_65 = arith.constant 128 : index
    %141 = vector.load %arg11[%c0_64, %c128_65] : memref<8x256xf32, #tpu.memory_space<vmem>>, vector<8x128xf32>
    tpu.vector_store %arg11[%c0_64, %c128_65], %139 {strides = array<i32>} : memref<8x256xf32, #tpu.memory_space<vmem>>, vector<8x128xf32>,
    %c0_66 = arith.constant 0 : index
    %c128_67 = arith.constant 128 : index
    %142 = vector.load %arg9[%c0_66, %c128_67] : memref<8x1024xf32, #tpu.memory_space<vmem>>, vector<8x128xf32>
    tpu.vector_store %arg9[%c0_66, %c128_67], %139 {strides = array<i32>} : memref<8x1024xf32, #tpu.memory_space<vmem>>, vector<8x128xf32>,
    %c0_68 = arith.constant 0 : index
    %c128_69 = arith.constant 128 : index
    %143 = vector.load %arg10[%c0_68, %c128_69] : memref<8x1024xf32, #tpu.memory_space<vmem>>, vector<8x128xf32>
    tpu.vector_store %arg10[%c0_68, %c128_69], %130 {strides = array<i32>} : memref<8x1024xf32, #tpu.memory_space<vmem>>, vector<8x128xf32>,
    %c0_70 = arith.constant 0 : index
    %c256 = arith.constant 256 : index
    %144 = vector.load %arg2[%c0_70, %c256] : memref<8x1024xf32, #tpu.memory_space<vmem>>, vector<8x128xf32>
    %c0_71 = arith.constant 0 : index
    %c0_72 = arith.constant 0 : index
    %145 = vector.load %arg11[%c0_71, %c0_72] : memref<8x256xf32, #tpu.memory_space<vmem>>, vector<8x128xf32>
    tpu.vector_store %arg11[%c0_71, %c0_72], %144 {strides = array<i32>} : memref<8x256xf32, #tpu.memory_space<vmem>>, vector<8x128xf32>,
    %c0_73 = arith.constant 0 : index
    %c256_74 = arith.constant 256 : index
    %146 = vector.load %arg3[%c0_73, %c256_74] : memref<8x1024xf32, #tpu.memory_space<vmem>>, vector<8x128xf32>
    %c0_75 = arith.constant 0 : index
    %c0_76 = arith.constant 0 : index
    %147 = vector.load %arg12[%c0_75, %c0_76] : memref<8x128xf32, #tpu.memory_space<vmem>>, vector<8x128xf32>
    %c0_77 = arith.constant 0 : index
    %c0_78 = arith.constant 0 : index
    %148 = vector.load %arg11[%c0_77, %c0_78] : memref<8x256xf32, #tpu.memory_space<vmem>>, vector<8x256xf32>
    %cst_79 = arith.constant dense<0.000000e+00> : vector<8x512xf32>
    %149 = tpu.matmul %148, %21, %cst_79 {dimension_numbers = #tpu.dot_dimension_numbers<[1], [0], [0], [1], [0, 0, 1, 1], [], []>} : vector<8x256xf32>, vector<256x512xf32>, vector<8x512xf32> -> vector<8x512xf32>
    %150 = arith.addf %149, %5 : vector<8x512xf32>
    %151 = vector.extract_strided_slice %150 {offsets = [0, 0], sizes = [8, 128], strides = [1, 1]} : vector<8x512xf32> to vector<8x128xf32>
    %152 = arith.mulf %8, %147 : vector<8x128xf32>
    %153 = arith.addf %151, %152 : vector<8x128xf32>
    %154 = vector.extract_strided_slice %150 {offsets = [0, 128], sizes = [8, 128], strides = [1, 1]} : vector<8x512xf32> to vector<8x128xf32>
    %155 = arith.mulf %11, %147 : vector<8x128xf32>
    %156 = arith.addf %154, %155 : vector<8x128xf32>
    %157 = vector.extract_strided_slice %150 {offsets = [0, 256], sizes = [8, 128], strides = [1, 1]} : vector<8x512xf32> to vector<8x128xf32>
    %158 = arith.mulf %14, %147 : vector<8x128xf32>
    %159 = arith.addf %156, %158 : vector<8x128xf32>
    %160 = vector.extract_strided_slice %150 {offsets = [0, 384], sizes = [8, 128], strides = [1, 1]} : vector<8x512xf32> to vector<8x128xf32>
    %161 = arith.mulf %17, %147 : vector<8x128xf32>
    %162 = arith.addf %160, %161 : vector<8x128xf32>
    %163 = arith.mulf %20, %146 : vector<8x128xf32>
    %164 = arith.addf %162, %163 : vector<8x128xf32>
    %cst_80 = arith.constant 5.000000e-01 : f32
    %165 = vector.broadcast %cst_80 : f32 to vector<8x128xf32>
    %166 = arith.mulf %165, %164 : vector<8x128xf32>
    %167 = math.tanh %166 : vector<8x128xf32>
    %cst_81 = arith.constant 1.000000e+00 : f32
    %168 = vector.broadcast %cst_81 : f32 to vector<8x128xf32>
    %169 = arith.addf %167, %168 : vector<8x128xf32>
    %cst_82 = arith.constant 5.000000e-01 : f32
    %170 = vector.broadcast %cst_82 : f32 to vector<8x128xf32>
    %171 = arith.mulf %170, %169 : vector<8x128xf32>
    %172 = arith.mulf %171, %146 : vector<8x128xf32>
    %cst_83 = arith.constant 5.000000e-01 : f32
    %173 = vector.broadcast %cst_83 : f32 to vector<8x128xf32>
    %174 = arith.mulf %173, %156 : vector<8x128xf32>
    %175 = math.tanh %174 : vector<8x128xf32>
    %cst_84 = arith.constant 1.000000e+00 : f32
    %176 = vector.broadcast %cst_84 : f32 to vector<8x128xf32>
    %177 = arith.addf %175, %176 : vector<8x128xf32>
    %cst_85 = arith.constant 5.000000e-01 : f32
    %178 = vector.broadcast %cst_85 : f32 to vector<8x128xf32>
    %179 = arith.mulf %178, %177 : vector<8x128xf32>
    %180 = arith.mulf %179, %147 : vector<8x128xf32>
    %181 = arith.addf %172, %180 : vector<8x128xf32>
    %cst_86 = arith.constant 5.000000e-01 : f32
    %182 = vector.broadcast %cst_86 : f32 to vector<8x128xf32>
    %183 = arith.mulf %182, %153 : vector<8x128xf32>
    %184 = math.tanh %183 : vector<8x128xf32>
    %cst_87 = arith.constant 1.000000e+00 : f32
    %185 = vector.broadcast %cst_87 : f32 to vector<8x128xf32>
    %186 = arith.addf %184, %185 : vector<8x128xf32>
    %cst_88 = arith.constant 5.000000e-01 : f32
    %187 = vector.broadcast %cst_88 : f32 to vector<8x128xf32>
    %188 = arith.mulf %187, %186 : vector<8x128xf32>
    %189 = math.tanh %157 : vector<8x128xf32>
    %190 = arith.mulf %188, %189 : vector<8x128xf32>
    %191 = arith.addf %181, %190 : vector<8x128xf32>
    %cst_89 = arith.constant 5.000000e-01 : f32
    %192 = vector.broadcast %cst_89 : f32 to vector<8x128xf32>
    %193 = arith.mulf %192, %159 : vector<8x128xf32>
    %194 = math.tanh %193 : vector<8x128xf32>
    %cst_90 = arith.constant 1.000000e+00 : f32
    %195 = vector.broadcast %cst_90 : f32 to vector<8x128xf32>
    %196 = arith.addf %194, %195 : vector<8x128xf32>
    %cst_91 = arith.constant 5.000000e-01 : f32
    %197 = vector.broadcast %cst_91 : f32 to vector<8x128xf32>
    %198 = arith.mulf %197, %196 : vector<8x128xf32>
    %199 = math.tanh %191 : vector<8x128xf32>
    %200 = arith.mulf %198, %199 : vector<8x128xf32>
    %c0_92 = arith.constant 0 : index
    %c0_93 = arith.constant 0 : index
    %201 = vector.load %arg12[%c0_92, %c0_93] : memref<8x128xf32, #tpu.memory_space<vmem>>, vector<8x128xf32>
    tpu.vector_store %arg12[%c0_92, %c0_93], %191 {strides = array<i32>} : memref<8x128xf32, #tpu.memory_space<vmem>>, vector<8x128xf32>,
    %c0_94 = arith.constant 0 : index
    %c128_95 = arith.constant 128 : index
    %202 = vector.load %arg11[%c0_94, %c128_95] : memref<8x256xf32, #tpu.memory_space<vmem>>, vector<8x128xf32>
    tpu.vector_store %arg11[%c0_94, %c128_95], %200 {strides = array<i32>} : memref<8x256xf32, #tpu.memory_space<vmem>>, vector<8x128xf32>,
    %c0_96 = arith.constant 0 : index
    %c256_97 = arith.constant 256 : index
    %203 = vector.load %arg9[%c0_96, %c256_97] : memref<8x1024xf32, #tpu.memory_space<vmem>>, vector<8x128xf32>
    tpu.vector_store %arg9[%c0_96, %c256_97], %200 {strides = array<i32>} : memref<8x1024xf32, #tpu.memory_space<vmem>>, vector<8x128xf32>,
    %c0_98 = arith.constant 0 : index
    %c256_99 = arith.constant 256 : index
    %204 = vector.load %arg10[%c0_98, %c256_99] : memref<8x1024xf32, #tpu.memory_space<vmem>>, vector<8x128xf32>
    tpu.vector_store %arg10[%c0_98, %c256_99], %191 {strides = array<i32>} : memref<8x1024xf32, #tpu.memory_space<vmem>>, vector<8x128xf32>,
    %c0_100 = arith.constant 0 : index
    %c384 = arith.constant 384 : index
    %205 = vector.load %arg2[%c0_100, %c384] : memref<8x1024xf32, #tpu.memory_space<vmem>>, vector<8x128xf32>
    %c0_101 = arith.constant 0 : index
    %c0_102 = arith.constant 0 : index
    %206 = vector.load %arg11[%c0_101, %c0_102] : memref<8x256xf32, #tpu.memory_space<vmem>>, vector<8x128xf32>
    tpu.vector_store %arg11[%c0_101, %c0_102], %205 {strides = array<i32>} : memref<8x256xf32, #tpu.memory_space<vmem>>, vector<8x128xf32>,
    %c0_103 = arith.constant 0 : index
    %c384_104 = arith.constant 384 : index
    %207 = vector.load %arg3[%c0_103, %c384_104] : memref<8x1024xf32, #tpu.memory_space<vmem>>, vector<8x128xf32>
    %c0_105 = arith.constant 0 : index
    %c0_106 = arith.constant 0 : index
    %208 = vector.load %arg12[%c0_105, %c0_106] : memref<8x128xf32, #tpu.memory_space<vmem>>, vector<8x128xf32>
    %c0_107 = arith.constant 0 : index
    %c0_108 = arith.constant 0 : index
    %209 = vector.load %arg11[%c0_107, %c0_108] : memref<8x256xf32, #tpu.memory_space<vmem>>, vector<8x256xf32>
    %cst_109 = arith.constant dense<0.000000e+00> : vector<8x512xf32>
    %210 = tpu.matmul %209, %21, %cst_109 {dimension_numbers = #tpu.dot_dimension_numbers<[1], [0], [0], [1], [0, 0, 1, 1], [], []>} : vector<8x256xf32>, vector<256x512xf32>, vector<8x512xf32> -> vector<8x512xf32>
    %211 = arith.addf %210, %5 : vector<8x512xf32>
    %212 = vector.extract_strided_slice %211 {offsets = [0, 0], sizes = [8, 128], strides = [1, 1]} : vector<8x512xf32> to vector<8x128xf32>
    %213 = arith.mulf %8, %208 : vector<8x128xf32>
    %214 = arith.addf %212, %213 : vector<8x128xf32>
    %215 = vector.extract_strided_slice %211 {offsets = [0, 128], sizes = [8, 128], strides = [1, 1]} : vector<8x512xf32> to vector<8x128xf32>
    %216 = arith.mulf %11, %208 : vector<8x128xf32>
    %217 = arith.addf %215, %216 : vector<8x128xf32>
    %218 = vector.extract_strided_slice %211 {offsets = [0, 256], sizes = [8, 128], strides = [1, 1]} : vector<8x512xf32> to vector<8x128xf32>
    %219 = arith.mulf %14, %208 : vector<8x128xf32>
    %220 = arith.addf %217, %219 : vector<8x128xf32>
    %221 = vector.extract_strided_slice %211 {offsets = [0, 384], sizes = [8, 128], strides = [1, 1]} : vector<8x512xf32> to vector<8x128xf32>
    %222 = arith.mulf %17, %208 : vector<8x128xf32>
    %223 = arith.addf %221, %222 : vector<8x128xf32>
    %224 = arith.mulf %20, %207 : vector<8x128xf32>
    %225 = arith.addf %223, %224 : vector<8x128xf32>
    %cst_110 = arith.constant 5.000000e-01 : f32
    %226 = vector.broadcast %cst_110 : f32 to vector<8x128xf32>
    %227 = arith.mulf %226, %225 : vector<8x128xf32>
    %228 = math.tanh %227 : vector<8x128xf32>
    %cst_111 = arith.constant 1.000000e+00 : f32
    %229 = vector.broadcast %cst_111 : f32 to vector<8x128xf32>
    %230 = arith.addf %228, %229 : vector<8x128xf32>
    %cst_112 = arith.constant 5.000000e-01 : f32
    %231 = vector.broadcast %cst_112 : f32 to vector<8x128xf32>
    %232 = arith.mulf %231, %230 : vector<8x128xf32>
    %233 = arith.mulf %232, %207 : vector<8x128xf32>
    %cst_113 = arith.constant 5.000000e-01 : f32
    %234 = vector.broadcast %cst_113 : f32 to vector<8x128xf32>
    %235 = arith.mulf %234, %217 : vector<8x128xf32>
    %236 = math.tanh %235 : vector<8x128xf32>
    %cst_114 = arith.constant 1.000000e+00 : f32
    %237 = vector.broadcast %cst_114 : f32 to vector<8x128xf32>
    %238 = arith.addf %236, %237 : vector<8x128xf32>
    %cst_115 = arith.constant 5.000000e-01 : f32
    %239 = vector.broadcast %cst_115 : f32 to vector<8x128xf32>
    %240 = arith.mulf %239, %238 : vector<8x128xf32>
    %241 = arith.mulf %240, %208 : vector<8x128xf32>
    %242 = arith.addf %233, %241 : vector<8x128xf32>
    %cst_116 = arith.constant 5.000000e-01 : f32
    %243 = vector.broadcast %cst_116 : f32 to vector<8x128xf32>
    %244 = arith.mulf %243, %214 : vector<8x128xf32>
    %245 = math.tanh %244 : vector<8x128xf32>
    %cst_117 = arith.constant 1.000000e+00 : f32
    %246 = vector.broadcast %cst_117 : f32 to vector<8x128xf32>
    %247 = arith.addf %245, %246 : vector<8x128xf32>
    %cst_118 = arith.constant 5.000000e-01 : f32
    %248 = vector.broadcast %cst_118 : f32 to vector<8x128xf32>
    %249 = arith.mulf %248, %247 : vector<8x128xf32>
    %250 = math.tanh %218 : vector<8x128xf32>
    %251 = arith.mulf %249, %250 : vector<8x128xf32>
    %252 = arith.addf %242, %251 : vector<8x128xf32>
    %cst_119 = arith.constant 5.000000e-01 : f32
    %253 = vector.broadcast %cst_119 : f32 to vector<8x128xf32>
    %254 = arith.mulf %253, %220 : vector<8x128xf32>
    %255 = math.tanh %254 : vector<8x128xf32>
    %cst_120 = arith.constant 1.000000e+00 : f32
    %256 = vector.broadcast %cst_120 : f32 to vector<8x128xf32>
    %257 = arith.addf %255, %256 : vector<8x128xf32>
    %cst_121 = arith.constant 5.000000e-01 : f32
    %258 = vector.broadcast %cst_121 : f32 to vector<8x128xf32>
    %259 = arith.mulf %258, %257 : vector<8x128xf32>
    %260 = math.tanh %252 : vector<8x128xf32>
    %261 = arith.mulf %259, %260 : vector<8x128xf32>
    %c0_122 = arith.constant 0 : index
    %c0_123 = arith.constant 0 : index
    %262 = vector.load %arg12[%c0_122, %c0_123] : memref<8x128xf32, #tpu.memory_space<vmem>>, vector<8x128xf32>
    tpu.vector_store %arg12[%c0_122, %c0_123], %252 {strides = array<i32>} : memref<8x128xf32, #tpu.memory_space<vmem>>, vector<8x128xf32>,
    %c0_124 = arith.constant 0 : index
    %c128_125 = arith.constant 128 : index
    %263 = vector.load %arg11[%c0_124, %c128_125] : memref<8x256xf32, #tpu.memory_space<vmem>>, vector<8x128xf32>
    tpu.vector_store %arg11[%c0_124, %c128_125], %261 {strides = array<i32>} : memref<8x256xf32, #tpu.memory_space<vmem>>, vector<8x128xf32>,
    %c0_126 = arith.constant 0 : index
    %c384_127 = arith.constant 384 : index
    %264 = vector.load %arg9[%c0_126, %c384_127] : memref<8x1024xf32, #tpu.memory_space<vmem>>, vector<8x128xf32>
    tpu.vector_store %arg9[%c0_126, %c384_127], %261 {strides = array<i32>} : memref<8x1024xf32, #tpu.memory_space<vmem>>, vector<8x128xf32>,
    %c0_128 = arith.constant 0 : index
    %c384_129 = arith.constant 384 : index
    %265 = vector.load %arg10[%c0_128, %c384_129] : memref<8x1024xf32, #tpu.memory_space<vmem>>, vector<8x128xf32>
    tpu.vector_store %arg10[%c0_128, %c384_129], %252 {strides = array<i32>} : memref<8x1024xf32, #tpu.memory_space<vmem>>, vector<8x128xf32>,
    %c0_130 = arith.constant 0 : index
    %c512 = arith.constant 512 : index
    %266 = vector.load %arg2[%c0_130, %c512] : memref<8x1024xf32, #tpu.memory_space<vmem>>, vector<8x128xf32>
    %c0_131 = arith.constant 0 : index
    %c0_132 = arith.constant 0 : index
    %267 = vector.load %arg11[%c0_131, %c0_132] : memref<8x256xf32, #tpu.memory_space<vmem>>, vector<8x128xf32>
    tpu.vector_store %arg11[%c0_131, %c0_132], %266 {strides = array<i32>} : memref<8x256xf32, #tpu.memory_space<vmem>>, vector<8x128xf32>,
    %c0_133 = arith.constant 0 : index
    %c512_134 = arith.constant 512 : index
    %268 = vector.load %arg3[%c0_133, %c512_134] : memref<8x1024xf32, #tpu.memory_space<vmem>>, vector<8x128xf32>
    %c0_135 = arith.constant 0 : index
    %c0_136 = arith.constant 0 : index
    %269 = vector.load %arg12[%c0_135, %c0_136] : memref<8x128xf32, #tpu.memory_space<vmem>>, vector<8x128xf32>
    %c0_137 = arith.constant 0 : index
    %c0_138 = arith.constant 0 : index
    %270 = vector.load %arg11[%c0_137, %c0_138] : memref<8x256xf32, #tpu.memory_space<vmem>>, vector<8x256xf32>
    %cst_139 = arith.constant dense<0.000000e+00> : vector<8x512xf32>
    %271 = tpu.matmul %270, %21, %cst_139 {dimension_numbers = #tpu.dot_dimension_numbers<[1], [0], [0], [1], [0, 0, 1, 1], [], []>} : vector<8x256xf32>, vector<256x512xf32>, vector<8x512xf32> -> vector<8x512xf32>
    %272 = arith.addf %271, %5 : vector<8x512xf32>
    %273 = vector.extract_strided_slice %272 {offsets = [0, 0], sizes = [8, 128], strides = [1, 1]} : vector<8x512xf32> to vector<8x128xf32>
    %274 = arith.mulf %8, %269 : vector<8x128xf32>
    %275 = arith.addf %273, %274 : vector<8x128xf32>
    %276 = vector.extract_strided_slice %272 {offsets = [0, 128], sizes = [8, 128], strides = [1, 1]} : vector<8x512xf32> to vector<8x128xf32>
    %277 = arith.mulf %11, %269 : vector<8x128xf32>
    %278 = arith.addf %276, %277 : vector<8x128xf32>
    %279 = vector.extract_strided_slice %272 {offsets = [0, 256], sizes = [8, 128], strides = [1, 1]} : vector<8x512xf32> to vector<8x128xf32>
    %280 = arith.mulf %14, %269 : vector<8x128xf32>
    %281 = arith.addf %278, %280 : vector<8x128xf32>
    %282 = vector.extract_strided_slice %272 {offsets = [0, 384], sizes = [8, 128], strides = [1, 1]} : vector<8x512xf32> to vector<8x128xf32>
    %283 = arith.mulf %17, %269 : vector<8x128xf32>
    %284 = arith.addf %282, %283 : vector<8x128xf32>
    %285 = arith.mulf %20, %268 : vector<8x128xf32>
    %286 = arith.addf %284, %285 : vector<8x128xf32>
    %cst_140 = arith.constant 5.000000e-01 : f32
    %287 = vector.broadcast %cst_140 : f32 to vector<8x128xf32>
    %288 = arith.mulf %287, %286 : vector<8x128xf32>
    %289 = math.tanh %288 : vector<8x128xf32>
    %cst_141 = arith.constant 1.000000e+00 : f32
    %290 = vector.broadcast %cst_141 : f32 to vector<8x128xf32>
    %291 = arith.addf %289, %290 : vector<8x128xf32>
    %cst_142 = arith.constant 5.000000e-01 : f32
    %292 = vector.broadcast %cst_142 : f32 to vector<8x128xf32>
    %293 = arith.mulf %292, %291 : vector<8x128xf32>
    %294 = arith.mulf %293, %268 : vector<8x128xf32>
    %cst_143 = arith.constant 5.000000e-01 : f32
    %295 = vector.broadcast %cst_143 : f32 to vector<8x128xf32>
    %296 = arith.mulf %295, %278 : vector<8x128xf32>
    %297 = math.tanh %296 : vector<8x128xf32>
    %cst_144 = arith.constant 1.000000e+00 : f32
    %298 = vector.broadcast %cst_144 : f32 to vector<8x128xf32>
    %299 = arith.addf %297, %298 : vector<8x128xf32>
    %cst_145 = arith.constant 5.000000e-01 : f32
    %300 = vector.broadcast %cst_145 : f32 to vector<8x128xf32>
    %301 = arith.mulf %300, %299 : vector<8x128xf32>
    %302 = arith.mulf %301, %269 : vector<8x128xf32>
    %303 = arith.addf %294, %302 : vector<8x128xf32>
    %cst_146 = arith.constant 5.000000e-01 : f32
    %304 = vector.broadcast %cst_146 : f32 to vector<8x128xf32>
    %305 = arith.mulf %304, %275 : vector<8x128xf32>
    %306 = math.tanh %305 : vector<8x128xf32>
    %cst_147 = arith.constant 1.000000e+00 : f32
    %307 = vector.broadcast %cst_147 : f32 to vector<8x128xf32>
    %308 = arith.addf %306, %307 : vector<8x128xf32>
    %cst_148 = arith.constant 5.000000e-01 : f32
    %309 = vector.broadcast %cst_148 : f32 to vector<8x128xf32>
    %310 = arith.mulf %309, %308 : vector<8x128xf32>
    %311 = math.tanh %279 : vector<8x128xf32>
    %312 = arith.mulf %310, %311 : vector<8x128xf32>
    %313 = arith.addf %303, %312 : vector<8x128xf32>
    %cst_149 = arith.constant 5.000000e-01 : f32
    %314 = vector.broadcast %cst_149 : f32 to vector<8x128xf32>
    %315 = arith.mulf %314, %281 : vector<8x128xf32>
    %316 = math.tanh %315 : vector<8x128xf32>
    %cst_150 = arith.constant 1.000000e+00 : f32
    %317 = vector.broadcast %cst_150 : f32 to vector<8x128xf32>
    %318 = arith.addf %316, %317 : vector<8x128xf32>
    %cst_151 = arith.constant 5.000000e-01 : f32
    %319 = vector.broadcast %cst_151 : f32 to vector<8x128xf32>
    %320 = arith.mulf %319, %318 : vector<8x128xf32>
    %321 = math.tanh %313 : vector<8x128xf32>
    %322 = arith.mulf %320, %321 : vector<8x128xf32>
    %c0_152 = arith.constant 0 : index
    %c0_153 = arith.constant 0 : index
    %323 = vector.load %arg12[%c0_152, %c0_153] : memref<8x128xf32, #tpu.memory_space<vmem>>, vector<8x128xf32>
    tpu.vector_store %arg12[%c0_152, %c0_153], %313 {strides = array<i32>} : memref<8x128xf32, #tpu.memory_space<vmem>>, vector<8x128xf32>,
    %c0_154 = arith.constant 0 : index
    %c128_155 = arith.constant 128 : index
    %324 = vector.load %arg11[%c0_154, %c128_155] : memref<8x256xf32, #tpu.memory_space<vmem>>, vector<8x128xf32>
    tpu.vector_store %arg11[%c0_154, %c128_155], %322 {strides = array<i32>} : memref<8x256xf32, #tpu.memory_space<vmem>>, vector<8x128xf32>,
    %c0_156 = arith.constant 0 : index
    %c512_157 = arith.constant 512 : index
    %325 = vector.load %arg9[%c0_156, %c512_157] : memref<8x1024xf32, #tpu.memory_space<vmem>>, vector<8x128xf32>
    tpu.vector_store %arg9[%c0_156, %c512_157], %322 {strides = array<i32>} : memref<8x1024xf32, #tpu.memory_space<vmem>>, vector<8x128xf32>,
    %c0_158 = arith.constant 0 : index
    %c512_159 = arith.constant 512 : index
    %326 = vector.load %arg10[%c0_158, %c512_159] : memref<8x1024xf32, #tpu.memory_space<vmem>>, vector<8x128xf32>
    tpu.vector_store %arg10[%c0_158, %c512_159], %313 {strides = array<i32>} : memref<8x1024xf32, #tpu.memory_space<vmem>>, vector<8x128xf32>,
    %c0_160 = arith.constant 0 : index
    %c640 = arith.constant 640 : index
    %327 = vector.load %arg2[%c0_160, %c640] : memref<8x1024xf32, #tpu.memory_space<vmem>>, vector<8x128xf32>
    %c0_161 = arith.constant 0 : index
    %c0_162 = arith.constant 0 : index
    %328 = vector.load %arg11[%c0_161, %c0_162] : memref<8x256xf32, #tpu.memory_space<vmem>>, vector<8x128xf32>
    tpu.vector_store %arg11[%c0_161, %c0_162], %327 {strides = array<i32>} : memref<8x256xf32, #tpu.memory_space<vmem>>, vector<8x128xf32>,
    %c0_163 = arith.constant 0 : index
    %c640_164 = arith.constant 640 : index
    %329 = vector.load %arg3[%c0_163, %c640_164] : memref<8x1024xf32, #tpu.memory_space<vmem>>, vector<8x128xf32>
    %c0_165 = arith.constant 0 : index
    %c0_166 = arith.constant 0 : index
    %330 = vector.load %arg12[%c0_165, %c0_166] : memref<8x128xf32, #tpu.memory_space<vmem>>, vector<8x128xf32>
    %c0_167 = arith.constant 0 : index
    %c0_168 = arith.constant 0 : index
    %331 = vector.load %arg11[%c0_167, %c0_168] : memref<8x256xf32, #tpu.memory_space<vmem>>, vector<8x256xf32>
    %cst_169 = arith.constant dense<0.000000e+00> : vector<8x512xf32>
    %332 = tpu.matmul %331, %21, %cst_169 {dimension_numbers = #tpu.dot_dimension_numbers<[1], [0], [0], [1], [0, 0, 1, 1], [], []>} : vector<8x256xf32>, vector<256x512xf32>, vector<8x512xf32> -> vector<8x512xf32>
    %333 = arith.addf %332, %5 : vector<8x512xf32>
    %334 = vector.extract_strided_slice %333 {offsets = [0, 0], sizes = [8, 128], strides = [1, 1]} : vector<8x512xf32> to vector<8x128xf32>
    %335 = arith.mulf %8, %330 : vector<8x128xf32>
    %336 = arith.addf %334, %335 : vector<8x128xf32>
    %337 = vector.extract_strided_slice %333 {offsets = [0, 128], sizes = [8, 128], strides = [1, 1]} : vector<8x512xf32> to vector<8x128xf32>
    %338 = arith.mulf %11, %330 : vector<8x128xf32>
    %339 = arith.addf %337, %338 : vector<8x128xf32>
    %340 = vector.extract_strided_slice %333 {offsets = [0, 256], sizes = [8, 128], strides = [1, 1]} : vector<8x512xf32> to vector<8x128xf32>
    %341 = arith.mulf %14, %330 : vector<8x128xf32>
    %342 = arith.addf %339, %341 : vector<8x128xf32>
    %343 = vector.extract_strided_slice %333 {offsets = [0, 384], sizes = [8, 128], strides = [1, 1]} : vector<8x512xf32> to vector<8x128xf32>
    %344 = arith.mulf %17, %330 : vector<8x128xf32>
    %345 = arith.addf %343, %344 : vector<8x128xf32>
    %346 = arith.mulf %20, %329 : vector<8x128xf32>
    %347 = arith.addf %345, %346 : vector<8x128xf32>
    %cst_170 = arith.constant 5.000000e-01 : f32
    %348 = vector.broadcast %cst_170 : f32 to vector<8x128xf32>
    %349 = arith.mulf %348, %347 : vector<8x128xf32>
    %350 = math.tanh %349 : vector<8x128xf32>
    %cst_171 = arith.constant 1.000000e+00 : f32
    %351 = vector.broadcast %cst_171 : f32 to vector<8x128xf32>
    %352 = arith.addf %350, %351 : vector<8x128xf32>
    %cst_172 = arith.constant 5.000000e-01 : f32
    %353 = vector.broadcast %cst_172 : f32 to vector<8x128xf32>
    %354 = arith.mulf %353, %352 : vector<8x128xf32>
    %355 = arith.mulf %354, %329 : vector<8x128xf32>
    %cst_173 = arith.constant 5.000000e-01 : f32
    %356 = vector.broadcast %cst_173 : f32 to vector<8x128xf32>
    %357 = arith.mulf %356, %339 : vector<8x128xf32>
    %358 = math.tanh %357 : vector<8x128xf32>
    %cst_174 = arith.constant 1.000000e+00 : f32
    %359 = vector.broadcast %cst_174 : f32 to vector<8x128xf32>
    %360 = arith.addf %358, %359 : vector<8x128xf32>
    %cst_175 = arith.constant 5.000000e-01 : f32
    %361 = vector.broadcast %cst_175 : f32 to vector<8x128xf32>
    %362 = arith.mulf %361, %360 : vector<8x128xf32>
    %363 = arith.mulf %362, %330 : vector<8x128xf32>
    %364 = arith.addf %355, %363 : vector<8x128xf32>
    %cst_176 = arith.constant 5.000000e-01 : f32
    %365 = vector.broadcast %cst_176 : f32 to vector<8x128xf32>
    %366 = arith.mulf %365, %336 : vector<8x128xf32>
    %367 = math.tanh %366 : vector<8x128xf32>
    %cst_177 = arith.constant 1.000000e+00 : f32
    %368 = vector.broadcast %cst_177 : f32 to vector<8x128xf32>
    %369 = arith.addf %367, %368 : vector<8x128xf32>
    %cst_178 = arith.constant 5.000000e-01 : f32
    %370 = vector.broadcast %cst_178 : f32 to vector<8x128xf32>
    %371 = arith.mulf %370, %369 : vector<8x128xf32>
    %372 = math.tanh %340 : vector<8x128xf32>
    %373 = arith.mulf %371, %372 : vector<8x128xf32>
    %374 = arith.addf %364, %373 : vector<8x128xf32>
    %cst_179 = arith.constant 5.000000e-01 : f32
    %375 = vector.broadcast %cst_179 : f32 to vector<8x128xf32>
    %376 = arith.mulf %375, %342 : vector<8x128xf32>
    %377 = math.tanh %376 : vector<8x128xf32>
    %cst_180 = arith.constant 1.000000e+00 : f32
    %378 = vector.broadcast %cst_180 : f32 to vector<8x128xf32>
    %379 = arith.addf %377, %378 : vector<8x128xf32>
    %cst_181 = arith.constant 5.000000e-01 : f32
    %380 = vector.broadcast %cst_181 : f32 to vector<8x128xf32>
    %381 = arith.mulf %380, %379 : vector<8x128xf32>
    %382 = math.tanh %374 : vector<8x128xf32>
    %383 = arith.mulf %381, %382 : vector<8x128xf32>
    %c0_182 = arith.constant 0 : index
    %c0_183 = arith.constant 0 : index
    %384 = vector.load %arg12[%c0_182, %c0_183] : memref<8x128xf32, #tpu.memory_space<vmem>>, vector<8x128xf32>
    tpu.vector_store %arg12[%c0_182, %c0_183], %374 {strides = array<i32>} : memref<8x128xf32, #tpu.memory_space<vmem>>, vector<8x128xf32>,
    %c0_184 = arith.constant 0 : index
    %c128_185 = arith.constant 128 : index
    %385 = vector.load %arg11[%c0_184, %c128_185] : memref<8x256xf32, #tpu.memory_space<vmem>>, vector<8x128xf32>
    tpu.vector_store %arg11[%c0_184, %c128_185], %383 {strides = array<i32>} : memref<8x256xf32, #tpu.memory_space<vmem>>, vector<8x128xf32>,
    %c0_186 = arith.constant 0 : index
    %c640_187 = arith.constant 640 : index
    %386 = vector.load %arg9[%c0_186, %c640_187] : memref<8x1024xf32, #tpu.memory_space<vmem>>, vector<8x128xf32>
    tpu.vector_store %arg9[%c0_186, %c640_187], %383 {strides = array<i32>} : memref<8x1024xf32, #tpu.memory_space<vmem>>, vector<8x128xf32>,
    %c0_188 = arith.constant 0 : index
    %c640_189 = arith.constant 640 : index
    %387 = vector.load %arg10[%c0_188, %c640_189] : memref<8x1024xf32, #tpu.memory_space<vmem>>, vector<8x128xf32>
    tpu.vector_store %arg10[%c0_188, %c640_189], %374 {strides = array<i32>} : memref<8x1024xf32, #tpu.memory_space<vmem>>, vector<8x128xf32>,
    %c0_190 = arith.constant 0 : index
    %c768 = arith.constant 768 : index
    %388 = vector.load %arg2[%c0_190, %c768] : memref<8x1024xf32, #tpu.memory_space<vmem>>, vector<8x128xf32>
    %c0_191 = arith.constant 0 : index
    %c0_192 = arith.constant 0 : index
    %389 = vector.load %arg11[%c0_191, %c0_192] : memref<8x256xf32, #tpu.memory_space<vmem>>, vector<8x128xf32>
    tpu.vector_store %arg11[%c0_191, %c0_192], %388 {strides = array<i32>} : memref<8x256xf32, #tpu.memory_space<vmem>>, vector<8x128xf32>,
    %c0_193 = arith.constant 0 : index
    %c768_194 = arith.constant 768 : index
    %390 = vector.load %arg3[%c0_193, %c768_194] : memref<8x1024xf32, #tpu.memory_space<vmem>>, vector<8x128xf32>
    %c0_195 = arith.constant 0 : index
    %c0_196 = arith.constant 0 : index
    %391 = vector.load %arg12[%c0_195, %c0_196] : memref<8x128xf32, #tpu.memory_space<vmem>>, vector<8x128xf32>
    %c0_197 = arith.constant 0 : index
    %c0_198 = arith.constant 0 : index
    %392 = vector.load %arg11[%c0_197, %c0_198] : memref<8x256xf32, #tpu.memory_space<vmem>>, vector<8x256xf32>
    %cst_199 = arith.constant dense<0.000000e+00> : vector<8x512xf32>
    %393 = tpu.matmul %392, %21, %cst_199 {dimension_numbers = #tpu.dot_dimension_numbers<[1], [0], [0], [1], [0, 0, 1, 1], [], []>} : vector<8x256xf32>, vector<256x512xf32>, vector<8x512xf32> -> vector<8x512xf32>
    %394 = arith.addf %393, %5 : vector<8x512xf32>
    %395 = vector.extract_strided_slice %394 {offsets = [0, 0], sizes = [8, 128], strides = [1, 1]} : vector<8x512xf32> to vector<8x128xf32>
    %396 = arith.mulf %8, %391 : vector<8x128xf32>
    %397 = arith.addf %395, %396 : vector<8x128xf32>
    %398 = vector.extract_strided_slice %394 {offsets = [0, 128], sizes = [8, 128], strides = [1, 1]} : vector<8x512xf32> to vector<8x128xf32>
    %399 = arith.mulf %11, %391 : vector<8x128xf32>
    %400 = arith.addf %398, %399 : vector<8x128xf32>
    %401 = vector.extract_strided_slice %394 {offsets = [0, 256], sizes = [8, 128], strides = [1, 1]} : vector<8x512xf32> to vector<8x128xf32>
    %402 = arith.mulf %14, %391 : vector<8x128xf32>
    %403 = arith.addf %400, %402 : vector<8x128xf32>
    %404 = vector.extract_strided_slice %394 {offsets = [0, 384], sizes = [8, 128], strides = [1, 1]} : vector<8x512xf32> to vector<8x128xf32>
    %405 = arith.mulf %17, %391 : vector<8x128xf32>
    %406 = arith.addf %404, %405 : vector<8x128xf32>
    %407 = arith.mulf %20, %390 : vector<8x128xf32>
    %408 = arith.addf %406, %407 : vector<8x128xf32>
    %cst_200 = arith.constant 5.000000e-01 : f32
    %409 = vector.broadcast %cst_200 : f32 to vector<8x128xf32>
    %410 = arith.mulf %409, %408 : vector<8x128xf32>
    %411 = math.tanh %410 : vector<8x128xf32>
    %cst_201 = arith.constant 1.000000e+00 : f32
    %412 = vector.broadcast %cst_201 : f32 to vector<8x128xf32>
    %413 = arith.addf %411, %412 : vector<8x128xf32>
    %cst_202 = arith.constant 5.000000e-01 : f32
    %414 = vector.broadcast %cst_202 : f32 to vector<8x128xf32>
    %415 = arith.mulf %414, %413 : vector<8x128xf32>
    %416 = arith.mulf %415, %390 : vector<8x128xf32>
    %cst_203 = arith.constant 5.000000e-01 : f32
    %417 = vector.broadcast %cst_203 : f32 to vector<8x128xf32>
    %418 = arith.mulf %417, %400 : vector<8x128xf32>
    %419 = math.tanh %418 : vector<8x128xf32>
    %cst_204 = arith.constant 1.000000e+00 : f32
    %420 = vector.broadcast %cst_204 : f32 to vector<8x128xf32>
    %421 = arith.addf %419, %420 : vector<8x128xf32>
    %cst_205 = arith.constant 5.000000e-01 : f32
    %422 = vector.broadcast %cst_205 : f32 to vector<8x128xf32>
    %423 = arith.mulf %422, %421 : vector<8x128xf32>
    %424 = arith.mulf %423, %391 : vector<8x128xf32>
    %425 = arith.addf %416, %424 : vector<8x128xf32>
    %cst_206 = arith.constant 5.000000e-01 : f32
    %426 = vector.broadcast %cst_206 : f32 to vector<8x128xf32>
    %427 = arith.mulf %426, %397 : vector<8x128xf32>
    %428 = math.tanh %427 : vector<8x128xf32>
    %cst_207 = arith.constant 1.000000e+00 : f32
    %429 = vector.broadcast %cst_207 : f32 to vector<8x128xf32>
    %430 = arith.addf %428, %429 : vector<8x128xf32>
    %cst_208 = arith.constant 5.000000e-01 : f32
    %431 = vector.broadcast %cst_208 : f32 to vector<8x128xf32>
    %432 = arith.mulf %431, %430 : vector<8x128xf32>
    %433 = math.tanh %401 : vector<8x128xf32>
    %434 = arith.mulf %432, %433 : vector<8x128xf32>
    %435 = arith.addf %425, %434 : vector<8x128xf32>
    %cst_209 = arith.constant 5.000000e-01 : f32
    %436 = vector.broadcast %cst_209 : f32 to vector<8x128xf32>
    %437 = arith.mulf %436, %403 : vector<8x128xf32>
    %438 = math.tanh %437 : vector<8x128xf32>
    %cst_210 = arith.constant 1.000000e+00 : f32
    %439 = vector.broadcast %cst_210 : f32 to vector<8x128xf32>
    %440 = arith.addf %438, %439 : vector<8x128xf32>
    %cst_211 = arith.constant 5.000000e-01 : f32
    %441 = vector.broadcast %cst_211 : f32 to vector<8x128xf32>
    %442 = arith.mulf %441, %440 : vector<8x128xf32>
    %443 = math.tanh %435 : vector<8x128xf32>
    %444 = arith.mulf %442, %443 : vector<8x128xf32>
    %c0_212 = arith.constant 0 : index
    %c0_213 = arith.constant 0 : index
    %445 = vector.load %arg12[%c0_212, %c0_213] : memref<8x128xf32, #tpu.memory_space<vmem>>, vector<8x128xf32>
    tpu.vector_store %arg12[%c0_212, %c0_213], %435 {strides = array<i32>} : memref<8x128xf32, #tpu.memory_space<vmem>>, vector<8x128xf32>,
    %c0_214 = arith.constant 0 : index
    %c128_215 = arith.constant 128 : index
    %446 = vector.load %arg11[%c0_214, %c128_215] : memref<8x256xf32, #tpu.memory_space<vmem>>, vector<8x128xf32>
    tpu.vector_store %arg11[%c0_214, %c128_215], %444 {strides = array<i32>} : memref<8x256xf32, #tpu.memory_space<vmem>>, vector<8x128xf32>,
    %c0_216 = arith.constant 0 : index
    %c768_217 = arith.constant 768 : index
    %447 = vector.load %arg9[%c0_216, %c768_217] : memref<8x1024xf32, #tpu.memory_space<vmem>>, vector<8x128xf32>
    tpu.vector_store %arg9[%c0_216, %c768_217], %444 {strides = array<i32>} : memref<8x1024xf32, #tpu.memory_space<vmem>>, vector<8x128xf32>,
    %c0_218 = arith.constant 0 : index
    %c768_219 = arith.constant 768 : index
    %448 = vector.load %arg10[%c0_218, %c768_219] : memref<8x1024xf32, #tpu.memory_space<vmem>>, vector<8x128xf32>
    tpu.vector_store %arg10[%c0_218, %c768_219], %435 {strides = array<i32>} : memref<8x1024xf32, #tpu.memory_space<vmem>>, vector<8x128xf32>,
    %c0_220 = arith.constant 0 : index
    %c896 = arith.constant 896 : index
    %449 = vector.load %arg2[%c0_220, %c896] : memref<8x1024xf32, #tpu.memory_space<vmem>>, vector<8x128xf32>
    %c0_221 = arith.constant 0 : index
    %c0_222 = arith.constant 0 : index
    %450 = vector.load %arg11[%c0_221, %c0_222] : memref<8x256xf32, #tpu.memory_space<vmem>>, vector<8x128xf32>
    tpu.vector_store %arg11[%c0_221, %c0_222], %449 {strides = array<i32>} : memref<8x256xf32, #tpu.memory_space<vmem>>, vector<8x128xf32>,
    %c0_223 = arith.constant 0 : index
    %c896_224 = arith.constant 896 : index
    %451 = vector.load %arg3[%c0_223, %c896_224] : memref<8x1024xf32, #tpu.memory_space<vmem>>, vector<8x128xf32>
    %c0_225 = arith.constant 0 : index
    %c0_226 = arith.constant 0 : index
    %452 = vector.load %arg12[%c0_225, %c0_226] : memref<8x128xf32, #tpu.memory_space<vmem>>, vector<8x128xf32>
    %c0_227 = arith.constant 0 : index
    %c0_228 = arith.constant 0 : index
    %453 = vector.load %arg11[%c0_227, %c0_228] : memref<8x256xf32, #tpu.memory_space<vmem>>, vector<8x256xf32>
    %cst_229 = arith.constant dense<0.000000e+00> : vector<8x512xf32>
    %454 = tpu.matmul %453, %21, %cst_229 {dimension_numbers = #tpu.dot_dimension_numbers<[1], [0], [0], [1], [0, 0, 1, 1], [], []>} : vector<8x256xf32>, vector<256x512xf32>, vector<8x512xf32> -> vector<8x512xf32>
    %455 = arith.addf %454, %5 : vector<8x512xf32>
    %456 = vector.extract_strided_slice %455 {offsets = [0, 0], sizes = [8, 128], strides = [1, 1]} : vector<8x512xf32> to vector<8x128xf32>
    %457 = arith.mulf %8, %452 : vector<8x128xf32>
    %458 = arith.addf %456, %457 : vector<8x128xf32>
    %459 = vector.extract_strided_slice %455 {offsets = [0, 128], sizes = [8, 128], strides = [1, 1]} : vector<8x512xf32> to vector<8x128xf32>
    %460 = arith.mulf %11, %452 : vector<8x128xf32>
    %461 = arith.addf %459, %460 : vector<8x128xf32>
    %462 = vector.extract_strided_slice %455 {offsets = [0, 256], sizes = [8, 128], strides = [1, 1]} : vector<8x512xf32> to vector<8x128xf32>
    %463 = arith.mulf %14, %452 : vector<8x128xf32>
    %464 = arith.addf %461, %463 : vector<8x128xf32>
    %465 = vector.extract_strided_slice %455 {offsets = [0, 384], sizes = [8, 128], strides = [1, 1]} : vector<8x512xf32> to vector<8x128xf32>
    %466 = arith.mulf %17, %452 : vector<8x128xf32>
    %467 = arith.addf %465, %466 : vector<8x128xf32>
    %468 = arith.mulf %20, %451 : vector<8x128xf32>
    %469 = arith.addf %467, %468 : vector<8x128xf32>
    %cst_230 = arith.constant 5.000000e-01 : f32
    %470 = vector.broadcast %cst_230 : f32 to vector<8x128xf32>
    %471 = arith.mulf %470, %469 : vector<8x128xf32>
    %472 = math.tanh %471 : vector<8x128xf32>
    %cst_231 = arith.constant 1.000000e+00 : f32
    %473 = vector.broadcast %cst_231 : f32 to vector<8x128xf32>
    %474 = arith.addf %472, %473 : vector<8x128xf32>
    %cst_232 = arith.constant 5.000000e-01 : f32
    %475 = vector.broadcast %cst_232 : f32 to vector<8x128xf32>
    %476 = arith.mulf %475, %474 : vector<8x128xf32>
    %477 = arith.mulf %476, %451 : vector<8x128xf32>
    %cst_233 = arith.constant 5.000000e-01 : f32
    %478 = vector.broadcast %cst_233 : f32 to vector<8x128xf32>
    %479 = arith.mulf %478, %461 : vector<8x128xf32>
    %480 = math.tanh %479 : vector<8x128xf32>
    %cst_234 = arith.constant 1.000000e+00 : f32
    %481 = vector.broadcast %cst_234 : f32 to vector<8x128xf32>
    %482 = arith.addf %480, %481 : vector<8x128xf32>
    %cst_235 = arith.constant 5.000000e-01 : f32
    %483 = vector.broadcast %cst_235 : f32 to vector<8x128xf32>
    %484 = arith.mulf %483, %482 : vector<8x128xf32>
    %485 = arith.mulf %484, %452 : vector<8x128xf32>
    %486 = arith.addf %477, %485 : vector<8x128xf32>
    %cst_236 = arith.constant 5.000000e-01 : f32
    %487 = vector.broadcast %cst_236 : f32 to vector<8x128xf32>
    %488 = arith.mulf %487, %458 : vector<8x128xf32>
    %489 = math.tanh %488 : vector<8x128xf32>
    %cst_237 = arith.constant 1.000000e+00 : f32
    %490 = vector.broadcast %cst_237 : f32 to vector<8x128xf32>
    %491 = arith.addf %489, %490 : vector<8x128xf32>
    %cst_238 = arith.constant 5.000000e-01 : f32
    %492 = vector.broadcast %cst_238 : f32 to vector<8x128xf32>
    %493 = arith.mulf %492, %491 : vector<8x128xf32>
    %494 = math.tanh %462 : vector<8x128xf32>
    %495 = arith.mulf %493, %494 : vector<8x128xf32>
    %496 = arith.addf %486, %495 : vector<8x128xf32>
    %cst_239 = arith.constant 5.000000e-01 : f32
    %497 = vector.broadcast %cst_239 : f32 to vector<8x128xf32>
    %498 = arith.mulf %497, %464 : vector<8x128xf32>
    %499 = math.tanh %498 : vector<8x128xf32>
    %cst_240 = arith.constant 1.000000e+00 : f32
    %500 = vector.broadcast %cst_240 : f32 to vector<8x128xf32>
    %501 = arith.addf %499, %500 : vector<8x128xf32>
    %cst_241 = arith.constant 5.000000e-01 : f32
    %502 = vector.broadcast %cst_241 : f32 to vector<8x128xf32>
    %503 = arith.mulf %502, %501 : vector<8x128xf32>
    %504 = math.tanh %496 : vector<8x128xf32>
    %505 = arith.mulf %503, %504 : vector<8x128xf32>
    %c0_242 = arith.constant 0 : index
    %c0_243 = arith.constant 0 : index
    %506 = vector.load %arg12[%c0_242, %c0_243] : memref<8x128xf32, #tpu.memory_space<vmem>>, vector<8x128xf32>
    tpu.vector_store %arg12[%c0_242, %c0_243], %496 {strides = array<i32>} : memref<8x128xf32, #tpu.memory_space<vmem>>, vector<8x128xf32>,
    %c0_244 = arith.constant 0 : index
    %c128_245 = arith.constant 128 : index
    %507 = vector.load %arg11[%c0_244, %c128_245] : memref<8x256xf32, #tpu.memory_space<vmem>>, vector<8x128xf32>
    tpu.vector_store %arg11[%c0_244, %c128_245], %505 {strides = array<i32>} : memref<8x256xf32, #tpu.memory_space<vmem>>, vector<8x128xf32>,
    %c0_246 = arith.constant 0 : index
    %c896_247 = arith.constant 896 : index
    %508 = vector.load %arg9[%c0_246, %c896_247] : memref<8x1024xf32, #tpu.memory_space<vmem>>, vector<8x128xf32>
    tpu.vector_store %arg9[%c0_246, %c896_247], %505 {strides = array<i32>} : memref<8x1024xf32, #tpu.memory_space<vmem>>, vector<8x128xf32>,
    %c0_248 = arith.constant 0 : index
    %c896_249 = arith.constant 896 : index
    %509 = vector.load %arg10[%c0_248, %c896_249] : memref<8x1024xf32, #tpu.memory_space<vmem>>, vector<8x128xf32>
    tpu.vector_store %arg10[%c0_248, %c896_249], %496 {strides = array<i32>} : memref<8x1024xf32, #tpu.memory_space<vmem>>, vector<8x128xf32>,
    return
  }
  func.func @transform_0(%arg0: i32, %arg1: i32) -> (i32, i32) {
    %c0_i32 = arith.constant 0 : i32
    return %arg0, %arg1 : i32, i32
  }
  func.func @transform_1(%arg0: i32, %arg1: i32) -> (i32, i32) {
    %c0_i32 = arith.constant 0 : i32
    return %arg0, %arg1 : i32, i32
  }
  func.func @transform_2(%arg0: i32, %arg1: i32) -> (i32, i32) {
    %c0_i32 = arith.constant 0 : i32
    %c0_i32_0 = arith.constant 0 : i32
    return %arg0, %c0_i32 : i32, i32
  }
  func.func @transform_3(%arg0: i32, %arg1: i32) -> (i32, i32) {
    %c0_i32 = arith.constant 0 : i32
    %c0_i32_0 = arith.constant 0 : i32
    return %arg0, %c0_i32 : i32, i32
  }
  func.func @transform_4(%arg0: i32, %arg1: i32) -> (i32, i32) {
    %c0_i32 = arith.constant 0 : i32
    %c0_i32_0 = arith.constant 0 : i32
    %c0_i32_1 = arith.constant 0 : i32
    return %c0_i32, %c0_i32_0 : i32, i32
  }
  func.func @transform_5(%arg0: i32, %arg1: i32) -> (i32, i32) {
    %c0_i32 = arith.constant 0 : i32
    %c0_i32_0 = arith.constant 0 : i32
    %c0_i32_1 = arith.constant 0 : i32
    return %c0_i32, %c0_i32_0 : i32, i32
  }
  func.func @transform_6(%arg0: i32, %arg1: i32) -> (i32, i32) {
    %c0_i32 = arith.constant 0 : i32
    %c0_i32_0 = arith.constant 0 : i32
    %c0_i32_1 = arith.constant 0 : i32
    return %c0_i32, %c0_i32_0 : i32, i32
  }
  func.func @transform_7(%arg0: i32, %arg1: i32) -> (i32, i32) {
    %c0_i32 = arith.constant 0 : i32
    return %arg0, %arg1 : i32, i32
  }
  func.func @transform_8(%arg0: i32, %arg1: i32) -> (i32, i32) {
    %c0_i32 = arith.constant 0 : i32
    return %arg0, %arg1 : i32, i32
  }
}

</mosaic_0001>

<llo_original>
// kernel: tpu_custom_call.1
$region0: #{tpu_custom_call.1}
  #allocation0 [shape = 'u32[]', space=smem, size = 0x4, offset = 0x4, fixed_abs, tag = 'smem constant byte address 0x4 - core index']
  #allocation1 [shape = 'u32[144,128]{1,0:T(1,128)}', space=vmem, size = 0x12000, scoped, tag = 'internal scratch']
  #allocation2 [shape = 'f32[8,256]{1,0:T(8,128)}', space=vmem, size = 0x2000, scoped, tag = 'scratch operand']
  #allocation3 [shape = 'f32[8,128]{1,0:T(8,128)}', space=vmem, size = 0x1000, scoped, tag = 'scratch operand']
  %s0 = inlined_call_operand.hbm [shape: f32[8,1024], index: 0, kind: input, shape index: {}]
  %s1 = inlined_call_operand.hbm [shape: f32[8,1024], index: 1, kind: input, shape index: {}]
  %s2 = inlined_call_operand.hbm [shape: f32[8,128], index: 2, kind: input, shape index: {}]
  %s3 = inlined_call_operand.vmem [shape: f32[8,128], index: 3, kind: input, shape index: {}]
  %s4 = inlined_call_operand.hbm [shape: f32[256,512], index: 4, kind: input, shape index: {}]
  %s5 = inlined_call_operand.hbm [shape: f32[1,512], index: 5, kind: input, shape index: {}]
  %s6 = inlined_call_operand.vmem [shape: f32[8,128], index: 6, kind: input, shape index: {}]
  %s7 = inlined_call_operand.hbm [shape: f32[8,1024], index: 7, kind: output, shape index: {0}]
  %s8 = inlined_call_operand.hbm [shape: f32[8,1024], index: 8, kind: output, shape index: {1}]
  %9 = xla_tuple %s7, %s8
  %s10 = sld [smem:[#allocation0]]
  $region70: #{tpu_custom_call.1} parent=0
    _
  %s12 = ssub.s32 1, %s10
  %s13 = scalar_select 0, %s12, %s10
  $region1: #{tpu_custom_call.1} parent=0
    #allocation4 [shape = 'u8[32768]{0}', space=vmem, size = 0x8000, scoped, tag = 'input window, operand 0, single buffered']
    #allocation5 [shape = 's32[1]{0}', space=sflag, size = 0x4, scoped, tag = 'scoped memory for tpu_custom_call.1']
    #allocation6 [shape = 's32[1]{0}', space=sflag, size = 0x4, scoped, tag = 'scoped memory for tpu_custom_call.1']
    #allocation7 [shape = 'u8[32768]{0}', space=vmem, size = 0x8000, scoped, tag = 'input window, operand 1, single buffered']
    #allocation8 [shape = 's32[1]{0}', space=sflag, size = 0x4, scoped, tag = 'scoped memory for tpu_custom_call.1']
    #allocation9 [shape = 'u8[4096]{0}', space=vmem, size = 0x1000, scoped, tag = 'input window, operand 2, single buffered']
    #allocation10 [shape = 'u8[524288]{0}', space=vmem, size = 0x80000, scoped, tag = 'input window, operand 4, single buffered']
    #allocation11 [shape = 's32[1]{0}', space=sflag, size = 0x4, scoped, tag = 'scoped memory for tpu_custom_call.1']
    #allocation12 [shape = 'u8[2048]{0}', space=vmem, size = 0x800, scoped, tag = 'input window, operand 5, single buffered']
    #allocation13 [shape = 'u8[32768]{0}', space=vmem, size = 0x8000, scoped, tag = 'output window, operand 0, single buffered']
    #allocation14 [shape = 'u8[32768]{0}', space=vmem, size = 0x8000, scoped, tag = 'output window, operand 1, single buffered']
    #allocation15 [shape = 's32[1]{0}', space=sflag, size = 0x4, scoped, tag = 'scoped memory for tpu_custom_call.1']
    %14 = vsyncpa [#allocation5], 0
    %15 = vsyncpa [#allocation8], 0
    %16 = vsyncpa [#allocation11], 0
    %17 = vsyncpa [#allocation6], 0
    %18 = vsyncpa [#allocation15], 0
    // Predicated region
    $region2: #{tpu_custom_call.1} parent=1 // pred_check
      _
    $region3: #{tpu_custom_call.1} parent=1 // pred_check_branch
      %20 = sbr.rel (0) target = $region5
    $region4: #{tpu_custom_call.1} parent=1 // pred_region
      %s22 = ssub.s32 1024, 1024
      %23 = vsyncadd [#allocation5], %s22
      %s25 = sshll.u32 [#allocation4], 4
      %s26 = int_to_ptr.vmem [resolvable:$true] %s25
      %28 = dma.hbm_to_vmem [thread:$0]  %s0, 1024, %s26, [#allocation5]
    $region5: #{tpu_custom_call.1} parent=1 // pred_fallthru
      _
    // Predicated region
    $region6: #{tpu_custom_call.1} parent=1 // pred_check
      _
    $region7: #{tpu_custom_call.1} parent=1 // pred_check_branch
      %30 = sbr.rel (0) target = $region9
    $region8: #{tpu_custom_call.1} parent=1 // pred_region
      %s32 = ssub.s32 1024, 1024
      %33 = vsyncadd [#allocation8], %s32
      %s35 = sshll.u32 [#allocation7], 4
      %s36 = int_to_ptr.vmem [resolvable:$true] %s35
      %38 = dma.hbm_to_vmem [thread:$0]  %s1, 1024, %s36, [#allocation8]
    $region9: #{tpu_custom_call.1} parent=1 // pred_fallthru
      _
    // Predicated region
    $region10: #{tpu_custom_call.1} parent=1 // pred_check
      _
    $region11: #{tpu_custom_call.1} parent=1 // pred_check_branch
      %40 = sbr.rel (0) target = $region13
    $region12: #{tpu_custom_call.1} parent=1 // pred_region
      %s42 = ssub.s32 128, 128
      %43 = vsyncadd [#allocation8], %s42
      %s45 = sshll.u32 [#allocation9], 4
      %s46 = int_to_ptr.vmem [resolvable:$true] %s45
      %48 = dma.hbm_to_vmem [thread:$0]  %s2, 128, %s46, [#allocation8]
    $region13: #{tpu_custom_call.1} parent=1 // pred_fallthru
      _
    // Predicated region
    $region14: #{tpu_custom_call.1} parent=1 // pred_check
      _
    $region15: #{tpu_custom_call.1} parent=1 // pred_check_branch
      %50 = sbr.rel (0) target = $region17
    $region16: #{tpu_custom_call.1} parent=1 // pred_region
      _
    $region17: #{tpu_custom_call.1} parent=1 // pred_fallthru
      _
    // Predicated region
    $region18: #{tpu_custom_call.1} parent=1 // pred_check
      _
    $region19: #{tpu_custom_call.1} parent=1 // pred_check_branch
      %52 = sbr.rel (0) target = $region21
    $region20: #{tpu_custom_call.1} parent=1 // pred_region
      %s54 = ssub.s32 16384, 16384
      %55 = vsyncadd [#allocation11], %s54
      %s56 = sshll.u32 [#allocation10], 4
      %s57 = int_to_ptr.vmem [resolvable:$true] %s56
      %62 = dma.hbm_to_vmem [thread:$0]  %s4, 16384, %s57, [#allocation11], 512, 512, 32
    $region21: #{tpu_custom_call.1} parent=1 // pred_fallthru
      _
    // Predicated region
    $region22: #{tpu_custom_call.1} parent=1 // pred_check
      _
    $region23: #{tpu_custom_call.1} parent=1 // pred_check_branch
      %64 = sbr.rel (0) target = $region25
    $region24: #{tpu_custom_call.1} parent=1 // pred_region
      %s66 = ssub.s32 64, 64
      %67 = vsyncadd [#allocation11], %s66
      %s69 = sshll.u32 [#allocation12], 4
      %s70 = int_to_ptr.vmem [resolvable:$true] %s69
      %72 = dma.hbm_to_vmem [thread:$0]  %s5, 64, %s70, [#allocation11]
    $region25: #{tpu_custom_call.1} parent=1 // pred_fallthru
      _
    // Predicated region
    $region26: #{tpu_custom_call.1} parent=1 // pred_check
      _
    $region27: #{tpu_custom_call.1} parent=1 // pred_check_branch
      %74 = sbr.rel (0) target = $region29
    $region28: #{tpu_custom_call.1} parent=1 // pred_region
      _
    $region29: #{tpu_custom_call.1} parent=1 // pred_fallthru
      _
    // Predicated region
    $region30: #{tpu_custom_call.1} parent=1 // pred_check
      _
    $region31: #{tpu_custom_call.1} parent=1 // pred_check_branch
      %76 = sbr.rel (0) target = $region33
    $region32: #{tpu_custom_call.1} parent=1 // pred_region
      %77 = dma.done [#allocation5], 1024
    $region33: #{tpu_custom_call.1} parent=1 // pred_fallthru
      _
    // Predicated region
    $region34: #{tpu_custom_call.1} parent=1 // pred_check
      _
    $region35: #{tpu_custom_call.1} parent=1 // pred_check_branch
      %79 = sbr.rel (0) target = $region37
    $region36: #{tpu_custom_call.1} parent=1 // pred_region
      %80 = dma.done [#allocation8], 1024
    $region37: #{tpu_custom_call.1} parent=1 // pred_fallthru
      _
    // Predicated region
    $region38: #{tpu_custom_call.1} parent=1 // pred_check
      _
    $region39: #{tpu_custom_call.1} parent=1 // pred_check_branch
      %82 = sbr.rel (0) target = $region41
    $region40: #{tpu_custom_call.1} parent=1 // pred_region
      %83 = dma.done [#allocation8], 128
    $region41: #{tpu_custom_call.1} parent=1 // pred_fallthru
      _
    // Predicated region
    $region42: #{tpu_custom_call.1} parent=1 // pred_check
      _
    $region43: #{tpu_custom_call.1} parent=1 // pred_check_branch
      %85 = sbr.rel (0) target = $region45
    $region44: #{tpu_custom_call.1} parent=1 // pred_region
      %86 = dma.done [#allocation11], 16384
    $region45: #{tpu_custom_call.1} parent=1 // pred_fallthru
      _
    // Predicated region
    $region46: #{tpu_custom_call.1} parent=1 // pred_check
      _
    $region47: #{tpu_custom_call.1} parent=1 // pred_check_branch
      %88 = sbr.rel (0) target = $region49
    $region48: #{tpu_custom_call.1} parent=1 // pred_region
      %89 = dma.done [#allocation11], 64
    $region49: #{tpu_custom_call.1} parent=1 // pred_fallthru
      _
    %p90 = scmp.eq.s32.totalorder 0, 0
    // Predicated region
    $region50: #{tpu_custom_call.1} parent=1 // pred_check
      %p91 = pneg %p90
    $region51: #{tpu_custom_call.1} parent=1 // pred_check_branch
      %93 = sbr.rel (%p91) target = $region53
    $region52: #{tpu_custom_call.1} parent=1 // pred_region
      %v94 = vld [vmem:[#allocation9] sm:$0xff]
      %95 = vst [vmem:[#allocation2 + $0x8] sm:$0xff] %v94
      %v96 = vld [vmem:[%s3] sm:$0xff]
      %97 = vst [vmem:[#allocation3] sm:$0xff] %v96
    $region53: #{tpu_custom_call.1} parent=1 // pred_fallthru
      _
    %v98 = vld [vmem:[#allocation12] sm:$0xf]
    %v100 = vlaneseq
    %v101 = vshrl.u32 %v100, 7
    %v102 = vsub.s32 0, %v101
    %v103 = vrot.slane %v98, %v102
    %v104 = vlaneseq
    %v105 = vshrl.u32 %v104, 7
    %v106 = vsub.s32 1, %v105
    %v107 = vrot.slane %v98, %v106
    %v108 = vlaneseq
    %v109 = vshrl.u32 %v108, 7
    %v110 = vsub.s32 2, %v109
    %v111 = vrot.slane %v98, %v110
    %v112 = vlaneseq
    %v113 = vshrl.u32 %v112, 7
    %v114 = vsub.s32 3, %v113
    %v115 = vrot.slane %v98, %v114
    %v120 = vld [vmem:[%s6] sm:$0x1]
    %v121 = vlaneseq
    %v122 = vshrl.u32 %v121, 7
    %v123 = vsub.s32 0, %v122
    %v124 = vrot.slane %v120, %v123
    %v125 = vld [vmem:[%s6 + $0x1] sm:$0x1]
    %v126 = vlaneseq
    %v127 = vshrl.u32 %v126, 7
    %v128 = vsub.s32 0, %v127
    %v129 = vrot.slane %v125, %v128
    %v130 = vld [vmem:[%s6 + $0x2] sm:$0x1]
    %v131 = vlaneseq
    %v132 = vshrl.u32 %v131, 7
    %v133 = vsub.s32 0, %v132
    %v134 = vrot.slane %v130, %v133
    %v135 = vld [vmem:[%s6 + $0x3] sm:$0x1]
    %v136 = vlaneseq
    %v137 = vshrl.u32 %v136, 7
    %v138 = vsub.s32 0, %v137
    %v139 = vrot.slane %v135, %v138
    %v140 = vld [vmem:[%s6 + $0x4] sm:$0x1]
    %v141 = vlaneseq
    %v142 = vshrl.u32 %v141, 7
    %v143 = vsub.s32 0, %v142
    %v144 = vrot.slane %v140, %v143
    %v145 = vld [vmem:[#allocation10] sm:$0xff]
    %v146 = vld [vmem:[#allocation10 + $0x8] sm:$0xff]
    %v147 = vld [vmem:[#allocation10 + $0x10] sm:$0xff]
    %v148 = vld [vmem:[#allocation10 + $0x18] sm:$0xff]
    %v149 = vld [vmem:[#allocation10 + $0x20] sm:$0xff]
    %v150 = vld [vmem:[#allocation10 + $0x28] sm:$0xff]
    %v151 = vld [vmem:[#allocation10 + $0x30] sm:$0xff]
    %v152 = vld [vmem:[#allocation10 + $0x38] sm:$0xff]
    %v153 = vld [vmem:[#allocation10 + $0x40] sm:$0xff]
    %v154 = vld [vmem:[#allocation10 + $0x48] sm:$0xff]
    %v155 = vld [vmem:[#allocation10 + $0x50] sm:$0xff]
    %v156 = vld [vmem:[#allocation10 + $0x58] sm:$0xff]
    %v157 = vld [vmem:[#allocation10 + $0x60] sm:$0xff]
    %v158 = vld [vmem:[#allocation10 + $0x68] sm:$0xff]
    %v159 = vld [vmem:[#allocation10 + $0x70] sm:$0xff]
    %v160 = vld [vmem:[#allocation10 + $0x78] sm:$0xff]
    %v161 = vld [vmem:[#allocation10 + $0x80] sm:$0xff]
    %v162 = vld [vmem:[#allocation10 + $0x88] sm:$0xff]
    %v163 = vld [vmem:[#allocation10 + $0x90] sm:$0xff]
    %v164 = vld [vmem:[#allocation10 + $0x98] sm:$0xff]
    %v165 = vld [vmem:[#allocation10 + $0xa0] sm:$0xff]
    %v166 = vld [vmem:[#allocation10 + $0xa8] sm:$0xff]
    %v167 = vld [vmem:[#allocation10 + $0xb0] sm:$0xff]
    %v168 = vld [vmem:[#allocation10 + $0xb8] sm:$0xff]
    %v169 = vld [vmem:[#allocation10 + $0xc0] sm:$0xff]
    %v170 = vld [vmem:[#allocation10 + $0xc8] sm:$0xff]
    %v171 = vld [vmem:[#allocation10 + $0xd0] sm:$0xff]
    %v172 = vld [vmem:[#allocation10 + $0xd8] sm:$0xff]
    %v173 = vld [vmem:[#allocation10 + $0xe0] sm:$0xff]
    %v174 = vld [vmem:[#allocation10 + $0xe8] sm:$0xff]
    %v175 = vld [vmem:[#allocation10 + $0xf0] sm:$0xff]
    %v176 = vld [vmem:[#allocation10 + $0xf8] sm:$0xff]
    %v177 = vld [vmem:[#allocation10 + $0x100] sm:$0xff]
    %v178 = vld [vmem:[#allocation10 + $0x108] sm:$0xff]
    %v179 = vld [vmem:[#allocation10 + $0x110] sm:$0xff]
    %v180 = vld [vmem:[#allocation10 + $0x118] sm:$0xff]
    %v181 = vld [vmem:[#allocation10 + $0x120] sm:$0xff]
    %v182 = vld [vmem:[#allocation10 + $0x128] sm:$0xff]
    %v183 = vld [vmem:[#allocation10 + $0x130] sm:$0xff]
    %v184 = vld [vmem:[#allocation10 + $0x138] sm:$0xff]
    %v185 = vld [vmem:[#allocation10 + $0x140] sm:$0xff]
    %v186 = vld [vmem:[#allocation10 + $0x148] sm:$0xff]
    %v187 = vld [vmem:[#allocation10 + $0x150] sm:$0xff]
    %v188 = vld [vmem:[#allocation10 + $0x158] sm:$0xff]
    %v189 = vld [vmem:[#allocation10 + $0x160] sm:$0xff]
    %v190 = vld [vmem:[#allocation10 + $0x168] sm:$0xff]
    %v191 = vld [vmem:[#allocation10 + $0x170] sm:$0xff]
    %v192 = vld [vmem:[#allocation10 + $0x178] sm:$0xff]
    %v193 = vld [vmem:[#allocation10 + $0x180] sm:$0xff]
    %v194 = vld [vmem:[#allocation10 + $0x188] sm:$0xff]
    %v195 = vld [vmem:[#allocation10 + $0x190] sm:$0xff]
    %v196 = vld [vmem:[#allocation10 + $0x198] sm:$0xff]
    %v197 = vld [vmem:[#allocation10 + $0x1a0] sm:$0xff]
    %v198 = vld [vmem:[#allocation10 + $0x1a8] sm:$0xff]
    %v199 = vld [vmem:[#allocation10 + $0x1b0] sm:$0xff]
    %v200 = vld [vmem:[#allocation10 + $0x1b8] sm:$0xff]
    %v201 = vld [vmem:[#allocation10 + $0x1c0] sm:$0xff]
    %v202 = vld [vmem:[#allocation10 + $0x1c8] sm:$0xff]
    %v203 = vld [vmem:[#allocation10 + $0x1d0] sm:$0xff]
    %v204 = vld [vmem:[#allocation10 + $0x1d8] sm:$0xff]
    %v205 = vld [vmem:[#allocation10 + $0x1e0] sm:$0xff]
    %v206 = vld [vmem:[#allocation10 + $0x1e8] sm:$0xff]
    %v207 = vld [vmem:[#allocation10 + $0x1f0] sm:$0xff]
    %v208 = vld [vmem:[#allocation10 + $0x1f8] sm:$0xff]
    %v209 = vld [vmem:[#allocation10 + $0x200] sm:$0xff]
    %v210 = vld [vmem:[#allocation10 + $0x208] sm:$0xff]
    %v211 = vld [vmem:[#allocation10 + $0x210] sm:$0xff]
    %v212 = vld [vmem:[#allocation10 + $0x218] sm:$0xff]
    %v213 = vld [vmem:[#allocation10 + $0x220] sm:$0xff]
    %v214 = vld [vmem:[#allocation10 + $0x228] sm:$0xff]
    %v215 = vld [vmem:[#allocation10 + $0x230] sm:$0xff]
    %v216 = vld [vmem:[#allocation10 + $0x238] sm:$0xff]
    %v217 = vld [vmem:[#allocation10 + $0x240] sm:$0xff]
    %v218 = vld [vmem:[#allocation10 + $0x248] sm:$0xff]
    %v219 = vld [vmem:[#allocation10 + $0x250] sm:$0xff]
    %v220 = vld [vmem:[#allocation10 + $0x258] sm:$0xff]
    %v221 = vld [vmem:[#allocation10 + $0x260] sm:$0xff]
    %v222 = vld [vmem:[#allocation10 + $0x268] sm:$0xff]
    %v223 = vld [vmem:[#allocation10 + $0x270] sm:$0xff]
    %v224 = vld [vmem:[#allocation10 + $0x278] sm:$0xff]
    %v225 = vld [vmem:[#allocation10 + $0x280] sm:$0xff]
    %v226 = vld [vmem:[#allocation10 + $0x288] sm:$0xff]
    %v227 = vld [vmem:[#allocation10 + $0x290] sm:$0xff]
    %v228 = vld [vmem:[#allocation10 + $0x298] sm:$0xff]
    %v229 = vld [vmem:[#allocation10 + $0x2a0] sm:$0xff]
    %v230 = vld [vmem:[#allocation10 + $0x2a8] sm:$0xff]
    %v231 = vld [vmem:[#allocation10 + $0x2b0] sm:$0xff]
    %v232 = vld [vmem:[#allocation10 + $0x2b8] sm:$0xff]
    %v233 = vld [vmem:[#allocation10 + $0x2c0] sm:$0xff]
    %v234 = vld [vmem:[#allocation10 + $0x2c8] sm:$0xff]
    %v235 = vld [vmem:[#allocation10 + $0x2d0] sm:$0xff]
    %v236 = vld [vmem:[#allocation10 + $0x2d8] sm:$0xff]
    %v237 = vld [vmem:[#allocation10 + $0x2e0] sm:$0xff]
    %v238 = vld [vmem:[#allocation10 + $0x2e8] sm:$0xff]
    %v239 = vld [vmem:[#allocation10 + $0x2f0] sm:$0xff]
    %v240 = vld [vmem:[#allocation10 + $0x2f8] sm:$0xff]
    %v241 = vld [vmem:[#allocation10 + $0x300] sm:$0xff]
    %v242 = vld [vmem:[#allocation10 + $0x308] sm:$0xff]
    %v243 = vld [vmem:[#allocation10 + $0x310] sm:$0xff]
    %v244 = vld [vmem:[#allocation10 + $0x318] sm:$0xff]
    %v245 = vld [vmem:[#allocation10 + $0x320] sm:$0xff]
    %v246 = vld [vmem:[#allocation10 + $0x328] sm:$0xff]
    %v247 = vld [vmem:[#allocation10 + $0x330] sm:$0xff]
    %v248 = vld [vmem:[#allocation10 + $0x338] sm:$0xff]
    %v249 = vld [vmem:[#allocation10 + $0x340] sm:$0xff]
    %v250 = vld [vmem:[#allocation10 + $0x348] sm:$0xff]
    %v251 = vld [vmem:[#allocation10 + $0x350] sm:$0xff]
    %v252 = vld [vmem:[#allocation10 + $0x358] sm:$0xff]
    %v253 = vld [vmem:[#allocation10 + $0x360] sm:$0xff]
    %v254 = vld [vmem:[#allocation10 + $0x368] sm:$0xff]
    %v255 = vld [vmem:[#allocation10 + $0x370] sm:$0xff]
    %v256 = vld [vmem:[#allocation10 + $0x378] sm:$0xff]
    %v257 = vld [vmem:[#allocation10 + $0x380] sm:$0xff]
    %v258 = vld [vmem:[#allocation10 + $0x388] sm:$0xff]
    %v259 = vld [vmem:[#allocation10 + $0x390] sm:$0xff]
    %v260 = vld [vmem:[#allocation10 + $0x398] sm:$0xff]
    %v261 = vld [vmem:[#allocation10 + $0x3a0] sm:$0xff]
    %v262 = vld [vmem:[#allocation10 + $0x3a8] sm:$0xff]
    %v263 = vld [vmem:[#allocation10 + $0x3b0] sm:$0xff]
    %v264 = vld [vmem:[#allocation10 + $0x3b8] sm:$0xff]
    %v265 = vld [vmem:[#allocation10 + $0x3c0] sm:$0xff]
    %v266 = vld [vmem:[#allocation10 + $0x3c8] sm:$0xff]
    %v267 = vld [vmem:[#allocation10 + $0x3d0] sm:$0xff]
    %v268 = vld [vmem:[#allocation10 + $0x3d8] sm:$0xff]
    %v269 = vld [vmem:[#allocation10 + $0x3e0] sm:$0xff]
    %v270 = vld [vmem:[#allocation10 + $0x3e8] sm:$0xff]
    %v271 = vld [vmem:[#allocation10 + $0x3f0] sm:$0xff]
    %v272 = vld [vmem:[#allocation10 + $0x3f8] sm:$0xff]
    %v273 = vld [vmem:[#allocation4] sm:$0xff]
    %274 = vst [vmem:[#allocation2] sm:$0xff] %v273
    %v275 = vld [vmem:[#allocation7] sm:$0xff]
    %v276 = vld [vmem:[#allocation3] sm:$0xff]
    %v277 = vld [vmem:[#allocation2] sm:$0xff]
    %v278 = vld [vmem:[#allocation2 + $0x8] sm:$0xff]
    %279 = vmatprep.subr.mxu0 %v146
    %280 = vmatpush1.msra.mxu0 %v145
    %281 = vmatprep.subr.mxu0 %v150
    %282 = vmatpush1.msra.mxu0 %v149
    %283 = vmatprep.subr.mxu0 %v154
    %284 = vmatpush1.msra.mxu0 %v153
    %285 = vmatprep.subr.mxu0 %v158
    %286 = vmatpush1.msra.mxu0 %v157
    %287 = vmatprep.subr.mxu0 %v162
    %288 = vmatpush1.msra.mxu0 %v161
    %289 = vmatprep.subr.mxu0 %v166
    %290 = vmatpush1.msra.mxu0 %v165
    %291 = vmatprep.subr.mxu0 %v170
    %292 = vmatpush1.msra.mxu0 %v169
    %293 = vmatprep.subr.mxu0 %v174
    %294 = vmatpush1.msra.mxu0 %v173
    %295 = vmatprep.subr.mxu0 %v178
    %296 = vmatpush1.msra.mxu0 %v177
    %297 = vmatprep.subr.mxu0 %v182
    %298 = vmatpush1.msra.mxu0 %v181
    %299 = vmatprep.subr.mxu0 %v186
    %300 = vmatpush1.msra.mxu0 %v185
    %301 = vmatprep.subr.mxu0 %v190
    %302 = vmatpush1.msra.mxu0 %v189
    %303 = vmatprep.subr.mxu0 %v194
    %304 = vmatpush1.msra.mxu0 %v193
    %305 = vmatprep.subr.mxu0 %v198
    %306 = vmatpush1.msra.mxu0 %v197
    %307 = vmatprep.subr.mxu0 %v202
    %308 = vmatpush1.msra.mxu0 %v201
    %309 = vmatprep.subr.mxu0 %v206
    %310 = vmatpush1.msra.mxu0 %v205
    %311 = vmatprep.subr.mxu0 %v210
    %312 = vmatpush1.msra.mxu0 %v209
    %313 = vmatprep.subr.mxu0 %v214
    %314 = vmatpush1.msra.mxu0 %v213
    %315 = vmatprep.subr.mxu0 %v218
    %316 = vmatpush1.msra.mxu0 %v217
    %317 = vmatprep.subr.mxu0 %v222
    %318 = vmatpush1.msra.mxu0 %v221
    %319 = vmatprep.subr.mxu0 %v226
    %320 = vmatpush1.msra.mxu0 %v225
    %321 = vmatprep.subr.mxu0 %v230
    %322 = vmatpush1.msra.mxu0 %v229
    %323 = vmatprep.subr.mxu0 %v234
    %324 = vmatpush1.msra.mxu0 %v233
    %325 = vmatprep.subr.mxu0 %v238
    %326 = vmatpush1.msra.mxu0 %v237
    %327 = vmatprep.subr.mxu0 %v242
    %328 = vmatpush1.msra.mxu0 %v241
    %329 = vmatprep.subr.mxu0 %v246
    %330 = vmatpush1.msra.mxu0 %v245
    %331 = vmatprep.subr.mxu0 %v250
    %332 = vmatpush1.msra.mxu0 %v249
    %333 = vmatprep.subr.mxu0 %v254
    %334 = vmatpush1.msra.mxu0 %v253
    %335 = vmatprep.subr.mxu0 %v258
    %336 = vmatpush1.msra.mxu0 %v257
    %337 = vmatprep.subr.mxu0 %v262
    %338 = vmatpush1.msra.mxu0 %v261
    %339 = vmatprep.subr.mxu0 %v266
    %340 = vmatpush1.msra.mxu0 %v265
    %341 = vmatprep.subr.mxu0 %v270
    %342 = vmatpush1.msra.mxu0 %v269
    %343 = vmatprep.mubr.f32.mxu0 %v278
    %344 = vmatmul.mubr.f32.gmra.mrb[0].mxu0 %v277
    %v345 = vpop.f32.mrb[0].mxu0
    %v346 = vadd.f32 %v103, %v345
    %v347 = vpop.f32.mrb[0].mxu0
    %v348 = vadd.f32 %v107, %v347
    %349 = vdwg.mxu0
    %350 = vmatprep.subr.mxu0 %v148
    %351 = vmatpush1.msra.mxu0 %v147
    %352 = vmatprep.subr.mxu0 %v152
    %353 = vmatpush1.msra.mxu0 %v151
    %354 = vmatprep.subr.mxu0 %v156
    %355 = vmatpush1.msra.mxu0 %v155
    %356 = vmatprep.subr.mxu0 %v160
    %357 = vmatpush1.msra.mxu0 %v159
    %358 = vmatprep.subr.mxu0 %v164
    %359 = vmatpush1.msra.mxu0 %v163
    %360 = vmatprep.subr.mxu0 %v168
    %361 = vmatpush1.msra.mxu0 %v167
    %362 = vmatprep.subr.mxu0 %v172
    %363 = vmatpush1.msra.mxu0 %v171
    %364 = vmatprep.subr.mxu0 %v176
    %365 = vmatpush1.msra.mxu0 %v175
    %366 = vmatprep.subr.mxu0 %v180
    %367 = vmatpush1.msra.mxu0 %v179
    %368 = vmatprep.subr.mxu0 %v184
    %369 = vmatpush1.msra.mxu0 %v183
    %370 = vmatprep.subr.mxu0 %v188
    %371 = vmatpush1.msra.mxu0 %v187
    %372 = vmatprep.subr.mxu0 %v192
    %373 = vmatpush1.msra.mxu0 %v191
    %374 = vmatprep.subr.mxu0 %v196
    %375 = vmatpush1.msra.mxu0 %v195
    %376 = vmatprep.subr.mxu0 %v200
    %377 = vmatpush1.msra.mxu0 %v199
    %378 = vmatprep.subr.mxu0 %v204
    %379 = vmatpush1.msra.mxu0 %v203
    %380 = vmatprep.subr.mxu0 %v208
    %381 = vmatpush1.msra.mxu0 %v207
    %382 = vmatprep.subr.mxu0 %v212
    %383 = vmatpush1.msra.mxu0 %v211
    %384 = vmatprep.subr.mxu0 %v216
    %385 = vmatpush1.msra.mxu0 %v215
    %386 = vmatprep.subr.mxu0 %v220
    %387 = vmatpush1.msra.mxu0 %v219
    %388 = vmatprep.subr.mxu0 %v224
    %389 = vmatpush1.msra.mxu0 %v223
    %390 = vmatprep.subr.mxu0 %v228
    %391 = vmatpush1.msra.mxu0 %v227
    %392 = vmatprep.subr.mxu0 %v232
    %393 = vmatpush1.msra.mxu0 %v231
    %394 = vmatprep.subr.mxu0 %v236
    %395 = vmatpush1.msra.mxu0 %v235
    %396 = vmatprep.subr.mxu0 %v240
    %397 = vmatpush1.msra.mxu0 %v239
    %398 = vmatprep.subr.mxu0 %v244
    %399 = vmatpush1.msra.mxu0 %v243
    %400 = vmatprep.subr.mxu0 %v248
    %401 = vmatpush1.msra.mxu0 %v247
    %402 = vmatprep.subr.mxu0 %v252
    %403 = vmatpush1.msra.mxu0 %v251
    %404 = vmatprep.subr.mxu0 %v256
    %405 = vmatpush1.msra.mxu0 %v255
    %406 = vmatprep.subr.mxu0 %v260
    %407 = vmatpush1.msra.mxu0 %v259
    %408 = vmatprep.subr.mxu0 %v264
    %409 = vmatpush1.msra.mxu0 %v263
    %410 = vmatprep.subr.mxu0 %v268
    %411 = vmatpush1.msra.mxu0 %v267
    %412 = vmatprep.subr.mxu0 %v272
    %413 = vmatpush1.msra.mxu0 %v271
    %414 = vmatprep.mubr.f32.mxu0 %v278
    %415 = vmatmul.mubr.f32.gmra.mrb[0].mxu0 %v277
    %v416 = vpop.f32.mrb[0].mxu0
    %v417 = vadd.f32 %v111, %v416
    %v418 = vpop.f32.mrb[0].mxu0
    %v419 = vadd.f32 %v115, %v418
    %420 = vdwg.mxu0
    %v421 = vmul.f32 %v124, %v276
    %v422 = vadd.f32 %v346, %v421
    %v423 = vmul.f32 %v129, %v276
    %v424 = vadd.f32 %v348, %v423
    %v425 = vmul.f32 %v134, %v276
    %v426 = vadd.f32 %v424, %v425
    %v427 = vmul.f32 %v139, %v276
    %v428 = vadd.f32 %v419, %v427
    %v429 = vmul.f32 %v144, %v275
    %v430 = vadd.f32 %v428, %v429
    %v431 = vmul.f32 %v430, 0.5
    %v432 = vtanh.pop %v431
    %v433 = vadd.f32 %v432, 1.0
    %v434 = vmul.f32 %v433, 0.5
    %v435 = vmul.f32 %v434, %v275
    %v436 = vmul.f32 %v424, 0.5
    %v437 = vtanh.pop %v436
    %v438 = vadd.f32 %v437, 1.0
    %v439 = vmul.f32 %v438, 0.5
    %v440 = vmul.f32 %v439, %v276
    %v441 = vadd.f32 %v435, %v440
    %v442 = vmul.f32 %v422, 0.5
    %v443 = vtanh.pop %v442
    %v444 = vadd.f32 %v443, 1.0
    %v445 = vmul.f32 %v444, 0.5
    %v446 = vtanh.pop %v417
    %v447 = vmul.f32 %v445, %v446
    %v448 = vadd.f32 %v441, %v447
    %v449 = vmul.f32 %v426, 0.5
    %v450 = vtanh.pop %v449
    %v451 = vadd.f32 %v450, 1.0
    %v452 = vmul.f32 %v451, 0.5
    %v453 = vtanh.pop %v448
    %v454 = vmul.f32 %v452, %v453
    %455 = vst [vmem:[#allocation3] sm:$0xff] %v448
    %456 = vst [vmem:[#allocation2 + $0x8] sm:$0xff] %v454
    %457 = vst [vmem:[#allocation13] sm:$0xff] %v454
    %458 = vst [vmem:[#allocation14] sm:$0xff] %v448
    %v459 = vld [vmem:[#allocation4 + $0x8] sm:$0xff]
    %460 = vst [vmem:[#allocation2] sm:$0xff] %v459
    %v461 = vld [vmem:[#allocation7 + $0x8] sm:$0xff]
    %v462 = vld [vmem:[#allocation3] sm:$0xff]
    %v463 = vld [vmem:[#allocation2] sm:$0xff]
    %v464 = vld [vmem:[#allocation2 + $0x8] sm:$0xff]
    %465 = vmatprep.subr.mxu0 %v146
    %466 = vmatpush1.msra.mxu0 %v145
    %467 = vmatprep.subr.mxu0 %v150
    %468 = vmatpush1.msra.mxu0 %v149
    %469 = vmatprep.subr.mxu0 %v154
    %470 = vmatpush1.msra.mxu0 %v153
    %471 = vmatprep.subr.mxu0 %v158
    %472 = vmatpush1.msra.mxu0 %v157
    %473 = vmatprep.subr.mxu0 %v162
    %474 = vmatpush1.msra.mxu0 %v161
    %475 = vmatprep.subr.mxu0 %v166
    %476 = vmatpush1.msra.mxu0 %v165
    %477 = vmatprep.subr.mxu0 %v170
    %478 = vmatpush1.msra.mxu0 %v169
    %479 = vmatprep.subr.mxu0 %v174
    %480 = vmatpush1.msra.mxu0 %v173
    %481 = vmatprep.subr.mxu0 %v178
    %482 = vmatpush1.msra.mxu0 %v177
    %483 = vmatprep.subr.mxu0 %v182
    %484 = vmatpush1.msra.mxu0 %v181
    %485 = vmatprep.subr.mxu0 %v186
    %486 = vmatpush1.msra.mxu0 %v185
    %487 = vmatprep.subr.mxu0 %v190
    %488 = vmatpush1.msra.mxu0 %v189
    %489 = vmatprep.subr.mxu0 %v194
    %490 = vmatpush1.msra.mxu0 %v193
    %491 = vmatprep.subr.mxu0 %v198
    %492 = vmatpush1.msra.mxu0 %v197
    %493 = vmatprep.subr.mxu0 %v202
    %494 = vmatpush1.msra.mxu0 %v201
    %495 = vmatprep.subr.mxu0 %v206
    %496 = vmatpush1.msra.mxu0 %v205
    %497 = vmatprep.subr.mxu0 %v210
    %498 = vmatpush1.msra.mxu0 %v209
    %499 = vmatprep.subr.mxu0 %v214
    %500 = vmatpush1.msra.mxu0 %v213
    %501 = vmatprep.subr.mxu0 %v218
    %502 = vmatpush1.msra.mxu0 %v217
    %503 = vmatprep.subr.mxu0 %v222
    %504 = vmatpush1.msra.mxu0 %v221
    %505 = vmatprep.subr.mxu0 %v226
    %506 = vmatpush1.msra.mxu0 %v225
    %507 = vmatprep.subr.mxu0 %v230
    %508 = vmatpush1.msra.mxu0 %v229
    %509 = vmatprep.subr.mxu0 %v234
    %510 = vmatpush1.msra.mxu0 %v233
    %511 = vmatprep.subr.mxu0 %v238
    %512 = vmatpush1.msra.mxu0 %v237
    %513 = vmatprep.subr.mxu0 %v242
    %514 = vmatpush1.msra.mxu0 %v241
    %515 = vmatprep.subr.mxu0 %v246
    %516 = vmatpush1.msra.mxu0 %v245
    %517 = vmatprep.subr.mxu0 %v250
    %518 = vmatpush1.msra.mxu0 %v249
    %519 = vmatprep.subr.mxu0 %v254
    %520 = vmatpush1.msra.mxu0 %v253
    %521 = vmatprep.subr.mxu0 %v258
    %522 = vmatpush1.msra.mxu0 %v257
    %523 = vmatprep.subr.mxu0 %v262
    %524 = vmatpush1.msra.mxu0 %v261
    %525 = vmatprep.subr.mxu0 %v266
    %526 = vmatpush1.msra.mxu0 %v265
    %527 = vmatprep.subr.mxu0 %v270
    %528 = vmatpush1.msra.mxu0 %v269
    %529 = vmatprep.mubr.f32.mxu0 %v464
    %530 = vmatmul.mubr.f32.gmra.mrb[0].mxu0 %v463
    %v531 = vpop.f32.mrb[0].mxu0
    %v532 = vadd.f32 %v103, %v531
    %v533 = vpop.f32.mrb[0].mxu0
    %v534 = vadd.f32 %v107, %v533
    %535 = vdwg.mxu0
    %536 = vmatprep.subr.mxu0 %v148
    %537 = vmatpush1.msra.mxu0 %v147
    %538 = vmatprep.subr.mxu0 %v152
    %539 = vmatpush1.msra.mxu0 %v151
    %540 = vmatprep.subr.mxu0 %v156
    %541 = vmatpush1.msra.mxu0 %v155
    %542 = vmatprep.subr.mxu0 %v160
    %543 = vmatpush1.msra.mxu0 %v159
    %544 = vmatprep.subr.mxu0 %v164
    %545 = vmatpush1.msra.mxu0 %v163
    %546 = vmatprep.subr.mxu0 %v168
    %547 = vmatpush1.msra.mxu0 %v167
    %548 = vmatprep.subr.mxu0 %v172
    %549 = vmatpush1.msra.mxu0 %v171
    %550 = vmatprep.subr.mxu0 %v176
    %551 = vmatpush1.msra.mxu0 %v175
    %552 = vmatprep.subr.mxu0 %v180
    %553 = vmatpush1.msra.mxu0 %v179
    %554 = vmatprep.subr.mxu0 %v184
    %555 = vmatpush1.msra.mxu0 %v183
    %556 = vmatprep.subr.mxu0 %v188
    %557 = vmatpush1.msra.mxu0 %v187
    %558 = vmatprep.subr.mxu0 %v192
    %559 = vmatpush1.msra.mxu0 %v191
    %560 = vmatprep.subr.mxu0 %v196
    %561 = vmatpush1.msra.mxu0 %v195
    %562 = vmatprep.subr.mxu0 %v200
    %563 = vmatpush1.msra.mxu0 %v199
    %564 = vmatprep.subr.mxu0 %v204
    %565 = vmatpush1.msra.mxu0 %v203
    %566 = vmatprep.subr.mxu0 %v208
    %567 = vmatpush1.msra.mxu0 %v207
    %568 = vmatprep.subr.mxu0 %v212
    %569 = vmatpush1.msra.mxu0 %v211
    %570 = vmatprep.subr.mxu0 %v216
    %571 = vmatpush1.msra.mxu0 %v215
    %572 = vmatprep.subr.mxu0 %v220
    %573 = vmatpush1.msra.mxu0 %v219
    %574 = vmatprep.subr.mxu0 %v224
    %575 = vmatpush1.msra.mxu0 %v223
    %576 = vmatprep.subr.mxu0 %v228
    %577 = vmatpush1.msra.mxu0 %v227
    %578 = vmatprep.subr.mxu0 %v232
    %579 = vmatpush1.msra.mxu0 %v231
    %580 = vmatprep.subr.mxu0 %v236
    %581 = vmatpush1.msra.mxu0 %v235
    %582 = vmatprep.subr.mxu0 %v240
    %583 = vmatpush1.msra.mxu0 %v239
    %584 = vmatprep.subr.mxu0 %v244
    %585 = vmatpush1.msra.mxu0 %v243
    %586 = vmatprep.subr.mxu0 %v248
    %587 = vmatpush1.msra.mxu0 %v247
    %588 = vmatprep.subr.mxu0 %v252
    %589 = vmatpush1.msra.mxu0 %v251
    %590 = vmatprep.subr.mxu0 %v256
    %591 = vmatpush1.msra.mxu0 %v255
    %592 = vmatprep.subr.mxu0 %v260
    %593 = vmatpush1.msra.mxu0 %v259
    %594 = vmatprep.subr.mxu0 %v264
    %595 = vmatpush1.msra.mxu0 %v263
    %596 = vmatprep.subr.mxu0 %v268
    %597 = vmatpush1.msra.mxu0 %v267
    %598 = vmatprep.subr.mxu0 %v272
    %599 = vmatpush1.msra.mxu0 %v271
    %600 = vmatprep.mubr.f32.mxu0 %v464
    %601 = vmatmul.mubr.f32.gmra.mrb[0].mxu0 %v463
    %v602 = vpop.f32.mrb[0].mxu0
    %v603 = vadd.f32 %v111, %v602
    %v604 = vpop.f32.mrb[0].mxu0
    %v605 = vadd.f32 %v115, %v604
    %606 = vdwg.mxu0
    %v607 = vmul.f32 %v124, %v462
    %v608 = vadd.f32 %v532, %v607
    %v609 = vmul.f32 %v129, %v462
    %v610 = vadd.f32 %v534, %v609
    %v611 = vmul.f32 %v134, %v462
    %v612 = vadd.f32 %v610, %v611
    %v613 = vmul.f32 %v139, %v462
    %v614 = vadd.f32 %v605, %v613
    %v615 = vmul.f32 %v144, %v461
    %v616 = vadd.f32 %v614, %v615
    %v617 = vmul.f32 %v616, 0.5
    %v618 = vtanh.pop %v617
    %v619 = vadd.f32 %v618, 1.0
    %v620 = vmul.f32 %v619, 0.5
    %v621 = vmul.f32 %v620, %v461
    %v622 = vmul.f32 %v610, 0.5
    %v623 = vtanh.pop %v622
    %v624 = vadd.f32 %v623, 1.0
    %v625 = vmul.f32 %v624, 0.5
    %v626 = vmul.f32 %v625, %v462
    %v627 = vadd.f32 %v621, %v626
    %v628 = vmul.f32 %v608, 0.5
    %v629 = vtanh.pop %v628
    %v630 = vadd.f32 %v629, 1.0
    %v631 = vmul.f32 %v630, 0.5
    %v632 = vtanh.pop %v603
    %v633 = vmul.f32 %v631, %v632
    %v634 = vadd.f32 %v627, %v633
    %v635 = vmul.f32 %v612, 0.5
    %v636 = vtanh.pop %v635
    %v637 = vadd.f32 %v636, 1.0
    %v638 = vmul.f32 %v637, 0.5
    %v639 = vtanh.pop %v634
    %v640 = vmul.f32 %v638, %v639
    %641 = vst [vmem:[#allocation3] sm:$0xff] %v634
    %642 = vst [vmem:[#allocation2 + $0x8] sm:$0xff] %v640
    %643 = vst [vmem:[#allocation13 + $0x8] sm:$0xff] %v640
    %644 = vst [vmem:[#allocation14 + $0x8] sm:$0xff] %v634
    %v645 = vld [vmem:[#allocation4 + $0x10] sm:$0xff]
    %646 = vst [vmem:[#allocation2] sm:$0xff] %v645
    %v647 = vld [vmem:[#allocation7 + $0x10] sm:$0xff]
    %v648 = vld [vmem:[#allocation3] sm:$0xff]
    %v649 = vld [vmem:[#allocation2] sm:$0xff]
    %v650 = vld [vmem:[#allocation2 + $0x8] sm:$0xff]
    %651 = vmatprep.subr.mxu0 %v146
    %652 = vmatpush1.msra.mxu0 %v145
    %653 = vmatprep.subr.mxu0 %v150
    %654 = vmatpush1.msra.mxu0 %v149
    %655 = vmatprep.subr.mxu0 %v154
    %656 = vmatpush1.msra.mxu0 %v153
    %657 = vmatprep.subr.mxu0 %v158
    %658 = vmatpush1.msra.mxu0 %v157
    %659 = vmatprep.subr.mxu0 %v162
    %660 = vmatpush1.msra.mxu0 %v161
    %661 = vmatprep.subr.mxu0 %v166
    %662 = vmatpush1.msra.mxu0 %v165
    %663 = vmatprep.subr.mxu0 %v170
    %664 = vmatpush1.msra.mxu0 %v169
    %665 = vmatprep.subr.mxu0 %v174
    %666 = vmatpush1.msra.mxu0 %v173
    %667 = vmatprep.subr.mxu0 %v178
    %668 = vmatpush1.msra.mxu0 %v177
    %669 = vmatprep.subr.mxu0 %v182
    %670 = vmatpush1.msra.mxu0 %v181
    %671 = vmatprep.subr.mxu0 %v186
    %672 = vmatpush1.msra.mxu0 %v185
    %673 = vmatprep.subr.mxu0 %v190
    %674 = vmatpush1.msra.mxu0 %v189
    %675 = vmatprep.subr.mxu0 %v194
    %676 = vmatpush1.msra.mxu0 %v193
    %677 = vmatprep.subr.mxu0 %v198
    %678 = vmatpush1.msra.mxu0 %v197
    %679 = vmatprep.subr.mxu0 %v202
    %680 = vmatpush1.msra.mxu0 %v201
    %681 = vmatprep.subr.mxu0 %v206
    %682 = vmatpush1.msra.mxu0 %v205
    %683 = vmatprep.subr.mxu0 %v210
    %684 = vmatpush1.msra.mxu0 %v209
    %685 = vmatprep.subr.mxu0 %v214
    %686 = vmatpush1.msra.mxu0 %v213
    %687 = vmatprep.subr.mxu0 %v218
    %688 = vmatpush1.msra.mxu0 %v217
    %689 = vmatprep.subr.mxu0 %v222
    %690 = vmatpush1.msra.mxu0 %v221
    %691 = vmatprep.subr.mxu0 %v226
    %692 = vmatpush1.msra.mxu0 %v225
    %693 = vmatprep.subr.mxu0 %v230
    %694 = vmatpush1.msra.mxu0 %v229
    %695 = vmatprep.subr.mxu0 %v234
    %696 = vmatpush1.msra.mxu0 %v233
    %697 = vmatprep.subr.mxu0 %v238
    %698 = vmatpush1.msra.mxu0 %v237
    %699 = vmatprep.subr.mxu0 %v242
    %700 = vmatpush1.msra.mxu0 %v241
    %701 = vmatprep.subr.mxu0 %v246
    %702 = vmatpush1.msra.mxu0 %v245
    %703 = vmatprep.subr.mxu0 %v250
    %704 = vmatpush1.msra.mxu0 %v249
    %705 = vmatprep.subr.mxu0 %v254
    %706 = vmatpush1.msra.mxu0 %v253
    %707 = vmatprep.subr.mxu0 %v258
    %708 = vmatpush1.msra.mxu0 %v257
    %709 = vmatprep.subr.mxu0 %v262
    %710 = vmatpush1.msra.mxu0 %v261
    %711 = vmatprep.subr.mxu0 %v266
    %712 = vmatpush1.msra.mxu0 %v265
    %713 = vmatprep.subr.mxu0 %v270
    %714 = vmatpush1.msra.mxu0 %v269
    %715 = vmatprep.mubr.f32.mxu0 %v650
    %716 = vmatmul.mubr.f32.gmra.mrb[0].mxu0 %v649
    %v717 = vpop.f32.mrb[0].mxu0
    %v718 = vadd.f32 %v103, %v717
    %v719 = vpop.f32.mrb[0].mxu0
    %v720 = vadd.f32 %v107, %v719
    %721 = vdwg.mxu0
    %722 = vmatprep.subr.mxu0 %v148
    %723 = vmatpush1.msra.mxu0 %v147
    %724 = vmatprep.subr.mxu0 %v152
    %725 = vmatpush1.msra.mxu0 %v151
    %726 = vmatprep.subr.mxu0 %v156
    %727 = vmatpush1.msra.mxu0 %v155
    %728 = vmatprep.subr.mxu0 %v160
    %729 = vmatpush1.msra.mxu0 %v159
    %730 = vmatprep.subr.mxu0 %v164
    %731 = vmatpush1.msra.mxu0 %v163
    %732 = vmatprep.subr.mxu0 %v168
    %733 = vmatpush1.msra.mxu0 %v167
    %734 = vmatprep.subr.mxu0 %v172
    %735 = vmatpush1.msra.mxu0 %v171
    %736 = vmatprep.subr.mxu0 %v176
    %737 = vmatpush1.msra.mxu0 %v175
    %738 = vmatprep.subr.mxu0 %v180
    %739 = vmatpush1.msra.mxu0 %v179
    %740 = vmatprep.subr.mxu0 %v184
    %741 = vmatpush1.msra.mxu0 %v183
    %742 = vmatprep.subr.mxu0 %v188
    %743 = vmatpush1.msra.mxu0 %v187
    %744 = vmatprep.subr.mxu0 %v192
    %745 = vmatpush1.msra.mxu0 %v191
    %746 = vmatprep.subr.mxu0 %v196
    %747 = vmatpush1.msra.mxu0 %v195
    %748 = vmatprep.subr.mxu0 %v200
    %749 = vmatpush1.msra.mxu0 %v199
    %750 = vmatprep.subr.mxu0 %v204
    %751 = vmatpush1.msra.mxu0 %v203
    %752 = vmatprep.subr.mxu0 %v208
    %753 = vmatpush1.msra.mxu0 %v207
    %754 = vmatprep.subr.mxu0 %v212
    %755 = vmatpush1.msra.mxu0 %v211
    %756 = vmatprep.subr.mxu0 %v216
    %757 = vmatpush1.msra.mxu0 %v215
    %758 = vmatprep.subr.mxu0 %v220
    %759 = vmatpush1.msra.mxu0 %v219
    %760 = vmatprep.subr.mxu0 %v224
    %761 = vmatpush1.msra.mxu0 %v223
    %762 = vmatprep.subr.mxu0 %v228
    %763 = vmatpush1.msra.mxu0 %v227
    %764 = vmatprep.subr.mxu0 %v232
    %765 = vmatpush1.msra.mxu0 %v231
    %766 = vmatprep.subr.mxu0 %v236
    %767 = vmatpush1.msra.mxu0 %v235
    %768 = vmatprep.subr.mxu0 %v240
    %769 = vmatpush1.msra.mxu0 %v239
    %770 = vmatprep.subr.mxu0 %v244
    %771 = vmatpush1.msra.mxu0 %v243
    %772 = vmatprep.subr.mxu0 %v248
    %773 = vmatpush1.msra.mxu0 %v247
    %774 = vmatprep.subr.mxu0 %v252
    %775 = vmatpush1.msra.mxu0 %v251
    %776 = vmatprep.subr.mxu0 %v256
    %777 = vmatpush1.msra.mxu0 %v255
    %778 = vmatprep.subr.mxu0 %v260
    %779 = vmatpush1.msra.mxu0 %v259
    %780 = vmatprep.subr.mxu0 %v264
    %781 = vmatpush1.msra.mxu0 %v263
    %782 = vmatprep.subr.mxu0 %v268
    %783 = vmatpush1.msra.mxu0 %v267
    %784 = vmatprep.subr.mxu0 %v272
    %785 = vmatpush1.msra.mxu0 %v271
    %786 = vmatprep.mubr.f32.mxu0 %v650
    %787 = vmatmul.mubr.f32.gmra.mrb[0].mxu0 %v649
    %v788 = vpop.f32.mrb[0].mxu0
    %v789 = vadd.f32 %v111, %v788
    %v790 = vpop.f32.mrb[0].mxu0
    %v791 = vadd.f32 %v115, %v790
    %792 = vdwg.mxu0
    %v793 = vmul.f32 %v124, %v648
    %v794 = vadd.f32 %v718, %v793
    %v795 = vmul.f32 %v129, %v648
    %v796 = vadd.f32 %v720, %v795
    %v797 = vmul.f32 %v134, %v648
    %v798 = vadd.f32 %v796, %v797
    %v799 = vmul.f32 %v139, %v648
    %v800 = vadd.f32 %v791, %v799
    %v801 = vmul.f32 %v144, %v647
    %v802 = vadd.f32 %v800, %v801
    %v803 = vmul.f32 %v802, 0.5
    %v804 = vtanh.pop %v803
    %v805 = vadd.f32 %v804, 1.0
    %v806 = vmul.f32 %v805, 0.5
    %v807 = vmul.f32 %v806, %v647
    %v808 = vmul.f32 %v796, 0.5
    %v809 = vtanh.pop %v808
    %v810 = vadd.f32 %v809, 1.0
    %v811 = vmul.f32 %v810, 0.5
    %v812 = vmul.f32 %v811, %v648
    %v813 = vadd.f32 %v807, %v812
    %v814 = vmul.f32 %v794, 0.5
    %v815 = vtanh.pop %v814
    %v816 = vadd.f32 %v815, 1.0
    %v817 = vmul.f32 %v816, 0.5
    %v818 = vtanh.pop %v789
    %v819 = vmul.f32 %v817, %v818
    %v820 = vadd.f32 %v813, %v819
    %v821 = vmul.f32 %v798, 0.5
    %v822 = vtanh.pop %v821
    %v823 = vadd.f32 %v822, 1.0
    %v824 = vmul.f32 %v823, 0.5
    %v825 = vtanh.pop %v820
    %v826 = vmul.f32 %v824, %v825
    %827 = vst [vmem:[#allocation3] sm:$0xff] %v820
    %828 = vst [vmem:[#allocation2 + $0x8] sm:$0xff] %v826
    %829 = vst [vmem:[#allocation13 + $0x10] sm:$0xff] %v826
    %830 = vst [vmem:[#allocation14 + $0x10] sm:$0xff] %v820
    %v831 = vld [vmem:[#allocation4 + $0x18] sm:$0xff]
    %832 = vst [vmem:[#allocation2] sm:$0xff] %v831
    %v833 = vld [vmem:[#allocation7 + $0x18] sm:$0xff]
    %v834 = vld [vmem:[#allocation3] sm:$0xff]
    %v835 = vld [vmem:[#allocation2] sm:$0xff]
    %v836 = vld [vmem:[#allocation2 + $0x8] sm:$0xff]
    %837 = vmatprep.subr.mxu0 %v146
    %838 = vmatpush1.msra.mxu0 %v145
    %839 = vmatprep.subr.mxu0 %v150
    %840 = vmatpush1.msra.mxu0 %v149
    %841 = vmatprep.subr.mxu0 %v154
    %842 = vmatpush1.msra.mxu0 %v153
    %843 = vmatprep.subr.mxu0 %v158
    %844 = vmatpush1.msra.mxu0 %v157
    %845 = vmatprep.subr.mxu0 %v162
    %846 = vmatpush1.msra.mxu0 %v161
    %847 = vmatprep.subr.mxu0 %v166
    %848 = vmatpush1.msra.mxu0 %v165
    %849 = vmatprep.subr.mxu0 %v170
    %850 = vmatpush1.msra.mxu0 %v169
    %851 = vmatprep.subr.mxu0 %v174
    %852 = vmatpush1.msra.mxu0 %v173
    %853 = vmatprep.subr.mxu0 %v178
    %854 = vmatpush1.msra.mxu0 %v177
    %855 = vmatprep.subr.mxu0 %v182
    %856 = vmatpush1.msra.mxu0 %v181
    %857 = vmatprep.subr.mxu0 %v186
    %858 = vmatpush1.msra.mxu0 %v185
    %859 = vmatprep.subr.mxu0 %v190
    %860 = vmatpush1.msra.mxu0 %v189
    %861 = vmatprep.subr.mxu0 %v194
    %862 = vmatpush1.msra.mxu0 %v193
    %863 = vmatprep.subr.mxu0 %v198
    %864 = vmatpush1.msra.mxu0 %v197
    %865 = vmatprep.subr.mxu0 %v202
    %866 = vmatpush1.msra.mxu0 %v201
    %867 = vmatprep.subr.mxu0 %v206
    %868 = vmatpush1.msra.mxu0 %v205
    %869 = vmatprep.subr.mxu0 %v210
    %870 = vmatpush1.msra.mxu0 %v209
    %871 = vmatprep.subr.mxu0 %v214
    %872 = vmatpush1.msra.mxu0 %v213
    %873 = vmatprep.subr.mxu0 %v218
    %874 = vmatpush1.msra.mxu0 %v217
    %875 = vmatprep.subr.mxu0 %v222
    %876 = vmatpush1.msra.mxu0 %v221
    %877 = vmatprep.subr.mxu0 %v226
    %878 = vmatpush1.msra.mxu0 %v225
    %879 = vmatprep.subr.mxu0 %v230
    %880 = vmatpush1.msra.mxu0 %v229
    %881 = vmatprep.subr.mxu0 %v234
    %882 = vmatpush1.msra.mxu0 %v233
    %883 = vmatprep.subr.mxu0 %v238
    %884 = vmatpush1.msra.mxu0 %v237
    %885 = vmatprep.subr.mxu0 %v242
    %886 = vmatpush1.msra.mxu0 %v241
    %887 = vmatprep.subr.mxu0 %v246
    %888 = vmatpush1.msra.mxu0 %v245
    %889 = vmatprep.subr.mxu0 %v250
    %890 = vmatpush1.msra.mxu0 %v249
    %891 = vmatprep.subr.mxu0 %v254
    %892 = vmatpush1.msra.mxu0 %v253
    %893 = vmatprep.subr.mxu0 %v258
    %894 = vmatpush1.msra.mxu0 %v257
    %895 = vmatprep.subr.mxu0 %v262
    %896 = vmatpush1.msra.mxu0 %v261
    %897 = vmatprep.subr.mxu0 %v266
    %898 = vmatpush1.msra.mxu0 %v265
    %899 = vmatprep.subr.mxu0 %v270
    %900 = vmatpush1.msra.mxu0 %v269
    %901 = vmatprep.mubr.f32.mxu0 %v836
    %902 = vmatmul.mubr.f32.gmra.mrb[0].mxu0 %v835
    %v903 = vpop.f32.mrb[0].mxu0
    %v904 = vadd.f32 %v103, %v903
    %v905 = vpop.f32.mrb[0].mxu0
    %v906 = vadd.f32 %v107, %v905
    %907 = vdwg.mxu0
    %908 = vmatprep.subr.mxu0 %v148
    %909 = vmatpush1.msra.mxu0 %v147
    %910 = vmatprep.subr.mxu0 %v152
    %911 = vmatpush1.msra.mxu0 %v151
    %912 = vmatprep.subr.mxu0 %v156
    %913 = vmatpush1.msra.mxu0 %v155
    %914 = vmatprep.subr.mxu0 %v160
    %915 = vmatpush1.msra.mxu0 %v159
    %916 = vmatprep.subr.mxu0 %v164
    %917 = vmatpush1.msra.mxu0 %v163
    %918 = vmatprep.subr.mxu0 %v168
    %919 = vmatpush1.msra.mxu0 %v167
    %920 = vmatprep.subr.mxu0 %v172
    %921 = vmatpush1.msra.mxu0 %v171
    %922 = vmatprep.subr.mxu0 %v176
    %923 = vmatpush1.msra.mxu0 %v175
    %924 = vmatprep.subr.mxu0 %v180
    %925 = vmatpush1.msra.mxu0 %v179
    %926 = vmatprep.subr.mxu0 %v184
    %927 = vmatpush1.msra.mxu0 %v183
    %928 = vmatprep.subr.mxu0 %v188
    %929 = vmatpush1.msra.mxu0 %v187
    %930 = vmatprep.subr.mxu0 %v192
    %931 = vmatpush1.msra.mxu0 %v191
    %932 = vmatprep.subr.mxu0 %v196
    %933 = vmatpush1.msra.mxu0 %v195
    %934 = vmatprep.subr.mxu0 %v200
    %935 = vmatpush1.msra.mxu0 %v199
    %936 = vmatprep.subr.mxu0 %v204
    %937 = vmatpush1.msra.mxu0 %v203
    %938 = vmatprep.subr.mxu0 %v208
    %939 = vmatpush1.msra.mxu0 %v207
    %940 = vmatprep.subr.mxu0 %v212
    %941 = vmatpush1.msra.mxu0 %v211
    %942 = vmatprep.subr.mxu0 %v216
    %943 = vmatpush1.msra.mxu0 %v215
    %944 = vmatprep.subr.mxu0 %v220
    %945 = vmatpush1.msra.mxu0 %v219
    %946 = vmatprep.subr.mxu0 %v224
    %947 = vmatpush1.msra.mxu0 %v223
    %948 = vmatprep.subr.mxu0 %v228
    %949 = vmatpush1.msra.mxu0 %v227
    %950 = vmatprep.subr.mxu0 %v232
    %951 = vmatpush1.msra.mxu0 %v231
    %952 = vmatprep.subr.mxu0 %v236
    %953 = vmatpush1.msra.mxu0 %v235
    %954 = vmatprep.subr.mxu0 %v240
    %955 = vmatpush1.msra.mxu0 %v239
    %956 = vmatprep.subr.mxu0 %v244
    %957 = vmatpush1.msra.mxu0 %v243
    %958 = vmatprep.subr.mxu0 %v248
    %959 = vmatpush1.msra.mxu0 %v247
    %960 = vmatprep.subr.mxu0 %v252
    %961 = vmatpush1.msra.mxu0 %v251
    %962 = vmatprep.subr.mxu0 %v256
    %963 = vmatpush1.msra.mxu0 %v255
    %964 = vmatprep.subr.mxu0 %v260
    %965 = vmatpush1.msra.mxu0 %v259
    %966 = vmatprep.subr.mxu0 %v264
    %967 = vmatpush1.msra.mxu0 %v263
    %968 = vmatprep.subr.mxu0 %v268
    %969 = vmatpush1.msra.mxu0 %v267
    %970 = vmatprep.subr.mxu0 %v272
    %971 = vmatpush1.msra.mxu0 %v271
    %972 = vmatprep.mubr.f32.mxu0 %v836
    %973 = vmatmul.mubr.f32.gmra.mrb[0].mxu0 %v835
    %v974 = vpop.f32.mrb[0].mxu0
    %v975 = vadd.f32 %v111, %v974
    %v976 = vpop.f32.mrb[0].mxu0
    %v977 = vadd.f32 %v115, %v976
    %978 = vdwg.mxu0
    %v979 = vmul.f32 %v124, %v834
    %v980 = vadd.f32 %v904, %v979
    %v981 = vmul.f32 %v129, %v834
    %v982 = vadd.f32 %v906, %v981
    %v983 = vmul.f32 %v134, %v834
    %v984 = vadd.f32 %v982, %v983
    %v985 = vmul.f32 %v139, %v834
    %v986 = vadd.f32 %v977, %v985
    %v987 = vmul.f32 %v144, %v833
    %v988 = vadd.f32 %v986, %v987
    %v989 = vmul.f32 %v988, 0.5
    %v990 = vtanh.pop %v989
    %v991 = vadd.f32 %v990, 1.0
    %v992 = vmul.f32 %v991, 0.5
    %v993 = vmul.f32 %v992, %v833
    %v994 = vmul.f32 %v982, 0.5
    %v995 = vtanh.pop %v994
    %v996 = vadd.f32 %v995, 1.0
    %v997 = vmul.f32 %v996, 0.5
    %v998 = vmul.f32 %v997, %v834
    %v999 = vadd.f32 %v993, %v998
    %v1000 = vmul.f32 %v980, 0.5
    %v1001 = vtanh.pop %v1000
    %v1002 = vadd.f32 %v1001, 1.0
    %v1003 = vmul.f32 %v1002, 0.5
    %v1004 = vtanh.pop %v975
    %v1005 = vmul.f32 %v1003, %v1004
    %v1006 = vadd.f32 %v999, %v1005
    %v1007 = vmul.f32 %v984, 0.5
    %v1008 = vtanh.pop %v1007
    %v1009 = vadd.f32 %v1008, 1.0
    %v1010 = vmul.f32 %v1009, 0.5
    %v1011 = vtanh.pop %v1006
    %v1012 = vmul.f32 %v1010, %v1011
    %1013 = vst [vmem:[#allocation3] sm:$0xff] %v1006
    %1014 = vst [vmem:[#allocation2 + $0x8] sm:$0xff] %v1012
    %1015 = vst [vmem:[#allocation13 + $0x18] sm:$0xff] %v1012
    %1016 = vst [vmem:[#allocation14 + $0x18] sm:$0xff] %v1006
    %v1017 = vld [vmem:[#allocation4 + $0x20] sm:$0xff]
    %1018 = vst [vmem:[#allocation2] sm:$0xff] %v1017
    %v1019 = vld [vmem:[#allocation7 + $0x20] sm:$0xff]
    %v1020 = vld [vmem:[#allocation3] sm:$0xff]
    %v1021 = vld [vmem:[#allocation2] sm:$0xff]
    %v1022 = vld [vmem:[#allocation2 + $0x8] sm:$0xff]
    %1023 = vmatprep.subr.mxu0 %v146
    %1024 = vmatpush1.msra.mxu0 %v145
    %1025 = vmatprep.subr.mxu0 %v150
    %1026 = vmatpush1.msra.mxu0 %v149
    %1027 = vmatprep.subr.mxu0 %v154
    %1028 = vmatpush1.msra.mxu0 %v153
    %1029 = vmatprep.subr.mxu0 %v158
    %1030 = vmatpush1.msra.mxu0 %v157
    %1031 = vmatprep.subr.mxu0 %v162
    %1032 = vmatpush1.msra.mxu0 %v161
    %1033 = vmatprep.subr.mxu0 %v166
    %1034 = vmatpush1.msra.mxu0 %v165
    %1035 = vmatprep.subr.mxu0 %v170
    %1036 = vmatpush1.msra.mxu0 %v169
    %1037 = vmatprep.subr.mxu0 %v174
    %1038 = vmatpush1.msra.mxu0 %v173
    %1039 = vmatprep.subr.mxu0 %v178
    %1040 = vmatpush1.msra.mxu0 %v177
    %1041 = vmatprep.subr.mxu0 %v182
    %1042 = vmatpush1.msra.mxu0 %v181
    %1043 = vmatprep.subr.mxu0 %v186
    %1044 = vmatpush1.msra.mxu0 %v185
    %1045 = vmatprep.subr.mxu0 %v190
    %1046 = vmatpush1.msra.mxu0 %v189
    %1047 = vmatprep.subr.mxu0 %v194
    %1048 = vmatpush1.msra.mxu0 %v193
    %1049 = vmatprep.subr.mxu0 %v198
    %1050 = vmatpush1.msra.mxu0 %v197
    %1051 = vmatprep.subr.mxu0 %v202
    %1052 = vmatpush1.msra.mxu0 %v201
    %1053 = vmatprep.subr.mxu0 %v206
    %1054 = vmatpush1.msra.mxu0 %v205
    %1055 = vmatprep.subr.mxu0 %v210
    %1056 = vmatpush1.msra.mxu0 %v209
    %1057 = vmatprep.subr.mxu0 %v214
    %1058 = vmatpush1.msra.mxu0 %v213
    %1059 = vmatprep.subr.mxu0 %v218
    %1060 = vmatpush1.msra.mxu0 %v217
    %1061 = vmatprep.subr.mxu0 %v222
    %1062 = vmatpush1.msra.mxu0 %v221
    %1063 = vmatprep.subr.mxu0 %v226
    %1064 = vmatpush1.msra.mxu0 %v225
    %1065 = vmatprep.subr.mxu0 %v230
    %1066 = vmatpush1.msra.mxu0 %v229
    %1067 = vmatprep.subr.mxu0 %v234
    %1068 = vmatpush1.msra.mxu0 %v233
    %1069 = vmatprep.subr.mxu0 %v238
    %1070 = vmatpush1.msra.mxu0 %v237
    %1071 = vmatprep.subr.mxu0 %v242
    %1072 = vmatpush1.msra.mxu0 %v241
    %1073 = vmatprep.subr.mxu0 %v246
    %1074 = vmatpush1.msra.mxu0 %v245
    %1075 = vmatprep.subr.mxu0 %v250
    %1076 = vmatpush1.msra.mxu0 %v249
    %1077 = vmatprep.subr.mxu0 %v254
    %1078 = vmatpush1.msra.mxu0 %v253
    %1079 = vmatprep.subr.mxu0 %v258
    %1080 = vmatpush1.msra.mxu0 %v257
    %1081 = vmatprep.subr.mxu0 %v262
    %1082 = vmatpush1.msra.mxu0 %v261
    %1083 = vmatprep.subr.mxu0 %v266
    %1084 = vmatpush1.msra.mxu0 %v265
    %1085 = vmatprep.subr.mxu0 %v270
    %1086 = vmatpush1.msra.mxu0 %v269
    %1087 = vmatprep.mubr.f32.mxu0 %v1022
    %1088 = vmatmul.mubr.f32.gmra.mrb[0].mxu0 %v1021
    %v1089 = vpop.f32.mrb[0].mxu0
    %v1090 = vadd.f32 %v103, %v1089
    %v1091 = vpop.f32.mrb[0].mxu0
    %v1092 = vadd.f32 %v107, %v1091
    %1093 = vdwg.mxu0
    %1094 = vmatprep.subr.mxu0 %v148
    %1095 = vmatpush1.msra.mxu0 %v147
    %1096 = vmatprep.subr.mxu0 %v152
    %1097 = vmatpush1.msra.mxu0 %v151
    %1098 = vmatprep.subr.mxu0 %v156
    %1099 = vmatpush1.msra.mxu0 %v155
    %1100 = vmatprep.subr.mxu0 %v160
    %1101 = vmatpush1.msra.mxu0 %v159
    %1102 = vmatprep.subr.mxu0 %v164
    %1103 = vmatpush1.msra.mxu0 %v163
    %1104 = vmatprep.subr.mxu0 %v168
    %1105 = vmatpush1.msra.mxu0 %v167
    %1106 = vmatprep.subr.mxu0 %v172
    %1107 = vmatpush1.msra.mxu0 %v171
    %1108 = vmatprep.subr.mxu0 %v176
    %1109 = vmatpush1.msra.mxu0 %v175
    %1110 = vmatprep.subr.mxu0 %v180
    %1111 = vmatpush1.msra.mxu0 %v179
    %1112 = vmatprep.subr.mxu0 %v184
    %1113 = vmatpush1.msra.mxu0 %v183
    %1114 = vmatprep.subr.mxu0 %v188
    %1115 = vmatpush1.msra.mxu0 %v187
    %1116 = vmatprep.subr.mxu0 %v192
    %1117 = vmatpush1.msra.mxu0 %v191
    %1118 = vmatprep.subr.mxu0 %v196
    %1119 = vmatpush1.msra.mxu0 %v195
    %1120 = vmatprep.subr.mxu0 %v200
    %1121 = vmatpush1.msra.mxu0 %v199
    %1122 = vmatprep.subr.mxu0 %v204
    %1123 = vmatpush1.msra.mxu0 %v203
    %1124 = vmatprep.subr.mxu0 %v208
    %1125 = vmatpush1.msra.mxu0 %v207
    %1126 = vmatprep.subr.mxu0 %v212
    %1127 = vmatpush1.msra.mxu0 %v211
    %1128 = vmatprep.subr.mxu0 %v216
    %1129 = vmatpush1.msra.mxu0 %v215
    %1130 = vmatprep.subr.mxu0 %v220
    %1131 = vmatpush1.msra.mxu0 %v219
    %1132 = vmatprep.subr.mxu0 %v224
    %1133 = vmatpush1.msra.mxu0 %v223
    %1134 = vmatprep.subr.mxu0 %v228
    %1135 = vmatpush1.msra.mxu0 %v227
    %1136 = vmatprep.subr.mxu0 %v232
    %1137 = vmatpush1.msra.mxu0 %v231
    %1138 = vmatprep.subr.mxu0 %v236
    %1139 = vmatpush1.msra.mxu0 %v235
    %1140 = vmatprep.subr.mxu0 %v240
    %1141 = vmatpush1.msra.mxu0 %v239
    %1142 = vmatprep.subr.mxu0 %v244
    %1143 = vmatpush1.msra.mxu0 %v243
    %1144 = vmatprep.subr.mxu0 %v248
    %1145 = vmatpush1.msra.mxu0 %v247
    %1146 = vmatprep.subr.mxu0 %v252
    %1147 = vmatpush1.msra.mxu0 %v251
    %1148 = vmatprep.subr.mxu0 %v256
    %1149 = vmatpush1.msra.mxu0 %v255
    %1150 = vmatprep.subr.mxu0 %v260
    %1151 = vmatpush1.msra.mxu0 %v259
    %1152 = vmatprep.subr.mxu0 %v264
    %1153 = vmatpush1.msra.mxu0 %v263
    %1154 = vmatprep.subr.mxu0 %v268
    %1155 = vmatpush1.msra.mxu0 %v267
    %1156 = vmatprep.subr.mxu0 %v272
    %1157 = vmatpush1.msra.mxu0 %v271
    %1158 = vmatprep.mubr.f32.mxu0 %v1022
    %1159 = vmatmul.mubr.f32.gmra.mrb[0].mxu0 %v1021
    %v1160 = vpop.f32.mrb[0].mxu0
    %v1161 = vadd.f32 %v111, %v1160
    %v1162 = vpop.f32.mrb[0].mxu0
    %v1163 = vadd.f32 %v115, %v1162
    %1164 = vdwg.mxu0
    %v1165 = vmul.f32 %v124, %v1020
    %v1166 = vadd.f32 %v1090, %v1165
    %v1167 = vmul.f32 %v129, %v1020
    %v1168 = vadd.f32 %v1092, %v1167
    %v1169 = vmul.f32 %v134, %v1020
    %v1170 = vadd.f32 %v1168, %v1169
    %v1171 = vmul.f32 %v139, %v1020
    %v1172 = vadd.f32 %v1163, %v1171
    %v1173 = vmul.f32 %v144, %v1019
    %v1174 = vadd.f32 %v1172, %v1173
    %v1175 = vmul.f32 %v1174, 0.5
    %v1176 = vtanh.pop %v1175
    %v1177 = vadd.f32 %v1176, 1.0
    %v1178 = vmul.f32 %v1177, 0.5
    %v1179 = vmul.f32 %v1178, %v1019
    %v1180 = vmul.f32 %v1168, 0.5
    %v1181 = vtanh.pop %v1180
    %v1182 = vadd.f32 %v1181, 1.0
    %v1183 = vmul.f32 %v1182, 0.5
    %v1184 = vmul.f32 %v1183, %v1020
    %v1185 = vadd.f32 %v1179, %v1184
    %v1186 = vmul.f32 %v1166, 0.5
    %v1187 = vtanh.pop %v1186
    %v1188 = vadd.f32 %v1187, 1.0
    %v1189 = vmul.f32 %v1188, 0.5
    %v1190 = vtanh.pop %v1161
    %v1191 = vmul.f32 %v1189, %v1190
    %v1192 = vadd.f32 %v1185, %v1191
    %v1193 = vmul.f32 %v1170, 0.5
    %v1194 = vtanh.pop %v1193
    %v1195 = vadd.f32 %v1194, 1.0
    %v1196 = vmul.f32 %v1195, 0.5
    %v1197 = vtanh.pop %v1192
    %v1198 = vmul.f32 %v1196, %v1197
    %1199 = vst [vmem:[#allocation3] sm:$0xff] %v1192
    %1200 = vst [vmem:[#allocation2 + $0x8] sm:$0xff] %v1198
    %1201 = vst [vmem:[#allocation13 + $0x20] sm:$0xff] %v1198
    %1202 = vst [vmem:[#allocation14 + $0x20] sm:$0xff] %v1192
    %v1203 = vld [vmem:[#allocation4 + $0x28] sm:$0xff]
    %1204 = vst [vmem:[#allocation2] sm:$0xff] %v1203
    %v1205 = vld [vmem:[#allocation7 + $0x28] sm:$0xff]
    %v1206 = vld [vmem:[#allocation3] sm:$0xff]
    %v1207 = vld [vmem:[#allocation2] sm:$0xff]
    %v1208 = vld [vmem:[#allocation2 + $0x8] sm:$0xff]
    %1209 = vmatprep.subr.mxu0 %v146
    %1210 = vmatpush1.msra.mxu0 %v145
    %1211 = vmatprep.subr.mxu0 %v150
    %1212 = vmatpush1.msra.mxu0 %v149
    %1213 = vmatprep.subr.mxu0 %v154
    %1214 = vmatpush1.msra.mxu0 %v153
    %1215 = vmatprep.subr.mxu0 %v158
    %1216 = vmatpush1.msra.mxu0 %v157
    %1217 = vmatprep.subr.mxu0 %v162
    %1218 = vmatpush1.msra.mxu0 %v161
    %1219 = vmatprep.subr.mxu0 %v166
    %1220 = vmatpush1.msra.mxu0 %v165
    %1221 = vmatprep.subr.mxu0 %v170
    %1222 = vmatpush1.msra.mxu0 %v169
    %1223 = vmatprep.subr.mxu0 %v174
    %1224 = vmatpush1.msra.mxu0 %v173
    %1225 = vmatprep.subr.mxu0 %v178
    %1226 = vmatpush1.msra.mxu0 %v177
    %1227 = vmatprep.subr.mxu0 %v182
    %1228 = vmatpush1.msra.mxu0 %v181
    %1229 = vmatprep.subr.mxu0 %v186
    %1230 = vmatpush1.msra.mxu0 %v185
    %1231 = vmatprep.subr.mxu0 %v190
    %1232 = vmatpush1.msra.mxu0 %v189
    %1233 = vmatprep.subr.mxu0 %v194
    %1234 = vmatpush1.msra.mxu0 %v193
    %1235 = vmatprep.subr.mxu0 %v198
    %1236 = vmatpush1.msra.mxu0 %v197
    %1237 = vmatprep.subr.mxu0 %v202
    %1238 = vmatpush1.msra.mxu0 %v201
    %1239 = vmatprep.subr.mxu0 %v206
    %1240 = vmatpush1.msra.mxu0 %v205
    %1241 = vmatprep.subr.mxu0 %v210
    %1242 = vmatpush1.msra.mxu0 %v209
    %1243 = vmatprep.subr.mxu0 %v214
    %1244 = vmatpush1.msra.mxu0 %v213
    %1245 = vmatprep.subr.mxu0 %v218
    %1246 = vmatpush1.msra.mxu0 %v217
    %1247 = vmatprep.subr.mxu0 %v222
    %1248 = vmatpush1.msra.mxu0 %v221
    %1249 = vmatprep.subr.mxu0 %v226
    %1250 = vmatpush1.msra.mxu0 %v225
    %1251 = vmatprep.subr.mxu0 %v230
    %1252 = vmatpush1.msra.mxu0 %v229
    %1253 = vmatprep.subr.mxu0 %v234
    %1254 = vmatpush1.msra.mxu0 %v233
    %1255 = vmatprep.subr.mxu0 %v238
    %1256 = vmatpush1.msra.mxu0 %v237
    %1257 = vmatprep.subr.mxu0 %v242
    %1258 = vmatpush1.msra.mxu0 %v241
    %1259 = vmatprep.subr.mxu0 %v246
    %1260 = vmatpush1.msra.mxu0 %v245
    %1261 = vmatprep.subr.mxu0 %v250
    %1262 = vmatpush1.msra.mxu0 %v249
    %1263 = vmatprep.subr.mxu0 %v254
    %1264 = vmatpush1.msra.mxu0 %v253
    %1265 = vmatprep.subr.mxu0 %v258
    %1266 = vmatpush1.msra.mxu0 %v257
    %1267 = vmatprep.subr.mxu0 %v262
    %1268 = vmatpush1.msra.mxu0 %v261
    %1269 = vmatprep.subr.mxu0 %v266
    %1270 = vmatpush1.msra.mxu0 %v265
    %1271 = vmatprep.subr.mxu0 %v270
    %1272 = vmatpush1.msra.mxu0 %v269
    %1273 = vmatprep.mubr.f32.mxu0 %v1208
    %1274 = vmatmul.mubr.f32.gmra.mrb[0].mxu0 %v1207
    %v1275 = vpop.f32.mrb[0].mxu0
    %v1276 = vadd.f32 %v103, %v1275
    %v1277 = vpop.f32.mrb[0].mxu0
    %v1278 = vadd.f32 %v107, %v1277
    %1279 = vdwg.mxu0
    %1280 = vmatprep.subr.mxu0 %v148
    %1281 = vmatpush1.msra.mxu0 %v147
    %1282 = vmatprep.subr.mxu0 %v152
    %1283 = vmatpush1.msra.mxu0 %v151
    %1284 = vmatprep.subr.mxu0 %v156
    %1285 = vmatpush1.msra.mxu0 %v155
    %1286 = vmatprep.subr.mxu0 %v160
    %1287 = vmatpush1.msra.mxu0 %v159
    %1288 = vmatprep.subr.mxu0 %v164
    %1289 = vmatpush1.msra.mxu0 %v163
    %1290 = vmatprep.subr.mxu0 %v168
    %1291 = vmatpush1.msra.mxu0 %v167
    %1292 = vmatprep.subr.mxu0 %v172
    %1293 = vmatpush1.msra.mxu0 %v171
    %1294 = vmatprep.subr.mxu0 %v176
    %1295 = vmatpush1.msra.mxu0 %v175
    %1296 = vmatprep.subr.mxu0 %v180
    %1297 = vmatpush1.msra.mxu0 %v179
    %1298 = vmatprep.subr.mxu0 %v184
    %1299 = vmatpush1.msra.mxu0 %v183
    %1300 = vmatprep.subr.mxu0 %v188
    %1301 = vmatpush1.msra.mxu0 %v187
    %1302 = vmatprep.subr.mxu0 %v192
    %1303 = vmatpush1.msra.mxu0 %v191
    %1304 = vmatprep.subr.mxu0 %v196
    %1305 = vmatpush1.msra.mxu0 %v195
    %1306 = vmatprep.subr.mxu0 %v200
    %1307 = vmatpush1.msra.mxu0 %v199
    %1308 = vmatprep.subr.mxu0 %v204
    %1309 = vmatpush1.msra.mxu0 %v203
    %1310 = vmatprep.subr.mxu0 %v208
    %1311 = vmatpush1.msra.mxu0 %v207
    %1312 = vmatprep.subr.mxu0 %v212
    %1313 = vmatpush1.msra.mxu0 %v211
    %1314 = vmatprep.subr.mxu0 %v216
    %1315 = vmatpush1.msra.mxu0 %v215
    %1316 = vmatprep.subr.mxu0 %v220
    %1317 = vmatpush1.msra.mxu0 %v219
    %1318 = vmatprep.subr.mxu0 %v224
    %1319 = vmatpush1.msra.mxu0 %v223
    %1320 = vmatprep.subr.mxu0 %v228
    %1321 = vmatpush1.msra.mxu0 %v227
    %1322 = vmatprep.subr.mxu0 %v232
    %1323 = vmatpush1.msra.mxu0 %v231
    %1324 = vmatprep.subr.mxu0 %v236
    %1325 = vmatpush1.msra.mxu0 %v235
    %1326 = vmatprep.subr.mxu0 %v240
    %1327 = vmatpush1.msra.mxu0 %v239
    %1328 = vmatprep.subr.mxu0 %v244
    %1329 = vmatpush1.msra.mxu0 %v243
    %1330 = vmatprep.subr.mxu0 %v248
    %1331 = vmatpush1.msra.mxu0 %v247
    %1332 = vmatprep.subr.mxu0 %v252
    %1333 = vmatpush1.msra.mxu0 %v251
    %1334 = vmatprep.subr.mxu0 %v256
    %1335 = vmatpush1.msra.mxu0 %v255
    %1336 = vmatprep.subr.mxu0 %v260
    %1337 = vmatpush1.msra.mxu0 %v259
    %1338 = vmatprep.subr.mxu0 %v264
    %1339 = vmatpush1.msra.mxu0 %v263
    %1340 = vmatprep.subr.mxu0 %v268
    %1341 = vmatpush1.msra.mxu0 %v267
    %1342 = vmatprep.subr.mxu0 %v272
    %1343 = vmatpush1.msra.mxu0 %v271
    %1344 = vmatprep.mubr.f32.mxu0 %v1208
    %1345 = vmatmul.mubr.f32.gmra.mrb[0].mxu0 %v1207
    %v1346 = vpop.f32.mrb[0].mxu0
    %v1347 = vadd.f32 %v111, %v1346
    %v1348 = vpop.f32.mrb[0].mxu0
    %v1349 = vadd.f32 %v115, %v1348
    %1350 = vdwg.mxu0
    %v1351 = vmul.f32 %v124, %v1206
    %v1352 = vadd.f32 %v1276, %v1351
    %v1353 = vmul.f32 %v129, %v1206
    %v1354 = vadd.f32 %v1278, %v1353
    %v1355 = vmul.f32 %v134, %v1206
    %v1356 = vadd.f32 %v1354, %v1355
    %v1357 = vmul.f32 %v139, %v1206
    %v1358 = vadd.f32 %v1349, %v1357
    %v1359 = vmul.f32 %v144, %v1205
    %v1360 = vadd.f32 %v1358, %v1359
    %v1361 = vmul.f32 %v1360, 0.5
    %v1362 = vtanh.pop %v1361
    %v1363 = vadd.f32 %v1362, 1.0
    %v1364 = vmul.f32 %v1363, 0.5
    %v1365 = vmul.f32 %v1364, %v1205
    %v1366 = vmul.f32 %v1354, 0.5
    %v1367 = vtanh.pop %v1366
    %v1368 = vadd.f32 %v1367, 1.0
    %v1369 = vmul.f32 %v1368, 0.5
    %v1370 = vmul.f32 %v1369, %v1206
    %v1371 = vadd.f32 %v1365, %v1370
    %v1372 = vmul.f32 %v1352, 0.5
    %v1373 = vtanh.pop %v1372
    %v1374 = vadd.f32 %v1373, 1.0
    %v1375 = vmul.f32 %v1374, 0.5
    %v1376 = vtanh.pop %v1347
    %v1377 = vmul.f32 %v1375, %v1376
    %v1378 = vadd.f32 %v1371, %v1377
    %v1379 = vmul.f32 %v1356, 0.5
    %v1380 = vtanh.pop %v1379
    %v1381 = vadd.f32 %v1380, 1.0
    %v1382 = vmul.f32 %v1381, 0.5
    %v1383 = vtanh.pop %v1378
    %v1384 = vmul.f32 %v1382, %v1383
    %1385 = vst [vmem:[#allocation3] sm:$0xff] %v1378
    %1386 = vst [vmem:[#allocation2 + $0x8] sm:$0xff] %v1384
    %1387 = vst [vmem:[#allocation13 + $0x28] sm:$0xff] %v1384
    %1388 = vst [vmem:[#allocation14 + $0x28] sm:$0xff] %v1378
    %v1389 = vld [vmem:[#allocation4 + $0x30] sm:$0xff]
    %1390 = vst [vmem:[#allocation2] sm:$0xff] %v1389
    %v1391 = vld [vmem:[#allocation7 + $0x30] sm:$0xff]
    %v1392 = vld [vmem:[#allocation3] sm:$0xff]
    %v1393 = vld [vmem:[#allocation2] sm:$0xff]
    %v1394 = vld [vmem:[#allocation2 + $0x8] sm:$0xff]
    %1395 = vmatprep.subr.mxu0 %v146
    %1396 = vmatpush1.msra.mxu0 %v145
    %1397 = vmatprep.subr.mxu0 %v150
    %1398 = vmatpush1.msra.mxu0 %v149
    %1399 = vmatprep.subr.mxu0 %v154
    %1400 = vmatpush1.msra.mxu0 %v153
    %1401 = vmatprep.subr.mxu0 %v158
    %1402 = vmatpush1.msra.mxu0 %v157
    %1403 = vmatprep.subr.mxu0 %v162
    %1404 = vmatpush1.msra.mxu0 %v161
    %1405 = vmatprep.subr.mxu0 %v166
    %1406 = vmatpush1.msra.mxu0 %v165
    %1407 = vmatprep.subr.mxu0 %v170
    %1408 = vmatpush1.msra.mxu0 %v169
    %1409 = vmatprep.subr.mxu0 %v174
    %1410 = vmatpush1.msra.mxu0 %v173
    %1411 = vmatprep.subr.mxu0 %v178
    %1412 = vmatpush1.msra.mxu0 %v177
    %1413 = vmatprep.subr.mxu0 %v182
    %1414 = vmatpush1.msra.mxu0 %v181
    %1415 = vmatprep.subr.mxu0 %v186
    %1416 = vmatpush1.msra.mxu0 %v185
    %1417 = vmatprep.subr.mxu0 %v190
    %1418 = vmatpush1.msra.mxu0 %v189
    %1419 = vmatprep.subr.mxu0 %v194
    %1420 = vmatpush1.msra.mxu0 %v193
    %1421 = vmatprep.subr.mxu0 %v198
    %1422 = vmatpush1.msra.mxu0 %v197
    %1423 = vmatprep.subr.mxu0 %v202
    %1424 = vmatpush1.msra.mxu0 %v201
    %1425 = vmatprep.subr.mxu0 %v206
    %1426 = vmatpush1.msra.mxu0 %v205
    %1427 = vmatprep.subr.mxu0 %v210
    %1428 = vmatpush1.msra.mxu0 %v209
    %1429 = vmatprep.subr.mxu0 %v214
    %1430 = vmatpush1.msra.mxu0 %v213
    %1431 = vmatprep.subr.mxu0 %v218
    %1432 = vmatpush1.msra.mxu0 %v217
    %1433 = vmatprep.subr.mxu0 %v222
    %1434 = vmatpush1.msra.mxu0 %v221
    %1435 = vmatprep.subr.mxu0 %v226
    %1436 = vmatpush1.msra.mxu0 %v225
    %1437 = vmatprep.subr.mxu0 %v230
    %1438 = vmatpush1.msra.mxu0 %v229
    %1439 = vmatprep.subr.mxu0 %v234
    %1440 = vmatpush1.msra.mxu0 %v233
    %1441 = vmatprep.subr.mxu0 %v238
    %1442 = vmatpush1.msra.mxu0 %v237
    %1443 = vmatprep.subr.mxu0 %v242
    %1444 = vmatpush1.msra.mxu0 %v241
    %1445 = vmatprep.subr.mxu0 %v246
    %1446 = vmatpush1.msra.mxu0 %v245
    %1447 = vmatprep.subr.mxu0 %v250
    %1448 = vmatpush1.msra.mxu0 %v249
    %1449 = vmatprep.subr.mxu0 %v254
    %1450 = vmatpush1.msra.mxu0 %v253
    %1451 = vmatprep.subr.mxu0 %v258
    %1452 = vmatpush1.msra.mxu0 %v257
    %1453 = vmatprep.subr.mxu0 %v262
    %1454 = vmatpush1.msra.mxu0 %v261
    %1455 = vmatprep.subr.mxu0 %v266
    %1456 = vmatpush1.msra.mxu0 %v265
    %1457 = vmatprep.subr.mxu0 %v270
    %1458 = vmatpush1.msra.mxu0 %v269
    %1459 = vmatprep.mubr.f32.mxu0 %v1394
    %1460 = vmatmul.mubr.f32.gmra.mrb[0].mxu0 %v1393
    %v1461 = vpop.f32.mrb[0].mxu0
    %v1462 = vadd.f32 %v103, %v1461
    %v1463 = vpop.f32.mrb[0].mxu0
    %v1464 = vadd.f32 %v107, %v1463
    %1465 = vdwg.mxu0
    %1466 = vmatprep.subr.mxu0 %v148
    %1467 = vmatpush1.msra.mxu0 %v147
    %1468 = vmatprep.subr.mxu0 %v152
    %1469 = vmatpush1.msra.mxu0 %v151
    %1470 = vmatprep.subr.mxu0 %v156
    %1471 = vmatpush1.msra.mxu0 %v155
    %1472 = vmatprep.subr.mxu0 %v160
    %1473 = vmatpush1.msra.mxu0 %v159
    %1474 = vmatprep.subr.mxu0 %v164
    %1475 = vmatpush1.msra.mxu0 %v163
    %1476 = vmatprep.subr.mxu0 %v168
    %1477 = vmatpush1.msra.mxu0 %v167
    %1478 = vmatprep.subr.mxu0 %v172
    %1479 = vmatpush1.msra.mxu0 %v171
    %1480 = vmatprep.subr.mxu0 %v176
    %1481 = vmatpush1.msra.mxu0 %v175
    %1482 = vmatprep.subr.mxu0 %v180
    %1483 = vmatpush1.msra.mxu0 %v179
    %1484 = vmatprep.subr.mxu0 %v184
    %1485 = vmatpush1.msra.mxu0 %v183
    %1486 = vmatprep.subr.mxu0 %v188
    %1487 = vmatpush1.msra.mxu0 %v187
    %1488 = vmatprep.subr.mxu0 %v192
    %1489 = vmatpush1.msra.mxu0 %v191
    %1490 = vmatprep.subr.mxu0 %v196
    %1491 = vmatpush1.msra.mxu0 %v195
    %1492 = vmatprep.subr.mxu0 %v200
    %1493 = vmatpush1.msra.mxu0 %v199
    %1494 = vmatprep.subr.mxu0 %v204
    %1495 = vmatpush1.msra.mxu0 %v203
    %1496 = vmatprep.subr.mxu0 %v208
    %1497 = vmatpush1.msra.mxu0 %v207
    %1498 = vmatprep.subr.mxu0 %v212
    %1499 = vmatpush1.msra.mxu0 %v211
    %1500 = vmatprep.subr.mxu0 %v216
    %1501 = vmatpush1.msra.mxu0 %v215
    %1502 = vmatprep.subr.mxu0 %v220
    %1503 = vmatpush1.msra.mxu0 %v219
    %1504 = vmatprep.subr.mxu0 %v224
    %1505 = vmatpush1.msra.mxu0 %v223
    %1506 = vmatprep.subr.mxu0 %v228
    %1507 = vmatpush1.msra.mxu0 %v227
    %1508 = vmatprep.subr.mxu0 %v232
    %1509 = vmatpush1.msra.mxu0 %v231
    %1510 = vmatprep.subr.mxu0 %v236
    %1511 = vmatpush1.msra.mxu0 %v235
    %1512 = vmatprep.subr.mxu0 %v240
    %1513 = vmatpush1.msra.mxu0 %v239
    %1514 = vmatprep.subr.mxu0 %v244
    %1515 = vmatpush1.msra.mxu0 %v243
    %1516 = vmatprep.subr.mxu0 %v248
    %1517 = vmatpush1.msra.mxu0 %v247
    %1518 = vmatprep.subr.mxu0 %v252
    %1519 = vmatpush1.msra.mxu0 %v251
    %1520 = vmatprep.subr.mxu0 %v256
    %1521 = vmatpush1.msra.mxu0 %v255
    %1522 = vmatprep.subr.mxu0 %v260
    %1523 = vmatpush1.msra.mxu0 %v259
    %1524 = vmatprep.subr.mxu0 %v264
    %1525 = vmatpush1.msra.mxu0 %v263
    %1526 = vmatprep.subr.mxu0 %v268
    %1527 = vmatpush1.msra.mxu0 %v267
    %1528 = vmatprep.subr.mxu0 %v272
    %1529 = vmatpush1.msra.mxu0 %v271
    %1530 = vmatprep.mubr.f32.mxu0 %v1394
    %1531 = vmatmul.mubr.f32.gmra.mrb[0].mxu0 %v1393
    %v1532 = vpop.f32.mrb[0].mxu0
    %v1533 = vadd.f32 %v111, %v1532
    %v1534 = vpop.f32.mrb[0].mxu0
    %v1535 = vadd.f32 %v115, %v1534
    %1536 = vdwg.mxu0
    %v1537 = vmul.f32 %v124, %v1392
    %v1538 = vadd.f32 %v1462, %v1537
    %v1539 = vmul.f32 %v129, %v1392
    %v1540 = vadd.f32 %v1464, %v1539
    %v1541 = vmul.f32 %v134, %v1392
    %v1542 = vadd.f32 %v1540, %v1541
    %v1543 = vmul.f32 %v139, %v1392
    %v1544 = vadd.f32 %v1535, %v1543
    %v1545 = vmul.f32 %v144, %v1391
    %v1546 = vadd.f32 %v1544, %v1545
    %v1547 = vmul.f32 %v1546, 0.5
    %v1548 = vtanh.pop %v1547
    %v1549 = vadd.f32 %v1548, 1.0
    %v1550 = vmul.f32 %v1549, 0.5
    %v1551 = vmul.f32 %v1550, %v1391
    %v1552 = vmul.f32 %v1540, 0.5
    %v1553 = vtanh.pop %v1552
    %v1554 = vadd.f32 %v1553, 1.0
    %v1555 = vmul.f32 %v1554, 0.5
    %v1556 = vmul.f32 %v1555, %v1392
    %v1557 = vadd.f32 %v1551, %v1556
    %v1558 = vmul.f32 %v1538, 0.5
    %v1559 = vtanh.pop %v1558
    %v1560 = vadd.f32 %v1559, 1.0
    %v1561 = vmul.f32 %v1560, 0.5
    %v1562 = vtanh.pop %v1533
    %v1563 = vmul.f32 %v1561, %v1562
    %v1564 = vadd.f32 %v1557, %v1563
    %v1565 = vmul.f32 %v1542, 0.5
    %v1566 = vtanh.pop %v1565
    %v1567 = vadd.f32 %v1566, 1.0
    %v1568 = vmul.f32 %v1567, 0.5
    %v1569 = vtanh.pop %v1564
    %v1570 = vmul.f32 %v1568, %v1569
    %1571 = vst [vmem:[#allocation3] sm:$0xff] %v1564
    %1572 = vst [vmem:[#allocation2 + $0x8] sm:$0xff] %v1570
    %1573 = vst [vmem:[#allocation13 + $0x30] sm:$0xff] %v1570
    %1574 = vst [vmem:[#allocation14 + $0x30] sm:$0xff] %v1564
    %v1575 = vld [vmem:[#allocation4 + $0x38] sm:$0xff]
    %1576 = vst [vmem:[#allocation2] sm:$0xff] %v1575
    %v1577 = vld [vmem:[#allocation7 + $0x38] sm:$0xff]
    %v1578 = vld [vmem:[#allocation3] sm:$0xff]
    %v1579 = vld [vmem:[#allocation2] sm:$0xff]
    %v1580 = vld [vmem:[#allocation2 + $0x8] sm:$0xff]
    %1581 = vmatprep.subr.mxu0 %v146
    %1582 = vmatpush1.msra.mxu0 %v145
    %1583 = vmatprep.subr.mxu0 %v150
    %1584 = vmatpush1.msra.mxu0 %v149
    %1585 = vmatprep.subr.mxu0 %v154
    %1586 = vmatpush1.msra.mxu0 %v153
    %1587 = vmatprep.subr.mxu0 %v158
    %1588 = vmatpush1.msra.mxu0 %v157
    %1589 = vmatprep.subr.mxu0 %v162
    %1590 = vmatpush1.msra.mxu0 %v161
    %1591 = vmatprep.subr.mxu0 %v166
    %1592 = vmatpush1.msra.mxu0 %v165
    %1593 = vmatprep.subr.mxu0 %v170
    %1594 = vmatpush1.msra.mxu0 %v169
    %1595 = vmatprep.subr.mxu0 %v174
    %1596 = vmatpush1.msra.mxu0 %v173
    %1597 = vmatprep.subr.mxu0 %v178
    %1598 = vmatpush1.msra.mxu0 %v177
    %1599 = vmatprep.subr.mxu0 %v182
    %1600 = vmatpush1.msra.mxu0 %v181
    %1601 = vmatprep.subr.mxu0 %v186
    %1602 = vmatpush1.msra.mxu0 %v185
    %1603 = vmatprep.subr.mxu0 %v190
    %1604 = vmatpush1.msra.mxu0 %v189
    %1605 = vmatprep.subr.mxu0 %v194
    %1606 = vmatpush1.msra.mxu0 %v193
    %1607 = vmatprep.subr.mxu0 %v198
    %1608 = vmatpush1.msra.mxu0 %v197
    %1609 = vmatprep.subr.mxu0 %v202
    %1610 = vmatpush1.msra.mxu0 %v201
    %1611 = vmatprep.subr.mxu0 %v206
    %1612 = vmatpush1.msra.mxu0 %v205
    %1613 = vmatprep.subr.mxu0 %v210
    %1614 = vmatpush1.msra.mxu0 %v209
    %1615 = vmatprep.subr.mxu0 %v214
    %1616 = vmatpush1.msra.mxu0 %v213
    %1617 = vmatprep.subr.mxu0 %v218
    %1618 = vmatpush1.msra.mxu0 %v217
    %1619 = vmatprep.subr.mxu0 %v222
    %1620 = vmatpush1.msra.mxu0 %v221
    %1621 = vmatprep.subr.mxu0 %v226
    %1622 = vmatpush1.msra.mxu0 %v225
    %1623 = vmatprep.subr.mxu0 %v230
    %1624 = vmatpush1.msra.mxu0 %v229
    %1625 = vmatprep.subr.mxu0 %v234
    %1626 = vmatpush1.msra.mxu0 %v233
    %1627 = vmatprep.subr.mxu0 %v238
    %1628 = vmatpush1.msra.mxu0 %v237
    %1629 = vmatprep.subr.mxu0 %v242
    %1630 = vmatpush1.msra.mxu0 %v241
    %1631 = vmatprep.subr.mxu0 %v246
    %1632 = vmatpush1.msra.mxu0 %v245
    %1633 = vmatprep.subr.mxu0 %v250
    %1634 = vmatpush1.msra.mxu0 %v249
    %1635 = vmatprep.subr.mxu0 %v254
    %1636 = vmatpush1.msra.mxu0 %v253
    %1637 = vmatprep.subr.mxu0 %v258
    %1638 = vmatpush1.msra.mxu0 %v257
    %1639 = vmatprep.subr.mxu0 %v262
    %1640 = vmatpush1.msra.mxu0 %v261
    %1641 = vmatprep.subr.mxu0 %v266
    %1642 = vmatpush1.msra.mxu0 %v265
    %1643 = vmatprep.subr.mxu0 %v270
    %1644 = vmatpush1.msra.mxu0 %v269
    %1645 = vmatprep.mubr.f32.mxu0 %v1580
    %1646 = vmatmul.mubr.f32.gmra.mrb[0].mxu0 %v1579
    %v1647 = vpop.f32.mrb[0].mxu0
    %v1648 = vadd.f32 %v103, %v1647
    %v1649 = vpop.f32.mrb[0].mxu0
    %v1650 = vadd.f32 %v107, %v1649
    %1651 = vdwg.mxu0
    %1652 = vmatprep.subr.mxu0 %v148
    %1653 = vmatpush1.msra.mxu0 %v147
    %1654 = vmatprep.subr.mxu0 %v152
    %1655 = vmatpush1.msra.mxu0 %v151
    %1656 = vmatprep.subr.mxu0 %v156
    %1657 = vmatpush1.msra.mxu0 %v155
    %1658 = vmatprep.subr.mxu0 %v160
    %1659 = vmatpush1.msra.mxu0 %v159
    %1660 = vmatprep.subr.mxu0 %v164
    %1661 = vmatpush1.msra.mxu0 %v163
    %1662 = vmatprep.subr.mxu0 %v168
    %1663 = vmatpush1.msra.mxu0 %v167
    %1664 = vmatprep.subr.mxu0 %v172
    %1665 = vmatpush1.msra.mxu0 %v171
    %1666 = vmatprep.subr.mxu0 %v176
    %1667 = vmatpush1.msra.mxu0 %v175
    %1668 = vmatprep.subr.mxu0 %v180
    %1669 = vmatpush1.msra.mxu0 %v179
    %1670 = vmatprep.subr.mxu0 %v184
    %1671 = vmatpush1.msra.mxu0 %v183
    %1672 = vmatprep.subr.mxu0 %v188
    %1673 = vmatpush1.msra.mxu0 %v187
    %1674 = vmatprep.subr.mxu0 %v192
    %1675 = vmatpush1.msra.mxu0 %v191
    %1676 = vmatprep.subr.mxu0 %v196
    %1677 = vmatpush1.msra.mxu0 %v195
    %1678 = vmatprep.subr.mxu0 %v200
    %1679 = vmatpush1.msra.mxu0 %v199
    %1680 = vmatprep.subr.mxu0 %v204
    %1681 = vmatpush1.msra.mxu0 %v203
    %1682 = vmatprep.subr.mxu0 %v208
    %1683 = vmatpush1.msra.mxu0 %v207
    %1684 = vmatprep.subr.mxu0 %v212
    %1685 = vmatpush1.msra.mxu0 %v211
    %1686 = vmatprep.subr.mxu0 %v216
    %1687 = vmatpush1.msra.mxu0 %v215
    %1688 = vmatprep.subr.mxu0 %v220
    %1689 = vmatpush1.msra.mxu0 %v219
    %1690 = vmatprep.subr.mxu0 %v224
    %1691 = vmatpush1.msra.mxu0 %v223
    %1692 = vmatprep.subr.mxu0 %v228
    %1693 = vmatpush1.msra.mxu0 %v227
    %1694 = vmatprep.subr.mxu0 %v232
    %1695 = vmatpush1.msra.mxu0 %v231
    %1696 = vmatprep.subr.mxu0 %v236
    %1697 = vmatpush1.msra.mxu0 %v235
    %1698 = vmatprep.subr.mxu0 %v240
    %1699 = vmatpush1.msra.mxu0 %v239
    %1700 = vmatprep.subr.mxu0 %v244
    %1701 = vmatpush1.msra.mxu0 %v243
    %1702 = vmatprep.subr.mxu0 %v248
    %1703 = vmatpush1.msra.mxu0 %v247
    %1704 = vmatprep.subr.mxu0 %v252
    %1705 = vmatpush1.msra.mxu0 %v251
    %1706 = vmatprep.subr.mxu0 %v256
    %1707 = vmatpush1.msra.mxu0 %v255
    %1708 = vmatprep.subr.mxu0 %v260
    %1709 = vmatpush1.msra.mxu0 %v259
    %1710 = vmatprep.subr.mxu0 %v264
    %1711 = vmatpush1.msra.mxu0 %v263
    %1712 = vmatprep.subr.mxu0 %v268
    %1713 = vmatpush1.msra.mxu0 %v267
    %1714 = vmatprep.subr.mxu0 %v272
    %1715 = vmatpush1.msra.mxu0 %v271
    %1716 = vmatprep.mubr.f32.mxu0 %v1580
    %1717 = vmatmul.mubr.f32.gmra.mrb[0].mxu0 %v1579
    %v1718 = vpop.f32.mrb[0].mxu0
    %v1719 = vadd.f32 %v111, %v1718
    %v1720 = vpop.f32.mrb[0].mxu0
    %v1721 = vadd.f32 %v115, %v1720
    %1722 = vdwg.mxu0
    %v1723 = vmul.f32 %v124, %v1578
    %v1724 = vadd.f32 %v1648, %v1723
    %v1725 = vmul.f32 %v129, %v1578
    %v1726 = vadd.f32 %v1650, %v1725
    %v1727 = vmul.f32 %v134, %v1578
    %v1728 = vadd.f32 %v1726, %v1727
    %v1729 = vmul.f32 %v139, %v1578
    %v1730 = vadd.f32 %v1721, %v1729
    %v1731 = vmul.f32 %v144, %v1577
    %v1732 = vadd.f32 %v1730, %v1731
    %v1733 = vmul.f32 %v1732, 0.5
    %v1734 = vtanh.pop %v1733
    %v1735 = vadd.f32 %v1734, 1.0
    %v1736 = vmul.f32 %v1735, 0.5
    %v1737 = vmul.f32 %v1736, %v1577
    %v1738 = vmul.f32 %v1726, 0.5
    %v1739 = vtanh.pop %v1738
    %v1740 = vadd.f32 %v1739, 1.0
    %v1741 = vmul.f32 %v1740, 0.5
    %v1742 = vmul.f32 %v1741, %v1578
    %v1743 = vadd.f32 %v1737, %v1742
    %v1744 = vmul.f32 %v1724, 0.5
    %v1745 = vtanh.pop %v1744
    %v1746 = vadd.f32 %v1745, 1.0
    %v1747 = vmul.f32 %v1746, 0.5
    %v1748 = vtanh.pop %v1719
    %v1749 = vmul.f32 %v1747, %v1748
    %v1750 = vadd.f32 %v1743, %v1749
    %v1751 = vmul.f32 %v1728, 0.5
    %v1752 = vtanh.pop %v1751
    %v1753 = vadd.f32 %v1752, 1.0
    %v1754 = vmul.f32 %v1753, 0.5
    %v1755 = vtanh.pop %v1750
    %v1756 = vmul.f32 %v1754, %v1755
    %1757 = vst [vmem:[#allocation3] sm:$0xff] %v1750
    %1758 = vst [vmem:[#allocation2 + $0x8] sm:$0xff] %v1756
    %1759 = vst [vmem:[#allocation13 + $0x38] sm:$0xff] %v1756
    %1760 = vst [vmem:[#allocation14 + $0x38] sm:$0xff] %v1750
    // Predicated region
    $region54: #{tpu_custom_call.1} parent=1 // pred_check
      _
    $region55: #{tpu_custom_call.1} parent=1 // pred_check_branch
      %1762 = sbr.rel (0) target = $region57
    $region56: #{tpu_custom_call.1} parent=1 // pred_region
      %s1764 = ssub.s32 1024, 1024
      %1765 = vsyncadd [#allocation6], %s1764
      %s1767 = sshll.u32 [#allocation13], 4
      %s1768 = int_to_ptr.vmem [resolvable:$true] %s1767
      %1770 = dma.vmem_to_hbm [thread:$0]  %s1768, 1024, %s7, [#allocation6]
    $region57: #{tpu_custom_call.1} parent=1 // pred_fallthru
      _
    // Predicated region
    $region58: #{tpu_custom_call.1} parent=1 // pred_check
      _
    $region59: #{tpu_custom_call.1} parent=1 // pred_check_branch
      %1772 = sbr.rel (0) target = $region61
    $region60: #{tpu_custom_call.1} parent=1 // pred_region
      %s1774 = ssub.s32 1024, 1024
      %1775 = vsyncadd [#allocation15], %s1774
      %s1777 = sshll.u32 [#allocation14], 4
      %s1778 = int_to_ptr.vmem [resolvable:$true] %s1777
      %1780 = dma.vmem_to_hbm [thread:$0]  %s1778, 1024, %s8, [#allocation15]
    $region61: #{tpu_custom_call.1} parent=1 // pred_fallthru
      _
    // Predicated region
    $region62: #{tpu_custom_call.1} parent=1 // pred_check
      _
    $region63: #{tpu_custom_call.1} parent=1 // pred_check_branch
      %1782 = sbr.rel (0) target = $region65
    $region64: #{tpu_custom_call.1} parent=1 // pred_region
      %1783 = dma.done [#allocation6], 1024
    $region65: #{tpu_custom_call.1} parent=1 // pred_fallthru
      _
    // Predicated region
    $region66: #{tpu_custom_call.1} parent=1 // pred_check
      _
    $region67: #{tpu_custom_call.1} parent=1 // pred_check_branch
      %1785 = sbr.rel (0) target = $region69
    $region68: #{tpu_custom_call.1} parent=1 // pred_region
      %1786 = dma.done [#allocation15], 1024
    $region69: #{tpu_custom_call.1} parent=1 // pred_fallthru
      _
    %1787 = vsyncpa [#allocation5], 1
    %1788 = vsyncpa [#allocation8], 1
    %1789 = vsyncpa [#allocation11], 1
    %1790 = vsyncpa [#allocation6], 1
    %1791 = vsyncpa [#allocation15], 1

</llo_original>
